<compile_context>
chip_gen: v7x
topology: tpu7x:2x2x1
jax: 0.10.0
libtpu: 0.0.40
codegen_flags: <defaults>
</compile_context>

<pallas_src>
import functools

import jax
import jax.numpy as jnp
from jax import lax
from jax.experimental import pallas as pl
from jax.experimental.pallas import tpu as pltpu


def _dilated_bottleneck_kernel(
    x_ref, w1_ref, s1_ref, b1_ref,
    w2_ref, s2_ref, b2_ref,
    w3_ref, s3_ref, b3_ref,
    o_ref, pad_ref, *, dilated, compute_dtype):
  """One block of NB images per grid step; whole-plane matmuls."""
  dh, dw = dilated
  NB, H, W, Cin = x_ref.shape
  P = w1_ref.shape[1]
  Cout = w3_ref.shape[1]
  M = NB * H * W

  # Weights hoisted once per grid step; cast to the MXU compute dtype.
  w1 = w1_ref[...].astype(compute_dtype)                     # (Cin, P)
  w3 = w3_ref[...].astype(compute_dtype)                     # (P, Cout)
  w2k = [[w2_ref[kh, kw].astype(compute_dtype)               # 9 x (P, P)
          for kw in range(3)] for kh in range(3)]
  s1, b1 = s1_ref[...], b1_ref[...]                          # f32 (1, P)
  s2, b2 = s2_ref[...], b2_ref[...]
  s3, b3 = s3_ref[...], b3_ref[...]

  # Zero only the halo of the padded scratch; conv1 overwrites the interior
  # every grid step.
  zero_rows = jnp.zeros((NB, dh, W + 2 * dw, P), jnp.float32)
  zero_cols = jnp.zeros((NB, H + 2 * dh, dw, P), jnp.float32)
  pad_ref[:, 0:dh, :, :] = zero_rows
  pad_ref[:, dh + H:2 * dh + H, :, :] = zero_rows
  pad_ref[:, :, 0:dw, :] = zero_cols
  pad_ref[:, :, dw + W:2 * dw + W, :] = zero_cols

  # ---- conv1 (1x1) + bn1 + relu : one (M, Cin) x (Cin, P) matmul ----
  x2 = x_ref[...].astype(jnp.float32).reshape(M, Cin)        # also the residual
  t1 = jnp.dot(x2.astype(compute_dtype), w1,
               preferred_element_type=jnp.float32)           # (M, P)
  t1 = jnp.maximum(t1 * s1 + b1, 0.0)
  pad_ref[:, dh:dh + H, dw:dw + W, :] = t1.reshape(NB, H, W, P)

  # ---- conv2 (3x3, dilation=(dh,dw), padding=(dh,dw), stride=1) + bn2 + relu:
  #      9 plane-level matmuls over shifted static slices of the padded scratch.
  acc = jnp.zeros((M, P), jnp.float32)
  for kh in range(3):
    for kw in range(3):
      patch = pad_ref[:, kh * dh:kh * dh + H, kw * dw:kw * dw + W, :]
      patch = patch.reshape(M, P).astype(compute_dtype)
      acc = acc + jnp.dot(patch, w2k[kh][kw],
                          preferred_element_type=jnp.float32)
  t2 = jnp.maximum(acc * s2 + b2, 0.0)                       # (M, P) f32

  # ---- conv3 (1x1) + bn3 + residual add + relu : one (M, P) x (P, Cout) matmul
  t3 = jnp.dot(t2.astype(compute_dtype), w3,
               preferred_element_type=jnp.float32)           # (M, Cout)
  t3 = t3 * s3 + b3
  out = jnp.maximum(t3 + x2, 0.0)                            # Cin == Cout
  o_ref[...] = out.reshape(NB, H, W, Cout).astype(o_ref.dtype)


def dilated_bottleneck(x, params, *, dilated=(1, 1), images_per_step=1,
                       compute_dtype=jnp.float32):
  """x: (N, H, W, Cin) NHWC. params: folded-BN bottleneck parameters."""
  w1, s1, b1, w2, s2, b2, w3, s3, b3 = params
  N, H, W, Cin = x.shape
  P = w1.shape[1]
  Cout = w3.shape[1]
  dh, dw = dilated
  assert Cin == Cout, "residual add requires inplanes == planes * expansion"
  NB = images_per_step
  assert N % NB == 0

  def full_spec(a):
    nd = a.ndim
    return pl.BlockSpec(a.shape, lambda n, _nd=nd: (0,) * _nd)

  kernel = functools.partial(_dilated_bottleneck_kernel,
                             dilated=dilated, compute_dtype=compute_dtype)
  return pl.pallas_call(
      kernel,
      out_shape=jax.ShapeDtypeStruct((N, H, W, Cout), x.dtype),
      grid_spec=pltpu.PrefetchScalarGridSpec(
          num_scalar_prefetch=0,
          grid=(N // NB,),
          in_specs=[pl.BlockSpec((NB, H, W, Cin), lambda n: (n, 0, 0, 0))]
                  + [full_spec(a) for a in params],
          out_specs=pl.BlockSpec((NB, H, W, Cout), lambda n: (n, 0, 0, 0)),
          scratch_shapes=[pltpu.VMEM((NB, H + 2 * dh, W + 2 * dw, P),
                                     jnp.float32)],
      ),
      compiler_params=pltpu.CompilerParams(
          dimension_semantics=("parallel",)),
  )(x, *params)


# ----------------------------- glue / setup -----------------------------

def fold_bn(gamma, beta, mean, var, eps=1e-5):
  scale = gamma * lax.rsqrt(var + eps)
  bias = beta - mean * scale
  return (scale.reshape(1, -1).astype(jnp.float32),
          bias.reshape(1, -1).astype(jnp.float32))


def make_params(key, inplanes, planes):
  expansion = 4
  outplanes = planes * expansion
  ks = jax.random.split(key, 15)

  w1 = 0.2 * jax.random.normal(ks[0], (inplanes, planes), jnp.float32)
  w2 = 0.2 * jax.random.normal(ks[1], (3, 3, planes, planes), jnp.float32)
  w3 = 0.2 * jax.random.normal(ks[2], (planes, outplanes), jnp.float32)

  def bn(k0, k1, k2, k3, c):
    gamma = 1.0 + 0.1 * jax.random.normal(k0, (c,), jnp.float32)
    beta = 0.1 * jax.random.normal(k1, (c,), jnp.float32)
    mean = 0.1 * jax.random.normal(k2, (c,), jnp.float32)
    var = jnp.abs(jax.random.normal(k3, (c,), jnp.float32)) + 0.5
    return fold_bn(gamma, beta, mean, var)

  s1, b1 = bn(ks[3], ks[4], ks[5], ks[6], planes)
  s2, b2 = bn(ks[7], ks[8], ks[9], ks[10], planes)
  s3, b3 = bn(ks[11], ks[12], ks[13], ks[14], outplanes)
  return (w1, s1, b1, w2, s2, b2, w3, s3, b3)


def reference_forward(x, params, *, dilated):
  """Pure-JAX reference (lax.conv_general_dilated) for validation."""
  w1, s1, b1, w2, s2, b2, w3, s3, b3 = params
  dh, dw = dilated
  dn = ('NHWC', 'HWIO', 'NHWC')

  def conv(inp, w, pad, dil):
    return lax.conv_general_dilated(
        inp, w, window_strides=(1, 1), padding=pad, rhs_dilation=dil,
        dimension_numbers=dn, precision=lax.Precision.HIGHEST,
        preferred_element_type=jnp.float32)

  t = conv(x, w1[None, None], [(0, 0), (0, 0)], (1, 1))
  t = jnp.maximum(t * s1 + b1, 0.0)
  t = conv(t, w2, [(dh, dh), (dw, dw)], (dh, dw))
  t = jnp.maximum(t * s2 + b2, 0.0)
  t = conv(t, w3[None, None], [(0, 0), (0, 0)], (1, 1))
  t = t * s3 + b3
  return jnp.maximum(t + x, 0.0)


if __name__ == "__main__":
  inplanes, planes = 16, 4          # expansion=4 -> outplanes = 16 = inplanes
  N, H, W = 2, 16, 16
  dilated = (2, 2)

  key = jax.random.PRNGKey(0)
  kx, kp = jax.random.split(key)
  x = jax.random.normal(kx, (N, H, W, inplanes), jnp.float32)   # NHWC
  params = make_params(kp, inplanes, planes)

  ref = reference_forward(x, params, dilated=dilated)

  # (1) f32 path, 1 image per grid step (batch axis stays "parallel" -> maps
  #     onto the two TensorCores on v7x).
  out = jax.block_until_ready(
      dilated_bottleneck(x, params, dilated=dilated, images_per_step=1))
  err = float(jnp.max(jnp.abs(out - ref)))
  if err > 5e-3:
    raise AssertionError(f"f32 kernel mismatch vs reference: max abs err = {err}")

  # (2) f32 path with the whole batch folded into one grid step / one matmul M
  #     dimension (amortizes per-step overhead on single-TC v5e / v6e).
  out_folded = jax.block_until_ready(
      dilated_bottleneck(x, params, dilated=dilated, images_per_step=N))
  err_folded = float(jnp.max(jnp.abs(out_folded - ref)))
  if err_folded > 5e-3:
    raise AssertionError(
        f"batch-folded kernel mismatch vs reference: max abs err = {err_folded}")

  # (3) bf16 MXU compute path (native MXU input dtype on v5e/v6e/v7x); BN, relu
  #     and the residual stay in f32.  Sanity tolerance vs the f32 HIGHEST ref.
  out_bf16 = jax.block_until_ready(
      dilated_bottleneck(x, params, dilated=dilated, images_per_step=N,
                         compute_dtype=jnp.bfloat16))
  err_bf16 = float(jnp.max(jnp.abs(out_bf16 - ref)))
  if not (err_bf16 < 5e-1):
    raise AssertionError(
        f"bf16 kernel sanity check failed: max abs err = {err_bf16}")

  print("KERNEL_OK")
</pallas_src>

<mosaic_0001>
module attributes {stable_mosaic.version = 11 : i64} {
  func.func @_dilated_bottleneck_kernel(%arg0: i32, %arg1: memref<1x16x16x16xf32, #tpu.memory_space<vmem>>, %arg2: memref<16x4xf32, #tpu.memory_space<vmem>>, %arg3: memref<1x4xf32, #tpu.memory_space<vmem>>, %arg4: memref<1x4xf32, #tpu.memory_space<vmem>>, %arg5: memref<3x3x4x4xf32, #tpu.memory_space<vmem>>, %arg6: memref<1x4xf32, #tpu.memory_space<vmem>>, %arg7: memref<1x4xf32, #tpu.memory_space<vmem>>, %arg8: memref<4x16xf32, #tpu.memory_space<vmem>>, %arg9: memref<1x16xf32, #tpu.memory_space<vmem>>, %arg10: memref<1x16xf32, #tpu.memory_space<vmem>>, %arg11: memref<1x16x16x16xf32, #tpu.memory_space<vmem>>, %arg12: memref<1x20x20x4xf32, #tpu.memory_space<vmem>>) attributes {dimension_semantics = [#tpu.dimension_semantics<parallel>], iteration_bounds = array<i64: 2>, scalar_prefetch = 0 : i64, scratch_operands = 1 : i64, tpu.core_type = #tpu.core_type<tc>, window_params = [{transform_indices = @transform_0, window_bounds = array<i64: 1, 16, 16, 16>}, {pipeline_mode = #tpu.pipeline_mode<synchronous>, transform_indices = @transform_1, window_bounds = array<i64: 16, 4>}, {pipeline_mode = #tpu.pipeline_mode<synchronous>, transform_indices = @transform_2, window_bounds = array<i64: 1, 4>}, {pipeline_mode = #tpu.pipeline_mode<synchronous>, transform_indices = @transform_3, window_bounds = array<i64: 1, 4>}, {pipeline_mode = #tpu.pipeline_mode<synchronous>, transform_indices = @transform_4, window_bounds = array<i64: 3, 3, 4, 4>}, {pipeline_mode = #tpu.pipeline_mode<synchronous>, transform_indices = @transform_5, window_bounds = array<i64: 1, 4>}, {pipeline_mode = #tpu.pipeline_mode<synchronous>, transform_indices = @transform_6, window_bounds = array<i64: 1, 4>}, {pipeline_mode = #tpu.pipeline_mode<synchronous>, transform_indices = @transform_7, window_bounds = array<i64: 4, 16>}, {pipeline_mode = #tpu.pipeline_mode<synchronous>, transform_indices = @transform_8, window_bounds = array<i64: 1, 16>}, {pipeline_mode = #tpu.pipeline_mode<synchronous>, transform_indices = @transform_9, window_bounds = array<i64: 1, 16>}, {transform_indices = @transform_10, window_bounds = array<i64: 1, 16, 16, 16>}]} {
    %c0 = arith.constant 0 : index
    %c0_0 = arith.constant 0 : index
    %0 = vector.load %arg2[%c0, %c0_0] : memref<16x4xf32, #tpu.memory_space<vmem>>, vector<16x4xf32>
    %c0_1 = arith.constant 0 : index
    %c0_2 = arith.constant 0 : index
    %1 = vector.load %arg8[%c0_1, %c0_2] : memref<4x16xf32, #tpu.memory_space<vmem>>, vector<4x16xf32>
    %c0_3 = arith.constant 0 : index
    %c0_4 = arith.constant 0 : index
    %c0_5 = arith.constant 0 : index
    %c0_6 = arith.constant 0 : index
    %2 = vector.load %arg5[%c0_3, %c0_4, %c0_5, %c0_6] : memref<3x3x4x4xf32, #tpu.memory_space<vmem>>, vector<1x1x4x4xf32>
    %3 = vector.shape_cast %2 : vector<1x1x4x4xf32> to vector<4x4xf32>
    %c0_7 = arith.constant 0 : index
    %c1 = arith.constant 1 : index
    %c0_8 = arith.constant 0 : index
    %c0_9 = arith.constant 0 : index
    %4 = vector.load %arg5[%c0_7, %c1, %c0_8, %c0_9] : memref<3x3x4x4xf32, #tpu.memory_space<vmem>>, vector<1x1x4x4xf32>
    %5 = vector.shape_cast %4 : vector<1x1x4x4xf32> to vector<4x4xf32>
    %c0_10 = arith.constant 0 : index
    %c2 = arith.constant 2 : index
    %c0_11 = arith.constant 0 : index
    %c0_12 = arith.constant 0 : index
    %6 = vector.load %arg5[%c0_10, %c2, %c0_11, %c0_12] : memref<3x3x4x4xf32, #tpu.memory_space<vmem>>, vector<1x1x4x4xf32>
    %7 = vector.shape_cast %6 : vector<1x1x4x4xf32> to vector<4x4xf32>
    %c1_13 = arith.constant 1 : index
    %c0_14 = arith.constant 0 : index
    %c0_15 = arith.constant 0 : index
    %c0_16 = arith.constant 0 : index
    %8 = vector.load %arg5[%c1_13, %c0_14, %c0_15, %c0_16] : memref<3x3x4x4xf32, #tpu.memory_space<vmem>>, vector<1x1x4x4xf32>
    %9 = vector.shape_cast %8 : vector<1x1x4x4xf32> to vector<4x4xf32>
    %c1_17 = arith.constant 1 : index
    %c1_18 = arith.constant 1 : index
    %c0_19 = arith.constant 0 : index
    %c0_20 = arith.constant 0 : index
    %10 = vector.load %arg5[%c1_17, %c1_18, %c0_19, %c0_20] : memref<3x3x4x4xf32, #tpu.memory_space<vmem>>, vector<1x1x4x4xf32>
    %11 = vector.shape_cast %10 : vector<1x1x4x4xf32> to vector<4x4xf32>
    %c1_21 = arith.constant 1 : index
    %c2_22 = arith.constant 2 : index
    %c0_23 = arith.constant 0 : index
    %c0_24 = arith.constant 0 : index
    %12 = vector.load %arg5[%c1_21, %c2_22, %c0_23, %c0_24] : memref<3x3x4x4xf32, #tpu.memory_space<vmem>>, vector<1x1x4x4xf32>
    %13 = vector.shape_cast %12 : vector<1x1x4x4xf32> to vector<4x4xf32>
    %c2_25 = arith.constant 2 : index
    %c0_26 = arith.constant 0 : index
    %c0_27 = arith.constant 0 : index
    %c0_28 = arith.constant 0 : index
    %14 = vector.load %arg5[%c2_25, %c0_26, %c0_27, %c0_28] : memref<3x3x4x4xf32, #tpu.memory_space<vmem>>, vector<1x1x4x4xf32>
    %15 = vector.shape_cast %14 : vector<1x1x4x4xf32> to vector<4x4xf32>
    %c2_29 = arith.constant 2 : index
    %c1_30 = arith.constant 1 : index
    %c0_31 = arith.constant 0 : index
    %c0_32 = arith.constant 0 : index
    %16 = vector.load %arg5[%c2_29, %c1_30, %c0_31, %c0_32] : memref<3x3x4x4xf32, #tpu.memory_space<vmem>>, vector<1x1x4x4xf32>
    %17 = vector.shape_cast %16 : vector<1x1x4x4xf32> to vector<4x4xf32>
    %c2_33 = arith.constant 2 : index
    %c2_34 = arith.constant 2 : index
    %c0_35 = arith.constant 0 : index
    %c0_36 = arith.constant 0 : index
    %18 = vector.load %arg5[%c2_33, %c2_34, %c0_35, %c0_36] : memref<3x3x4x4xf32, #tpu.memory_space<vmem>>, vector<1x1x4x4xf32>
    %19 = vector.shape_cast %18 : vector<1x1x4x4xf32> to vector<4x4xf32>
    %c0_37 = arith.constant 0 : index
    %c0_38 = arith.constant 0 : index
    %20 = vector.load %arg3[%c0_37, %c0_38] : memref<1x4xf32, #tpu.memory_space<vmem>>, vector<1x4xf32>
    %c0_39 = arith.constant 0 : index
    %c0_40 = arith.constant 0 : index
    %21 = vector.load %arg4[%c0_39, %c0_40] : memref<1x4xf32, #tpu.memory_space<vmem>>, vector<1x4xf32>
    %c0_41 = arith.constant 0 : index
    %c0_42 = arith.constant 0 : index
    %22 = vector.load %arg6[%c0_41, %c0_42] : memref<1x4xf32, #tpu.memory_space<vmem>>, vector<1x4xf32>
    %c0_43 = arith.constant 0 : index
    %c0_44 = arith.constant 0 : index
    %23 = vector.load %arg7[%c0_43, %c0_44] : memref<1x4xf32, #tpu.memory_space<vmem>>, vector<1x4xf32>
    %c0_45 = arith.constant 0 : index
    %c0_46 = arith.constant 0 : index
    %24 = vector.load %arg9[%c0_45, %c0_46] : memref<1x16xf32, #tpu.memory_space<vmem>>, vector<1x16xf32>
    %c0_47 = arith.constant 0 : index
    %c0_48 = arith.constant 0 : index
    %25 = vector.load %arg10[%c0_47, %c0_48] : memref<1x16xf32, #tpu.memory_space<vmem>>, vector<1x16xf32>
    %cst = arith.constant 0.000000e+00 : f32
    %26 = vector.broadcast %cst : f32 to vector<1x2x20x4xf32>
    %cst_49 = arith.constant 0.000000e+00 : f32
    %27 = vector.broadcast %cst_49 : f32 to vector<1x20x2x4xf32>
    %c0_50 = arith.constant 0 : index
    %c0_51 = arith.constant 0 : index
    %c0_52 = arith.constant 0 : index
    %c0_53 = arith.constant 0 : index
    %28 = vector.load %arg12[%c0_50, %c0_51, %c0_52, %c0_53] : memref<1x20x20x4xf32, #tpu.memory_space<vmem>>, vector<1x2x20x4xf32>
    tpu.vector_store %arg12[%c0_50, %c0_51, %c0_52, %c0_53], %26 {strides = array<i32>} : memref<1x20x20x4xf32, #tpu.memory_space<vmem>>, vector<1x2x20x4xf32>,
    %c0_54 = arith.constant 0 : index
    %c18 = arith.constant 18 : index
    %c0_55 = arith.constant 0 : index
    %c0_56 = arith.constant 0 : index
    %29 = vector.load %arg12[%c0_54, %c18, %c0_55, %c0_56] : memref<1x20x20x4xf32, #tpu.memory_space<vmem>>, vector<1x2x20x4xf32>
    tpu.vector_store %arg12[%c0_54, %c18, %c0_55, %c0_56], %26 {strides = array<i32>} : memref<1x20x20x4xf32, #tpu.memory_space<vmem>>, vector<1x2x20x4xf32>,
    %c0_57 = arith.constant 0 : index
    %c0_58 = arith.constant 0 : index
    %c0_59 = arith.constant 0 : index
    %c0_60 = arith.constant 0 : index
    %30 = vector.load %arg12[%c0_57, %c0_58, %c0_59, %c0_60] : memref<1x20x20x4xf32, #tpu.memory_space<vmem>>, vector<1x20x2x4xf32>
    tpu.vector_store %arg12[%c0_57, %c0_58, %c0_59, %c0_60], %27 {strides = array<i32>} : memref<1x20x20x4xf32, #tpu.memory_space<vmem>>, vector<1x20x2x4xf32>,
    %c0_61 = arith.constant 0 : index
    %c0_62 = arith.constant 0 : index
    %c18_63 = arith.constant 18 : index
    %c0_64 = arith.constant 0 : index
    %31 = vector.load %arg12[%c0_61, %c0_62, %c18_63, %c0_64] : memref<1x20x20x4xf32, #tpu.memory_space<vmem>>, vector<1x20x2x4xf32>
    tpu.vector_store %arg12[%c0_61, %c0_62, %c18_63, %c0_64], %27 {strides = array<i32>} : memref<1x20x20x4xf32, #tpu.memory_space<vmem>>, vector<1x20x2x4xf32>,
    %c0_65 = arith.constant 0 : index
    %c0_66 = arith.constant 0 : index
    %c0_67 = arith.constant 0 : index
    %c0_68 = arith.constant 0 : index
    %32 = vector.load %arg1[%c0_65, %c0_66, %c0_67, %c0_68] : memref<1x16x16x16xf32, #tpu.memory_space<vmem>>, vector<1x16x16x16xf32>
    %33 = vector.shape_cast %32 : vector<1x16x16x16xf32> to vector<256x16xf32>
    %cst_69 = arith.constant dense<0.000000e+00> : vector<256x4xf32>
    %34 = tpu.matmul %33, %0, %cst_69 {dimension_numbers = #tpu.dot_dimension_numbers<[1], [0], [0], [1], [0, 0, 1, 1], [], []>} : vector<256x16xf32>, vector<16x4xf32>, vector<256x4xf32> -> vector<256x4xf32>
    %35 = vector.broadcast %20 : vector<1x4xf32> to vector<256x4xf32>
    %36 = arith.mulf %34, %35 : vector<256x4xf32>
    %37 = vector.broadcast %21 : vector<1x4xf32> to vector<256x4xf32>
    %38 = arith.addf %36, %37 : vector<256x4xf32>
    %cst_70 = arith.constant 0.000000e+00 : f32
    %39 = vector.broadcast %cst_70 : f32 to vector<256x4xf32>
    %40 = arith.maximumf %38, %39 : vector<256x4xf32>
    %41 = vector.shape_cast %40 : vector<256x4xf32> to vector<1x16x16x4xf32>
    %c0_71 = arith.constant 0 : index
    %c2_72 = arith.constant 2 : index
    %c2_73 = arith.constant 2 : index
    %c0_74 = arith.constant 0 : index
    %42 = vector.load %arg12[%c0_71, %c2_72, %c2_73, %c0_74] : memref<1x20x20x4xf32, #tpu.memory_space<vmem>>, vector<1x16x16x4xf32>
    tpu.vector_store %arg12[%c0_71, %c2_72, %c2_73, %c0_74], %41 {strides = array<i32>} : memref<1x20x20x4xf32, #tpu.memory_space<vmem>>, vector<1x16x16x4xf32>,
    %cst_75 = arith.constant 0.000000e+00 : f32
    %43 = vector.broadcast %cst_75 : f32 to vector<256x4xf32>
    %c0_76 = arith.constant 0 : index
    %c0_77 = arith.constant 0 : index
    %c0_78 = arith.constant 0 : index
    %c0_79 = arith.constant 0 : index
    %44 = vector.load %arg12[%c0_76, %c0_77, %c0_78, %c0_79] : memref<1x20x20x4xf32, #tpu.memory_space<vmem>>, vector<1x16x16x4xf32>
    %45 = vector.shape_cast %44 : vector<1x16x16x4xf32> to vector<256x4xf32>
    %cst_80 = arith.constant dense<0.000000e+00> : vector<256x4xf32>
    %46 = tpu.matmul %45, %3, %cst_80 {dimension_numbers = #tpu.dot_dimension_numbers<[1], [0], [0], [1], [0, 0, 1, 1], [], []>} : vector<256x4xf32>, vector<4x4xf32>, vector<256x4xf32> -> vector<256x4xf32>
    %47 = arith.addf %43, %46 : vector<256x4xf32>
    %c0_81 = arith.constant 0 : index
    %c0_82 = arith.constant 0 : index
    %c2_83 = arith.constant 2 : index
    %c0_84 = arith.constant 0 : index
    %48 = vector.load %arg12[%c0_81, %c0_82, %c2_83, %c0_84] : memref<1x20x20x4xf32, #tpu.memory_space<vmem>>, vector<1x16x16x4xf32>
    %49 = vector.shape_cast %48 : vector<1x16x16x4xf32> to vector<256x4xf32>
    %cst_85 = arith.constant dense<0.000000e+00> : vector<256x4xf32>
    %50 = tpu.matmul %49, %5, %cst_85 {dimension_numbers = #tpu.dot_dimension_numbers<[1], [0], [0], [1], [0, 0, 1, 1], [], []>} : vector<256x4xf32>, vector<4x4xf32>, vector<256x4xf32> -> vector<256x4xf32>
    %51 = arith.addf %47, %50 : vector<256x4xf32>
    %c0_86 = arith.constant 0 : index
    %c0_87 = arith.constant 0 : index
    %c4 = arith.constant 4 : index
    %c0_88 = arith.constant 0 : index
    %52 = vector.load %arg12[%c0_86, %c0_87, %c4, %c0_88] : memref<1x20x20x4xf32, #tpu.memory_space<vmem>>, vector<1x16x16x4xf32>
    %53 = vector.shape_cast %52 : vector<1x16x16x4xf32> to vector<256x4xf32>
    %cst_89 = arith.constant dense<0.000000e+00> : vector<256x4xf32>
    %54 = tpu.matmul %53, %7, %cst_89 {dimension_numbers = #tpu.dot_dimension_numbers<[1], [0], [0], [1], [0, 0, 1, 1], [], []>} : vector<256x4xf32>, vector<4x4xf32>, vector<256x4xf32> -> vector<256x4xf32>
    %55 = arith.addf %51, %54 : vector<256x4xf32>
    %c0_90 = arith.constant 0 : index
    %c2_91 = arith.constant 2 : index
    %c0_92 = arith.constant 0 : index
    %c0_93 = arith.constant 0 : index
    %56 = vector.load %arg12[%c0_90, %c2_91, %c0_92, %c0_93] : memref<1x20x20x4xf32, #tpu.memory_space<vmem>>, vector<1x16x16x4xf32>
    %57 = vector.shape_cast %56 : vector<1x16x16x4xf32> to vector<256x4xf32>
    %cst_94 = arith.constant dense<0.000000e+00> : vector<256x4xf32>
    %58 = tpu.matmul %57, %9, %cst_94 {dimension_numbers = #tpu.dot_dimension_numbers<[1], [0], [0], [1], [0, 0, 1, 1], [], []>} : vector<256x4xf32>, vector<4x4xf32>, vector<256x4xf32> -> vector<256x4xf32>
    %59 = arith.addf %55, %58 : vector<256x4xf32>
    %c0_95 = arith.constant 0 : index
    %c2_96 = arith.constant 2 : index
    %c2_97 = arith.constant 2 : index
    %c0_98 = arith.constant 0 : index
    %60 = vector.load %arg12[%c0_95, %c2_96, %c2_97, %c0_98] : memref<1x20x20x4xf32, #tpu.memory_space<vmem>>, vector<1x16x16x4xf32>
    %61 = vector.shape_cast %60 : vector<1x16x16x4xf32> to vector<256x4xf32>
    %cst_99 = arith.constant dense<0.000000e+00> : vector<256x4xf32>
    %62 = tpu.matmul %61, %11, %cst_99 {dimension_numbers = #tpu.dot_dimension_numbers<[1], [0], [0], [1], [0, 0, 1, 1], [], []>} : vector<256x4xf32>, vector<4x4xf32>, vector<256x4xf32> -> vector<256x4xf32>
    %63 = arith.addf %59, %62 : vector<256x4xf32>
    %c0_100 = arith.constant 0 : index
    %c2_101 = arith.constant 2 : index
    %c4_102 = arith.constant 4 : index
    %c0_103 = arith.constant 0 : index
    %64 = vector.load %arg12[%c0_100, %c2_101, %c4_102, %c0_103] : memref<1x20x20x4xf32, #tpu.memory_space<vmem>>, vector<1x16x16x4xf32>
    %65 = vector.shape_cast %64 : vector<1x16x16x4xf32> to vector<256x4xf32>
    %cst_104 = arith.constant dense<0.000000e+00> : vector<256x4xf32>
    %66 = tpu.matmul %65, %13, %cst_104 {dimension_numbers = #tpu.dot_dimension_numbers<[1], [0], [0], [1], [0, 0, 1, 1], [], []>} : vector<256x4xf32>, vector<4x4xf32>, vector<256x4xf32> -> vector<256x4xf32>
    %67 = arith.addf %63, %66 : vector<256x4xf32>
    %c0_105 = arith.constant 0 : index
    %c4_106 = arith.constant 4 : index
    %c0_107 = arith.constant 0 : index
    %c0_108 = arith.constant 0 : index
    %68 = vector.load %arg12[%c0_105, %c4_106, %c0_107, %c0_108] : memref<1x20x20x4xf32, #tpu.memory_space<vmem>>, vector<1x16x16x4xf32>
    %69 = vector.shape_cast %68 : vector<1x16x16x4xf32> to vector<256x4xf32>
    %cst_109 = arith.constant dense<0.000000e+00> : vector<256x4xf32>
    %70 = tpu.matmul %69, %15, %cst_109 {dimension_numbers = #tpu.dot_dimension_numbers<[1], [0], [0], [1], [0, 0, 1, 1], [], []>} : vector<256x4xf32>, vector<4x4xf32>, vector<256x4xf32> -> vector<256x4xf32>
    %71 = arith.addf %67, %70 : vector<256x4xf32>
    %c0_110 = arith.constant 0 : index
    %c4_111 = arith.constant 4 : index
    %c2_112 = arith.constant 2 : index
    %c0_113 = arith.constant 0 : index
    %72 = vector.load %arg12[%c0_110, %c4_111, %c2_112, %c0_113] : memref<1x20x20x4xf32, #tpu.memory_space<vmem>>, vector<1x16x16x4xf32>
    %73 = vector.shape_cast %72 : vector<1x16x16x4xf32> to vector<256x4xf32>
    %cst_114 = arith.constant dense<0.000000e+00> : vector<256x4xf32>
    %74 = tpu.matmul %73, %17, %cst_114 {dimension_numbers = #tpu.dot_dimension_numbers<[1], [0], [0], [1], [0, 0, 1, 1], [], []>} : vector<256x4xf32>, vector<4x4xf32>, vector<256x4xf32> -> vector<256x4xf32>
    %75 = arith.addf %71, %74 : vector<256x4xf32>
    %c0_115 = arith.constant 0 : index
    %c4_116 = arith.constant 4 : index
    %c4_117 = arith.constant 4 : index
    %c0_118 = arith.constant 0 : index
    %76 = vector.load %arg12[%c0_115, %c4_116, %c4_117, %c0_118] : memref<1x20x20x4xf32, #tpu.memory_space<vmem>>, vector<1x16x16x4xf32>
    %77 = vector.shape_cast %76 : vector<1x16x16x4xf32> to vector<256x4xf32>
    %cst_119 = arith.constant dense<0.000000e+00> : vector<256x4xf32>
    %78 = tpu.matmul %77, %19, %cst_119 {dimension_numbers = #tpu.dot_dimension_numbers<[1], [0], [0], [1], [0, 0, 1, 1], [], []>} : vector<256x4xf32>, vector<4x4xf32>, vector<256x4xf32> -> vector<256x4xf32>
    %79 = arith.addf %75, %78 : vector<256x4xf32>
    %80 = vector.broadcast %22 : vector<1x4xf32> to vector<256x4xf32>
    %81 = arith.mulf %79, %80 : vector<256x4xf32>
    %82 = vector.broadcast %23 : vector<1x4xf32> to vector<256x4xf32>
    %83 = arith.addf %81, %82 : vector<256x4xf32>
    %cst_120 = arith.constant 0.000000e+00 : f32
    %84 = vector.broadcast %cst_120 : f32 to vector<256x4xf32>
    %85 = arith.maximumf %83, %84 : vector<256x4xf32>
    %cst_121 = arith.constant dense<0.000000e+00> : vector<256x16xf32>
    %86 = tpu.matmul %85, %1, %cst_121 {dimension_numbers = #tpu.dot_dimension_numbers<[1], [0], [0], [1], [0, 0, 1, 1], [], []>} : vector<256x4xf32>, vector<4x16xf32>, vector<256x16xf32> -> vector<256x16xf32>
    %87 = vector.broadcast %24 : vector<1x16xf32> to vector<256x16xf32>
    %88 = arith.mulf %86, %87 : vector<256x16xf32>
    %89 = vector.broadcast %25 : vector<1x16xf32> to vector<256x16xf32>
    %90 = arith.addf %88, %89 : vector<256x16xf32>
    %91 = arith.addf %90, %33 : vector<256x16xf32>
    %cst_122 = arith.constant 0.000000e+00 : f32
    %92 = vector.broadcast %cst_122 : f32 to vector<256x16xf32>
    %93 = arith.maximumf %91, %92 : vector<256x16xf32>
    %94 = vector.shape_cast %93 : vector<256x16xf32> to vector<1x16x16x16xf32>
    %c0_123 = arith.constant 0 : index
    %c0_124 = arith.constant 0 : index
    %c0_125 = arith.constant 0 : index
    %c0_126 = arith.constant 0 : index
    %95 = vector.load %arg11[%c0_123, %c0_124, %c0_125, %c0_126] : memref<1x16x16x16xf32, #tpu.memory_space<vmem>>, vector<1x16x16x16xf32>
    tpu.vector_store %arg11[%c0_123, %c0_124, %c0_125, %c0_126], %94 {strides = array<i32>} : memref<1x16x16x16xf32, #tpu.memory_space<vmem>>, vector<1x16x16x16xf32>,
    return
  }
  func.func @transform_0(%arg0: i32) -> (i32, i32, i32, i32) {
    %c0_i32 = arith.constant 0 : i32
    %c0_i32_0 = arith.constant 0 : i32
    %c0_i32_1 = arith.constant 0 : i32
    %c0_i32_2 = arith.constant 0 : i32
    return %arg0, %c0_i32, %c0_i32_0, %c0_i32_1 : i32, i32, i32, i32
  }
  func.func @transform_1(%arg0: i32) -> (i32, i32) {
    %c0_i32 = arith.constant 0 : i32
    %c0_i32_0 = arith.constant 0 : i32
    %c0_i32_1 = arith.constant 0 : i32
    return %c0_i32, %c0_i32_0 : i32, i32
  }
  func.func @transform_2(%arg0: i32) -> (i32, i32) {
    %c0_i32 = arith.constant 0 : i32
    %c0_i32_0 = arith.constant 0 : i32
    %c0_i32_1 = arith.constant 0 : i32
    return %c0_i32, %c0_i32_0 : i32, i32
  }
  func.func @transform_3(%arg0: i32) -> (i32, i32) {
    %c0_i32 = arith.constant 0 : i32
    %c0_i32_0 = arith.constant 0 : i32
    %c0_i32_1 = arith.constant 0 : i32
    return %c0_i32, %c0_i32_0 : i32, i32
  }
  func.func @transform_4(%arg0: i32) -> (i32, i32, i32, i32) {
    %c0_i32 = arith.constant 0 : i32
    %c0_i32_0 = arith.constant 0 : i32
    %c0_i32_1 = arith.constant 0 : i32
    %c0_i32_2 = arith.constant 0 : i32
    %c0_i32_3 = arith.constant 0 : i32
    return %c0_i32, %c0_i32_0, %c0_i32_1, %c0_i32_2 : i32, i32, i32, i32
  }
  func.func @transform_5(%arg0: i32) -> (i32, i32) {
    %c0_i32 = arith.constant 0 : i32
    %c0_i32_0 = arith.constant 0 : i32
    %c0_i32_1 = arith.constant 0 : i32
    return %c0_i32, %c0_i32_0 : i32, i32
  }
  func.func @transform_6(%arg0: i32) -> (i32, i32) {
    %c0_i32 = arith.constant 0 : i32
    %c0_i32_0 = arith.constant 0 : i32
    %c0_i32_1 = arith.constant 0 : i32
    return %c0_i32, %c0_i32_0 : i32, i32
  }
  func.func @transform_7(%arg0: i32) -> (i32, i32) {
    %c0_i32 = arith.constant 0 : i32
    %c0_i32_0 = arith.constant 0 : i32
    %c0_i32_1 = arith.constant 0 : i32
    return %c0_i32, %c0_i32_0 : i32, i32
  }
  func.func @transform_8(%arg0: i32) -> (i32, i32) {
    %c0_i32 = arith.constant 0 : i32
    %c0_i32_0 = arith.constant 0 : i32
    %c0_i32_1 = arith.constant 0 : i32
    return %c0_i32, %c0_i32_0 : i32, i32
  }
  func.func @transform_9(%arg0: i32) -> (i32, i32) {
    %c0_i32 = arith.constant 0 : i32
    %c0_i32_0 = arith.constant 0 : i32
    %c0_i32_1 = arith.constant 0 : i32
    return %c0_i32, %c0_i32_0 : i32, i32
  }
  func.func @transform_10(%arg0: i32) -> (i32, i32, i32, i32) {
    %c0_i32 = arith.constant 0 : i32
    %c0_i32_0 = arith.constant 0 : i32
    %c0_i32_1 = arith.constant 0 : i32
    %c0_i32_2 = arith.constant 0 : i32
    return %arg0, %c0_i32, %c0_i32_0, %c0_i32_1 : i32, i32, i32, i32
  }
}

</mosaic_0001>

<llo_original>
// kernel: tpu_custom_call.1
$region0: #{tpu_custom_call.1}
  #allocation0 [shape = 'u32[]', space=smem, size = 0x4, offset = 0x4, fixed_abs, tag = 'smem constant byte address 0x4 - core index']
  #allocation1 [shape = 'u32[144,128]{1,0:T(1,128)}', space=vmem, size = 0x12000, scoped, tag = 'internal scratch']
  #allocation2 [shape = 'f32[1,20,20,4]{3,2,1,0:T(8,128)}', space=vmem, size = 0x3c000, scoped, tag = 'scratch operand']
  %s0 = inlined_call_operand.hbm [shape: f32[2,16,16,16], index: 0, kind: input, shape index: {}]
  %s1 = inlined_call_operand.vmem [shape: f32[16,4], index: 1, kind: input, shape index: {}]
  %s2 = inlined_call_operand.vmem [shape: f32[1,4], index: 2, kind: input, shape index: {}]
  %s3 = inlined_call_operand.vmem [shape: f32[1,4], index: 3, kind: input, shape index: {}]
  %s4 = inlined_call_operand.hbm [shape: f32[3,3,4,4], index: 4, kind: input, shape index: {}]
  %s5 = inlined_call_operand.vmem [shape: f32[1,4], index: 5, kind: input, shape index: {}]
  %s6 = inlined_call_operand.vmem [shape: f32[1,4], index: 6, kind: input, shape index: {}]
  %s7 = inlined_call_operand.vmem [shape: f32[4,16], index: 7, kind: input, shape index: {}]
  %s8 = inlined_call_operand.vmem [shape: f32[1,16], index: 8, kind: input, shape index: {}]
  %s9 = inlined_call_operand.vmem [shape: f32[1,16], index: 9, kind: input, shape index: {}]
  %s10 = inlined_call_operand.hbm [shape: f32[2,16,16,16], index: 10, kind: output, shape index: {}]
  %s11 = sld [smem:[#allocation0]]
  $region81: #{tpu_custom_call.1} parent=0
    _
  %s13 = ssub.s32 1, %s11
  %s14 = scalar_select 0, %s13, %s11
  $region1: #{tpu_custom_call.1} parent=0
    #allocation3 [shape = 'u8[262144]{0}', space=vmem, size = 0x40000, scoped, tag = 'input window, operand 0']
    #allocation4 [shape = 's32[2]{0}', space=sflag, size = 0x8, scoped, tag = 'scoped memory for tpu_custom_call.1']
    #allocation5 [shape = 's32[2]{0}', space=sflag, size = 0x8, scoped, tag = 'scoped memory for tpu_custom_call.1']
    #allocation6 [shape = 'u8[18432]{0}', space=vmem, size = 0x4800, scoped, tag = 'input window, operand 4, single buffered']
    #allocation7 [shape = 's32[1]{0}', space=sflag, size = 0x4, scoped, tag = 'scoped memory for tpu_custom_call.1']
    #allocation8 [shape = 'u8[262144]{0}', space=vmem, size = 0x40000, scoped, tag = 'output window, operand 0']
    %15 = vsyncpa [#allocation4], 0
    %s16 = scalar_lea.sflag [#allocation4], 1
    %17 = vsyncpa %s16, 0
    %18 = vsyncpa [#allocation7], 0
    %19 = vsyncpa [#allocation5], 0
    %s20 = scalar_lea.sflag [#allocation5], 1
    %21 = vsyncpa %s20, 0
    loop: start=0, step=1, limit=4
    $region2: #{tpu_custom_call.1} parent=1 // loop_pre_header
      _
    $region3: #{tpu_custom_call.1} parent=1 // loop_header
      %s23 = sphi 0, %s27
      %p24 = scmp.ge.s32.totalorder %s23, 4
      %s33 = sphi 0, %s35
      %s36 = sphi 0, %s33
      %s37 = sphi 0, %s36
      %s53 = sphi 0, %s37
      %s57 = sphi 0, %s57
      %s59 = sphi 0, %s57
      %s60 = sphi 0, %s59
      %s74 = sphi 0, %s60
      %s78 = sphi 0, %s78
      %s80 = sphi 0, %s78
      %s81 = sphi 0, %s80
      %s95 = sphi 0, %s81
      %s99 = sphi 0, %s99
      %s101 = sphi 0, %s99
      %s102 = sphi 0, %s101
      %s116 = sphi 0, %s102
      %s120 = sphi 0, %s120
      %s122 = sphi 0, %s120
      %s123 = sphi 0, %s122
      %s137 = sphi 0, %s123
      %s141 = sphi 0, %s141
      %s143 = sphi 0, %s141
      %s144 = sphi 0, %s143
      %s158 = sphi 0, %s144
      %s162 = sphi 0, %s162
      %s164 = sphi 0, %s162
      %s165 = sphi 0, %s164
      %s179 = sphi 0, %s165
      %s183 = sphi 0, %s183
      %s185 = sphi 0, %s183
      %s186 = sphi 0, %s185
      %s200 = sphi 0, %s186
      %s204 = sphi 0, %s204
      %s206 = sphi 0, %s204
      %s207 = sphi 0, %s206
      %s221 = sphi 0, %s207
      %s225 = sphi 0, %s225
      %s227 = sphi 0, %s225
      %s228 = sphi 0, %s227
      %s242 = sphi 0, %s228
      %s248 = sphi 0, %s250
      %s251 = sphi 0, %s248
      %s252 = sphi 0, %s251
      %s268 = sphi 0, %s252
    $region4: #{tpu_custom_call.1} parent=1 // loop_header_branch
      %26 = sbr.rel (%p24) target = $region8
    $region5: #{tpu_custom_call.1} parent=1 // loop_body
      %s28 = ssub.s32 %s23, 1
      %s29 = ssub.s32 %s23, 2
      %s30 = sadd.s32 %s23, 1
      %s31 = ssub.s32 %s23, %s30
      %p32 = scmp.eq.s32.totalorder %s31, 0
      %s34 = sadd.s32 %s33, 1
      %s35 = scalar_select %p32, %s33, %s34
      %p38 = pneg %p32
      %p39 = scmp.eq.s32.totalorder %s23, 1
      %p40 = por %p38, %p39
      %p41 = scmp.ne.s32.totalorder %s33, %s36
      %p42 = scmp.eq.s32.totalorder %s23, 0
      %p43 = por %p41, %p42
      %p44 = scmp.ne.s32.totalorder %s33, %s36
      %p45 = scmp.eq.s32.totalorder %s28, 1
      %p46 = por %p44, %p45
      %p47 = scmp.ne.s32.totalorder %s36, %s37
      %p48 = scmp.eq.s32.totalorder %s28, 0
      %p49 = por %p47, %p48
      %p50 = scmp.ne.s32.totalorder %s36, %s37
      %p51 = scmp.eq.s32.totalorder %s29, 1
      %p52 = por %p50, %p51
      %p54 = scmp.ne.s32.totalorder %s37, %s53
      %p55 = scmp.eq.s32.totalorder %s29, 0
      %p56 = por %p54, %p55
      %s58 = sadd.s32 %s57, 1
      %p61 = scmp.eq.s32.totalorder %s23, 1
      %p62 = scmp.ne.s32.totalorder %s57, %s59
      %p63 = scmp.eq.s32.totalorder %s23, 0
      %p64 = por %p62, %p63
      %p65 = scmp.ne.s32.totalorder %s57, %s59
      %p66 = scmp.eq.s32.totalorder %s28, 1
      %p67 = por %p65, %p66
      %p68 = scmp.ne.s32.totalorder %s59, %s60
      %p69 = scmp.eq.s32.totalorder %s28, 0
      %p70 = por %p68, %p69
      %p71 = scmp.ne.s32.totalorder %s59, %s60
      %p72 = scmp.eq.s32.totalorder %s29, 1
      %p73 = por %p71, %p72
      %p75 = scmp.ne.s32.totalorder %s60, %s74
      %p76 = scmp.eq.s32.totalorder %s29, 0
      %p77 = por %p75, %p76
      %s79 = sadd.s32 %s78, 1
      %p82 = scmp.eq.s32.totalorder %s23, 1
      %p83 = scmp.ne.s32.totalorder %s78, %s80
      %p84 = scmp.eq.s32.totalorder %s23, 0
      %p85 = por %p83, %p84
      %p86 = scmp.ne.s32.totalorder %s78, %s80
      %p87 = scmp.eq.s32.totalorder %s28, 1
      %p88 = por %p86, %p87
      %p89 = scmp.ne.s32.totalorder %s80, %s81
      %p90 = scmp.eq.s32.totalorder %s28, 0
      %p91 = por %p89, %p90
      %p92 = scmp.ne.s32.totalorder %s80, %s81
      %p93 = scmp.eq.s32.totalorder %s29, 1
      %p94 = por %p92, %p93
      %p96 = scmp.ne.s32.totalorder %s81, %s95
      %p97 = scmp.eq.s32.totalorder %s29, 0
      %p98 = por %p96, %p97
      %s100 = sadd.s32 %s99, 1
      %p103 = scmp.eq.s32.totalorder %s23, 1
      %p104 = scmp.ne.s32.totalorder %s99, %s101
      %p105 = scmp.eq.s32.totalorder %s23, 0
      %p106 = por %p104, %p105
      %p107 = scmp.ne.s32.totalorder %s99, %s101
      %p108 = scmp.eq.s32.totalorder %s28, 1
      %p109 = por %p107, %p108
      %p110 = scmp.ne.s32.totalorder %s101, %s102
      %p111 = scmp.eq.s32.totalorder %s28, 0
      %p112 = por %p110, %p111
      %p113 = scmp.ne.s32.totalorder %s101, %s102
      %p114 = scmp.eq.s32.totalorder %s29, 1
      %p115 = por %p113, %p114
      %p117 = scmp.ne.s32.totalorder %s102, %s116
      %p118 = scmp.eq.s32.totalorder %s29, 0
      %p119 = por %p117, %p118
      %s121 = sadd.s32 %s120, 1
      %p124 = scmp.eq.s32.totalorder %s23, 1
      %p125 = scmp.ne.s32.totalorder %s120, %s122
      %p126 = scmp.eq.s32.totalorder %s23, 0
      %p127 = por %p125, %p126
      %p128 = scmp.ne.s32.totalorder %s120, %s122
      %p129 = scmp.eq.s32.totalorder %s28, 1
      %p130 = por %p128, %p129
      %p131 = scmp.ne.s32.totalorder %s122, %s123
      %p132 = scmp.eq.s32.totalorder %s28, 0
      %p133 = por %p131, %p132
      %p134 = scmp.ne.s32.totalorder %s122, %s123
      %p135 = scmp.eq.s32.totalorder %s29, 1
      %p136 = por %p134, %p135
      %p138 = scmp.ne.s32.totalorder %s123, %s137
      %p139 = scmp.eq.s32.totalorder %s29, 0
      %p140 = por %p138, %p139
      %s142 = sadd.s32 %s141, 1
      %p145 = scmp.eq.s32.totalorder %s23, 1
      %p146 = scmp.ne.s32.totalorder %s141, %s143
      %p147 = scmp.eq.s32.totalorder %s23, 0
      %p148 = por %p146, %p147
      %p149 = scmp.ne.s32.totalorder %s141, %s143
      %p150 = scmp.eq.s32.totalorder %s28, 1
      %p151 = por %p149, %p150
      %p152 = scmp.ne.s32.totalorder %s143, %s144
      %p153 = scmp.eq.s32.totalorder %s28, 0
      %p154 = por %p152, %p153
      %p155 = scmp.ne.s32.totalorder %s143, %s144
      %p156 = scmp.eq.s32.totalorder %s29, 1
      %p157 = por %p155, %p156
      %p159 = scmp.ne.s32.totalorder %s144, %s158
      %p160 = scmp.eq.s32.totalorder %s29, 0
      %p161 = por %p159, %p160
      %s163 = sadd.s32 %s162, 1
      %p166 = scmp.eq.s32.totalorder %s23, 1
      %p167 = scmp.ne.s32.totalorder %s162, %s164
      %p168 = scmp.eq.s32.totalorder %s23, 0
      %p169 = por %p167, %p168
      %p170 = scmp.ne.s32.totalorder %s162, %s164
      %p171 = scmp.eq.s32.totalorder %s28, 1
      %p172 = por %p170, %p171
      %p173 = scmp.ne.s32.totalorder %s164, %s165
      %p174 = scmp.eq.s32.totalorder %s28, 0
      %p175 = por %p173, %p174
      %p176 = scmp.ne.s32.totalorder %s164, %s165
      %p177 = scmp.eq.s32.totalorder %s29, 1
      %p178 = por %p176, %p177
      %p180 = scmp.ne.s32.totalorder %s165, %s179
      %p181 = scmp.eq.s32.totalorder %s29, 0
      %p182 = por %p180, %p181
      %s184 = sadd.s32 %s183, 1
      %p187 = scmp.eq.s32.totalorder %s23, 1
      %p188 = scmp.ne.s32.totalorder %s183, %s185
      %p189 = scmp.eq.s32.totalorder %s23, 0
      %p190 = por %p188, %p189
      %p191 = scmp.ne.s32.totalorder %s183, %s185
      %p192 = scmp.eq.s32.totalorder %s28, 1
      %p193 = por %p191, %p192
      %p194 = scmp.ne.s32.totalorder %s185, %s186
      %p195 = scmp.eq.s32.totalorder %s28, 0
      %p196 = por %p194, %p195
      %p197 = scmp.ne.s32.totalorder %s185, %s186
      %p198 = scmp.eq.s32.totalorder %s29, 1
      %p199 = por %p197, %p198
      %p201 = scmp.ne.s32.totalorder %s186, %s200
      %p202 = scmp.eq.s32.totalorder %s29, 0
      %p203 = por %p201, %p202
      %s205 = sadd.s32 %s204, 1
      %p208 = scmp.eq.s32.totalorder %s23, 1
      %p209 = scmp.ne.s32.totalorder %s204, %s206
      %p210 = scmp.eq.s32.totalorder %s23, 0
      %p211 = por %p209, %p210
      %p212 = scmp.ne.s32.totalorder %s204, %s206
      %p213 = scmp.eq.s32.totalorder %s28, 1
      %p214 = por %p212, %p213
      %p215 = scmp.ne.s32.totalorder %s206, %s207
      %p216 = scmp.eq.s32.totalorder %s28, 0
      %p217 = por %p215, %p216
      %p218 = scmp.ne.s32.totalorder %s206, %s207
      %p219 = scmp.eq.s32.totalorder %s29, 1
      %p220 = por %p218, %p219
      %p222 = scmp.ne.s32.totalorder %s207, %s221
      %p223 = scmp.eq.s32.totalorder %s29, 0
      %p224 = por %p222, %p223
      %s226 = sadd.s32 %s225, 1
      %p229 = scmp.eq.s32.totalorder %s23, 1
      %p230 = scmp.ne.s32.totalorder %s225, %s227
      %p231 = scmp.eq.s32.totalorder %s23, 0
      %p232 = por %p230, %p231
      %p233 = scmp.ne.s32.totalorder %s225, %s227
      %p234 = scmp.eq.s32.totalorder %s28, 1
      %p235 = por %p233, %p234
      %p236 = scmp.ne.s32.totalorder %s227, %s228
      %p237 = scmp.eq.s32.totalorder %s28, 0
      %p238 = por %p236, %p237
      %p239 = scmp.ne.s32.totalorder %s227, %s228
      %p240 = scmp.eq.s32.totalorder %s29, 1
      %p241 = por %p239, %p240
      %p243 = scmp.ne.s32.totalorder %s228, %s242
      %p244 = scmp.eq.s32.totalorder %s29, 0
      %p245 = por %p243, %p244
      %s246 = ssub.s32 %s23, %s30
      %p247 = scmp.eq.s32.totalorder %s246, 0
      %s249 = sadd.s32 %s248, 1
      %s250 = scalar_select %p247, %s248, %s249
      %p253 = pneg %p247
      %p254 = scmp.eq.s32.totalorder %s23, 1
      %p255 = por %p253, %p254
      %p256 = scmp.ne.s32.totalorder %s248, %s251
      %p257 = scmp.eq.s32.totalorder %s23, 0
      %p258 = por %p256, %p257
      %p259 = scmp.ne.s32.totalorder %s248, %s251
      %p260 = scmp.eq.s32.totalorder %s28, 1
      %p261 = por %p259, %p260
      %p262 = scmp.ne.s32.totalorder %s251, %s252
      %p263 = scmp.eq.s32.totalorder %s28, 0
      %p264 = por %p262, %p263
      %p265 = scmp.ne.s32.totalorder %s251, %s252
      %p266 = scmp.eq.s32.totalorder %s29, 1
      %p267 = por %p265, %p266
      %p269 = scmp.ne.s32.totalorder %s252, %s268
      %p270 = scmp.eq.s32.totalorder %s29, 0
      %p271 = por %p269, %p270
      %p272 = scmp.le.s32.totalorder 1, %s23
      %p273 = scmp.lt.s32.totalorder %s23, 3
      %p274 = pnand %p272, %p273
      %p275 = pneg %p274
      // Predicated region
      $region9: #{tpu_custom_call.1} parent=5 // pred_check
        _
      $region10: #{tpu_custom_call.1} parent=5 // pred_check_branch
        %277 = sbr.rel (%p274) target = $region12
      $region11: #{tpu_custom_call.1} parent=5 // pred_region
        %s278 = ssub.s32 %s23, 1
        // Predicated region
        $region13: #{tpu_custom_call.1} parent=11 // pred_check
          %p279 = pneg %p70
        $region14: #{tpu_custom_call.1} parent=11 // pred_check_branch
          %281 = sbr.rel (%p279) target = $region16
        $region15: #{tpu_custom_call.1} parent=11 // pred_region
          _
        $region16: #{tpu_custom_call.1} parent=11 // pred_fallthru
          _
        // Predicated region
        $region17: #{tpu_custom_call.1} parent=11 // pred_check
          %p282 = pneg %p91
        $region18: #{tpu_custom_call.1} parent=11 // pred_check_branch
          %284 = sbr.rel (%p282) target = $region20
        $region19: #{tpu_custom_call.1} parent=11 // pred_region
          _
        $region20: #{tpu_custom_call.1} parent=11 // pred_fallthru
          _
        // Predicated region
        $region21: #{tpu_custom_call.1} parent=11 // pred_check
          %p285 = pneg %p112
        $region22: #{tpu_custom_call.1} parent=11 // pred_check_branch
          %287 = sbr.rel (%p285) target = $region24
        $region23: #{tpu_custom_call.1} parent=11 // pred_region
          _
        $region24: #{tpu_custom_call.1} parent=11 // pred_fallthru
          _
        // Predicated region
        $region25: #{tpu_custom_call.1} parent=11 // pred_check
          %p288 = pneg %p133
        $region26: #{tpu_custom_call.1} parent=11 // pred_check_branch
          %290 = sbr.rel (%p288) target = $region28
        $region27: #{tpu_custom_call.1} parent=11 // pred_region
          %s292 = ssub.s32 576, 576
          %293 = vsyncadd [#allocation7], %s292
          %s294 = sshll.u32 [#allocation6], 4
          %s295 = int_to_ptr.vmem [resolvable:$true] %s294
          %300 = dma.hbm_to_vmem [thread:$0]  %s4, 576, %s295, [#allocation7], 64, 64, 4
        $region28: #{tpu_custom_call.1} parent=11 // pred_fallthru
          _
        // Predicated region
        $region29: #{tpu_custom_call.1} parent=11 // pred_check
          %p301 = pneg %p154
        $region30: #{tpu_custom_call.1} parent=11 // pred_check_branch
          %303 = sbr.rel (%p301) target = $region32
        $region31: #{tpu_custom_call.1} parent=11 // pred_region
          _
        $region32: #{tpu_custom_call.1} parent=11 // pred_fallthru
          _
        // Predicated region
        $region33: #{tpu_custom_call.1} parent=11 // pred_check
          %p304 = pneg %p175
        $region34: #{tpu_custom_call.1} parent=11 // pred_check_branch
          %306 = sbr.rel (%p304) target = $region36
        $region35: #{tpu_custom_call.1} parent=11 // pred_region
          _
        $region36: #{tpu_custom_call.1} parent=11 // pred_fallthru
          _
        // Predicated region
        $region37: #{tpu_custom_call.1} parent=11 // pred_check
          %p307 = pneg %p196
        $region38: #{tpu_custom_call.1} parent=11 // pred_check_branch
          %309 = sbr.rel (%p307) target = $region40
        $region39: #{tpu_custom_call.1} parent=11 // pred_region
          _
        $region40: #{tpu_custom_call.1} parent=11 // pred_fallthru
          _
        // Predicated region
        $region41: #{tpu_custom_call.1} parent=11 // pred_check
          %p310 = pneg %p217
        $region42: #{tpu_custom_call.1} parent=11 // pred_check_branch
          %312 = sbr.rel (%p310) target = $region44
        $region43: #{tpu_custom_call.1} parent=11 // pred_region
          _
        $region44: #{tpu_custom_call.1} parent=11 // pred_fallthru
          _
        // Predicated region
        $region45: #{tpu_custom_call.1} parent=11 // pred_check
          %p313 = pneg %p238
        $region46: #{tpu_custom_call.1} parent=11 // pred_check_branch
          %315 = sbr.rel (%p313) target = $region48
        $region47: #{tpu_custom_call.1} parent=11 // pred_region
          _
        $region48: #{tpu_custom_call.1} parent=11 // pred_fallthru
          _
      $region12: #{tpu_custom_call.1} parent=5 // pred_fallthru
        _
      %p316 = scmp.lt.s32.totalorder %s23, 2
      // Predicated region
      $region49: #{tpu_custom_call.1} parent=5 // pred_check
        %p317 = pneg %p316
      $region50: #{tpu_custom_call.1} parent=5 // pred_check_branch
        %319 = sbr.rel (%p317) target = $region52
      $region51: #{tpu_custom_call.1} parent=5 // pred_region
        // Predicated region
        $region53: #{tpu_custom_call.1} parent=51 // pred_check
          %p320 = pneg %p43
        $region54: #{tpu_custom_call.1} parent=51 // pred_check_branch
          %322 = sbr.rel (%p320) target = $region56
        $region55: #{tpu_custom_call.1} parent=51 // pred_region
          %s323 = sand.u32 %s33, 1
          %s324 = scalar_lea.sflag [#allocation4], %s323
          %s325 = sand.u32 %s33, 1
          %s326 = smul.addr %s325, 256
          %s327 = scalar_lea.vmem [#allocation3], %s326
          %s329 = ssub.s32 4096, 4096
          %330 = vsyncadd %s324, %s329
          %s331 = smul.addr %s23, 32
          %s332 = smul.addr %s331, 128
          %s333 = scalar_lea.hbm %s0, %s332
          %s334 = sshll.u32 %s327, 4
          %s335 = int_to_ptr.vmem [resolvable:$true] %s334
          %340 = dma.hbm_to_vmem [thread:$0]  %s333, 4096, %s335, %s324, 128, 128, 8
        $region56: #{tpu_custom_call.1} parent=51 // pred_fallthru
          _
      $region52: #{tpu_custom_call.1} parent=5 // pred_fallthru
        _
      %p341 = scmp.le.s32.totalorder 1, %s23
      %p342 = scmp.lt.s32.totalorder %s23, 3
      %p343 = pnand %p341, %p342
      %p344 = pneg %p343
      // Predicated region
      $region57: #{tpu_custom_call.1} parent=5 // pred_check
        _
      $region58: #{tpu_custom_call.1} parent=5 // pred_check_branch
        %346 = sbr.rel (%p343) target = $region60
      $region59: #{tpu_custom_call.1} parent=5 // pred_region
        %s347 = ssub.s32 %s23, 1
        %s348 = sand.u32 %s36, 1
        %s349 = scalar_lea.sflag [#allocation4], %s348
        %s350 = sand.u32 %s36, 1
        %s351 = smul.addr %s350, 256
        %s352 = scalar_lea.vmem [#allocation3], %s351
        // Predicated region
        $region61: #{tpu_custom_call.1} parent=59 // pred_check
          %p353 = pneg %p49
        $region62: #{tpu_custom_call.1} parent=59 // pred_check_branch
          %355 = sbr.rel (%p353) target = $region64
        $region63: #{tpu_custom_call.1} parent=59 // pred_region
          %356 = dma.done %s349, 4096
        $region64: #{tpu_custom_call.1} parent=59 // pred_fallthru
          _
        // Predicated region
        $region65: #{tpu_custom_call.1} parent=59 // pred_check
          %p357 = pneg %p133
        $region66: #{tpu_custom_call.1} parent=59 // pred_check_branch
          %359 = sbr.rel (%p357) target = $region68
        $region67: #{tpu_custom_call.1} parent=59 // pred_region
          %360 = dma.done [#allocation7], 576
        $region68: #{tpu_custom_call.1} parent=59 // pred_fallthru
          _
        %s361 = sand.u32 %s36, 1
        %s362 = scalar_lea.sflag [#allocation4], %s361
        %s363 = sand.u32 %s36, 1
        %s364 = smul.addr %s363, 256
        %s365 = scalar_lea.vmem [#allocation3], %s364
        %p366 = pneg %p49
        %p367 = pneg %p46
        %p368 = pneg %p70
        %p369 = pneg %p67
        %p370 = pneg %p91
        %p371 = pneg %p88
        %p372 = pneg %p112
        %p373 = pneg %p109
        %p374 = pneg %p133
        %p375 = pneg %p130
        %p376 = pneg %p154
        %p377 = pneg %p151
        %p378 = pneg %p175
        %p379 = pneg %p172
        %p380 = pneg %p196
        %p381 = pneg %p193
        %p382 = pneg %p217
        %p383 = pneg %p214
        %p384 = pneg %p238
        %p385 = pneg %p235
        %p386 = pneg %p264
        %p387 = pneg %p261
        %s388 = sand.u32 %s251, 1
        %s389 = scalar_lea.sflag [#allocation5], %s388
        %s390 = sand.u32 %s251, 1
        %s391 = smul.addr %s390, 256
        %s392 = scalar_lea.vmem [#allocation8], %s391
        %v393 = vld [vmem:[%s1] sm:$0xff]
        %v394 = vld [vmem:[%s1 + $0x8] sm:$0xff]
        %v395 = vld [vmem:[%s7] sm:$0xf]
        %v396 = vld [vmem:[#allocation6] sm:$0xf]
        %s397 = scalar_lea.vmem [#allocation6], 4
        %v398 = vld [vmem:[%s397] sm:$0xf]
        %s399 = scalar_lea.vmem [#allocation6], 8
        %v400 = vld [vmem:[%s399] sm:$0xf]
        %s401 = scalar_lea.vmem [#allocation6], 12
        %v402 = vld [vmem:[%s401] sm:$0xf]
        %s403 = scalar_lea.vmem [#allocation6], 16
        %v404 = vld [vmem:[%s403] sm:$0xf]
        %s405 = scalar_lea.vmem [#allocation6], 20
        %v406 = vld [vmem:[%s405] sm:$0xf]
        %s407 = scalar_lea.vmem [#allocation6], 24
        %v408 = vld [vmem:[%s407] sm:$0xf]
        %s409 = scalar_lea.vmem [#allocation6], 28
        %v410 = vld [vmem:[%s409] sm:$0xf]
        %s411 = scalar_lea.vmem [#allocation6], 32
        %v412 = vld [vmem:[%s411] sm:$0xf]
        %v413 = vld [vmem:[%s2] sm:$0x1]
        %v414 = vld [vmem:[%s3] sm:$0x1]
        %v415 = vld [vmem:[%s5] sm:$0x1]
        %v416 = vld [vmem:[%s6] sm:$0x1]
        %v417 = vld [vmem:[%s8] sm:$0x1]
        %v418 = vld [vmem:[%s9] sm:$0x1]
        %vm419 = vcmask 31744
        %420 = vst.msk [vmem:[#allocation2] sm:$0xff] %vm419, 0.0
        %421 = vst.msk [vmem:[#allocation2 + $0x8] sm:$0xff] %vm419, 0.0
        %vm422 = vcmask 27648
        %423 = vst.msk [vmem:[#allocation2 + $0x10] sm:$0xf] %vm422, 0.0
        %424 = vst.msk [vmem:[#allocation2 + $0x18] sm:$0xff] %vm419, 0.0
        %425 = vst.msk [vmem:[#allocation2 + $0x20] sm:$0xff] %vm419, 0.0
        %426 = vst.msk [vmem:[#allocation2 + $0x28] sm:$0xf] %vm422, 0.0
        %s427 = scalar_lea.vmem [#allocation2], 432
        %428 = vst.msk [vmem:[%s427] sm:$0xff] %vm419, 0.0
        %429 = vst.msk [vmem:[%s427 + $0x8] sm:$0xff] %vm419, 0.0
        %430 = vst.msk [vmem:[%s427 + $0x10] sm:$0xf] %vm422, 0.0
        %431 = vst.msk [vmem:[%s427 + $0x18] sm:$0xff] %vm419, 0.0
        %432 = vst.msk [vmem:[%s427 + $0x20] sm:$0xff] %vm419, 0.0
        %433 = vst.msk [vmem:[%s427 + $0x28] sm:$0xf] %vm422, 0.0
        %vm434 = vcmask 25600
        %435 = vst.msk [vmem:[#allocation2] sm:$0x3] %vm434, 0.0
        %436 = vst.msk [vmem:[#allocation2 + $0x18] sm:$0x3] %vm434, 0.0
        %437 = vst.msk [vmem:[#allocation2 + $0x30] sm:$0x3] %vm434, 0.0
        %438 = vst.msk [vmem:[#allocation2 + $0x48] sm:$0x3] %vm434, 0.0
        %439 = vst.msk [vmem:[#allocation2 + $0x60] sm:$0x3] %vm434, 0.0
        %440 = vst.msk [vmem:[#allocation2 + $0x78] sm:$0x3] %vm434, 0.0
        %441 = vst.msk [vmem:[#allocation2 + $0x90] sm:$0x3] %vm434, 0.0
        %442 = vst.msk [vmem:[#allocation2 + $0xa8] sm:$0x3] %vm434, 0.0
        %443 = vst.msk [vmem:[#allocation2 + $0xc0] sm:$0x3] %vm434, 0.0
        %444 = vst.msk [vmem:[#allocation2 + $0xd8] sm:$0x3] %vm434, 0.0
        %445 = vst.msk [vmem:[#allocation2 + $0xf0] sm:$0x3] %vm434, 0.0
        %446 = vst.msk [vmem:[#allocation2 + $0x108] sm:$0x3] %vm434, 0.0
        %447 = vst.msk [vmem:[#allocation2 + $0x120] sm:$0x3] %vm434, 0.0
        %448 = vst.msk [vmem:[#allocation2 + $0x138] sm:$0x3] %vm434, 0.0
        %449 = vst.msk [vmem:[#allocation2 + $0x150] sm:$0x3] %vm434, 0.0
        %450 = vst.msk [vmem:[#allocation2 + $0x168] sm:$0x3] %vm434, 0.0
        %451 = vst.msk [vmem:[#allocation2 + $0x180] sm:$0x3] %vm434, 0.0
        %452 = vst.msk [vmem:[#allocation2 + $0x198] sm:$0x3] %vm434, 0.0
        %453 = vst.msk [vmem:[#allocation2 + $0x1b0] sm:$0x3] %vm434, 0.0
        %454 = vst.msk [vmem:[#allocation2 + $0x1c8] sm:$0x3] %vm434, 0.0
        %455 = vst.msk [vmem:[#allocation2 + $0x12] sm:$0x3] %vm434, 0.0
        %456 = vst.msk [vmem:[#allocation2 + $0x2a] sm:$0x3] %vm434, 0.0
        %457 = vst.msk [vmem:[#allocation2 + $0x42] sm:$0x3] %vm434, 0.0
        %458 = vst.msk [vmem:[#allocation2 + $0x5a] sm:$0x3] %vm434, 0.0
        %459 = vst.msk [vmem:[#allocation2 + $0x72] sm:$0x3] %vm434, 0.0
        %460 = vst.msk [vmem:[#allocation2 + $0x8a] sm:$0x3] %vm434, 0.0
        %461 = vst.msk [vmem:[#allocation2 + $0xa2] sm:$0x3] %vm434, 0.0
        %462 = vst.msk [vmem:[#allocation2 + $0xba] sm:$0x3] %vm434, 0.0
        %463 = vst.msk [vmem:[#allocation2 + $0xd2] sm:$0x3] %vm434, 0.0
        %464 = vst.msk [vmem:[#allocation2 + $0xea] sm:$0x3] %vm434, 0.0
        %465 = vst.msk [vmem:[#allocation2 + $0x102] sm:$0x3] %vm434, 0.0
        %466 = vst.msk [vmem:[#allocation2 + $0x11a] sm:$0x3] %vm434, 0.0
        %467 = vst.msk [vmem:[#allocation2 + $0x132] sm:$0x3] %vm434, 0.0
        %468 = vst.msk [vmem:[#allocation2 + $0x14a] sm:$0x3] %vm434, 0.0
        %469 = vst.msk [vmem:[#allocation2 + $0x162] sm:$0x3] %vm434, 0.0
        %470 = vst.msk [vmem:[#allocation2 + $0x17a] sm:$0x3] %vm434, 0.0
        %471 = vst.msk [vmem:[#allocation2 + $0x192] sm:$0x3] %vm434, 0.0
        %472 = vst.msk [vmem:[#allocation2 + $0x1aa] sm:$0x3] %vm434, 0.0
        %473 = vst.msk [vmem:[#allocation2 + $0x1c2] sm:$0x3] %vm434, 0.0
        %474 = vst.msk [vmem:[#allocation2 + $0x1da] sm:$0x3] %vm434, 0.0
        %v475 = vld [vmem:[%s352] sm:$0xff]
        %v476 = vld [vmem:[%s352 + $0x8] sm:$0xff]
        %v477 = vld [vmem:[%s352 + $0x10] sm:$0xff]
        %v478 = vld [vmem:[%s352 + $0x18] sm:$0xff]
        %v479 = vld [vmem:[%s352 + $0x20] sm:$0xff]
        %v480 = vld [vmem:[%s352 + $0x28] sm:$0xff]
        %v481 = vld [vmem:[%s352 + $0x30] sm:$0xff]
        %v482 = vld [vmem:[%s352 + $0x38] sm:$0xff]
        %v483 = vld [vmem:[%s352 + $0x40] sm:$0xff]
        %v484 = vld [vmem:[%s352 + $0x48] sm:$0xff]
        %v485 = vld [vmem:[%s352 + $0x50] sm:$0xff]
        %v486 = vld [vmem:[%s352 + $0x58] sm:$0xff]
        %v487 = vld [vmem:[%s352 + $0x60] sm:$0xff]
        %v488 = vld [vmem:[%s352 + $0x68] sm:$0xff]
        %v489 = vld [vmem:[%s352 + $0x70] sm:$0xff]
        %v490 = vld [vmem:[%s352 + $0x78] sm:$0xff]
        %v491 = vld [vmem:[%s352 + $0x80] sm:$0xff]
        %v492 = vld [vmem:[%s352 + $0x88] sm:$0xff]
        %v493 = vld [vmem:[%s352 + $0x90] sm:$0xff]
        %v494 = vld [vmem:[%s352 + $0x98] sm:$0xff]
        %v495 = vld [vmem:[%s352 + $0xa0] sm:$0xff]
        %v496 = vld [vmem:[%s352 + $0xa8] sm:$0xff]
        %v497 = vld [vmem:[%s352 + $0xb0] sm:$0xff]
        %v498 = vld [vmem:[%s352 + $0xb8] sm:$0xff]
        %v499 = vld [vmem:[%s352 + $0xc0] sm:$0xff]
        %v500 = vld [vmem:[%s352 + $0xc8] sm:$0xff]
        %v501 = vld [vmem:[%s352 + $0xd0] sm:$0xff]
        %v502 = vld [vmem:[%s352 + $0xd8] sm:$0xff]
        %v503 = vld [vmem:[%s352 + $0xe0] sm:$0xff]
        %v504 = vld [vmem:[%s352 + $0xe8] sm:$0xff]
        %v505 = vld [vmem:[%s352 + $0xf0] sm:$0xff]
        %v506 = vld [vmem:[%s352 + $0xf8] sm:$0xff]
        %vm507 = vcmask 130048
        %v509 = vsel %vm507, %v475, 0
        %v512 = vsel %vm507, %v476, 0
        %v515 = vsel %vm507, %v477, 0
        %v518 = vsel %vm507, %v478, 0
        %v521 = vsel %vm507, %v479, 0
        %v524 = vsel %vm507, %v480, 0
        %v527 = vsel %vm507, %v481, 0
        %v530 = vsel %vm507, %v482, 0
        %v533 = vsel %vm507, %v483, 0
        %v536 = vsel %vm507, %v484, 0
        %v539 = vsel %vm507, %v485, 0
        %v542 = vsel %vm507, %v486, 0
        %v545 = vsel %vm507, %v487, 0
        %v548 = vsel %vm507, %v488, 0
        %v551 = vsel %vm507, %v489, 0
        %v554 = vsel %vm507, %v490, 0
        %v557 = vsel %vm507, %v491, 0
        %v560 = vsel %vm507, %v492, 0
        %v563 = vsel %vm507, %v493, 0
        %v566 = vsel %vm507, %v494, 0
        %v569 = vsel %vm507, %v495, 0
        %v572 = vsel %vm507, %v496, 0
        %v575 = vsel %vm507, %v497, 0
        %v578 = vsel %vm507, %v498, 0
        %v581 = vsel %vm507, %v499, 0
        %v584 = vsel %vm507, %v500, 0
        %v587 = vsel %vm507, %v501, 0
        %v590 = vsel %vm507, %v502, 0
        %v593 = vsel %vm507, %v503, 0
        %v596 = vsel %vm507, %v504, 0
        %v599 = vsel %vm507, %v505, 0
        %v602 = vsel %vm507, %v506, 0
        %604 = vmatprep.subr.mxu0 0.0
        %605 = vmatpush1.msra.mxu0 %v393
        %606 = vmatprep.subr.mxu0 0.0
        %607 = vmatpush1.msra.mxu0 %v394
        %608 = vmatprep.subr.mxu0 0.0
        %609 = vmatpush1.msra.mxu0 0.0
        %610 = vmatprep.subr.mxu0 0.0
        %611 = vmatpush1.msra.mxu0 0.0
        %612 = vmatprep.subr.mxu0 0.0
        %613 = vmatpush1.msra.mxu0 0.0
        %614 = vmatprep.subr.mxu0 0.0
        %615 = vmatpush1.msra.mxu0 0.0
        %616 = vmatprep.subr.mxu0 0.0
        %617 = vmatpush1.msra.mxu0 0.0
        %618 = vmatprep.subr.mxu0 0.0
        %619 = vmatpush1.msra.mxu0 0.0
        %620 = vmatprep.subr.mxu0 0.0
        %621 = vmatpush1.msra.mxu0 0.0
        %622 = vmatprep.subr.mxu0 0.0
        %623 = vmatpush1.msra.mxu0 0.0
        %624 = vmatprep.subr.mxu0 0.0
        %625 = vmatpush1.msra.mxu0 0.0
        %626 = vmatprep.subr.mxu0 0.0
        %627 = vmatpush1.msra.mxu0 0.0
        %628 = vmatprep.subr.mxu0 0.0
        %629 = vmatpush1.msra.mxu0 0.0
        %630 = vmatprep.subr.mxu0 0.0
        %631 = vmatpush1.msra.mxu0 0.0
        %632 = vmatprep.subr.mxu0 0.0
        %633 = vmatpush1.msra.mxu0 0.0
        %634 = vmatprep.subr.mxu0 0.0
        %635 = vmatpush1.msra.mxu0 0.0
        %636 = vmatprep.subr.mxu0 0.0
        %637 = vmatpush1.msra.mxu0 0.0
        %638 = vmatprep.subr.mxu0 0.0
        %639 = vmatpush1.msra.mxu0 0.0
        %640 = vmatprep.subr.mxu0 0.0
        %641 = vmatpush1.msra.mxu0 0.0
        %642 = vmatprep.subr.mxu0 0.0
        %643 = vmatpush1.msra.mxu0 0.0
        %644 = vmatprep.subr.mxu0 0.0
        %645 = vmatpush1.msra.mxu0 0.0
        %646 = vmatprep.subr.mxu0 0.0
        %647 = vmatpush1.msra.mxu0 0.0
        %648 = vmatprep.subr.mxu0 0.0
        %649 = vmatpush1.msra.mxu0 0.0
        %650 = vmatprep.subr.mxu0 0.0
        %651 = vmatpush1.msra.mxu0 0.0
        %652 = vmatprep.subr.mxu0 0.0
        %653 = vmatpush1.msra.mxu0 0.0
        %654 = vmatprep.subr.mxu0 0.0
        %655 = vmatpush1.msra.mxu0 0.0
        %656 = vmatprep.subr.mxu0 0.0
        %657 = vmatpush1.msra.mxu0 0.0
        %658 = vmatprep.subr.mxu0 0.0
        %659 = vmatpush1.msra.mxu0 0.0
        %660 = vmatprep.subr.mxu0 0.0
        %661 = vmatpush1.msra.mxu0 0.0
        %662 = vmatprep.subr.mxu0 0.0
        %663 = vmatpush1.msra.mxu0 0.0
        %664 = vmatprep.subr.mxu0 0.0
        %665 = vmatpush1.msra.mxu0 0.0
        %666 = vmatprep.subr.mxu0 0.0
        %667 = vmatpush1.msra.mxu0 0.0
        %668 = vmatprep.mubr.f32.mxu0 0.0
        %669 = vmatmul.mubr.f32.gmra.mrb[0].mxu0 %v509
        %v670 = vpop.f32.mrb[0].mxu0
        %v671 = vadd.f32 0.0, %v670
        %v672 = vpop.f32.mrb[0].mxu0
        %673 = vmatprep.mubr.f32.mxu0 0.0
        %674 = vmatmul.mubr.f32.gmra.mrb[0].mxu0 %v512
        %v675 = vpop.f32.mrb[0].mxu0
        %v676 = vadd.f32 0.0, %v675
        %v677 = vpop.f32.mrb[0].mxu0
        %678 = vmatprep.mubr.f32.mxu0 0.0
        %679 = vmatmul.mubr.f32.gmra.mrb[0].mxu0 %v515
        %v680 = vpop.f32.mrb[0].mxu0
        %v681 = vadd.f32 0.0, %v680
        %v682 = vpop.f32.mrb[0].mxu0
        %683 = vmatprep.mubr.f32.mxu0 0.0
        %684 = vmatmul.mubr.f32.gmra.mrb[0].mxu0 %v518
        %v685 = vpop.f32.mrb[0].mxu0
        %v686 = vadd.f32 0.0, %v685
        %v687 = vpop.f32.mrb[0].mxu0
        %688 = vmatprep.mubr.f32.mxu0 0.0
        %689 = vmatmul.mubr.f32.gmra.mrb[0].mxu0 %v521
        %v690 = vpop.f32.mrb[0].mxu0
        %v691 = vadd.f32 0.0, %v690
        %v692 = vpop.f32.mrb[0].mxu0
        %693 = vmatprep.mubr.f32.mxu0 0.0
        %694 = vmatmul.mubr.f32.gmra.mrb[0].mxu0 %v524
        %v695 = vpop.f32.mrb[0].mxu0
        %v696 = vadd.f32 0.0, %v695
        %v697 = vpop.f32.mrb[0].mxu0
        %698 = vmatprep.mubr.f32.mxu0 0.0
        %699 = vmatmul.mubr.f32.gmra.mrb[0].mxu0 %v527
        %v700 = vpop.f32.mrb[0].mxu0
        %v701 = vadd.f32 0.0, %v700
        %v702 = vpop.f32.mrb[0].mxu0
        %703 = vmatprep.mubr.f32.mxu0 0.0
        %704 = vmatmul.mubr.f32.gmra.mrb[0].mxu0 %v530
        %v705 = vpop.f32.mrb[0].mxu0
        %v706 = vadd.f32 0.0, %v705
        %v707 = vpop.f32.mrb[0].mxu0
        %708 = vmatprep.mubr.f32.mxu0 0.0
        %709 = vmatmul.mubr.f32.gmra.mrb[0].mxu0 %v533
        %v710 = vpop.f32.mrb[0].mxu0
        %v711 = vadd.f32 0.0, %v710
        %v712 = vpop.f32.mrb[0].mxu0
        %713 = vmatprep.mubr.f32.mxu0 0.0
        %714 = vmatmul.mubr.f32.gmra.mrb[0].mxu0 %v536
        %v715 = vpop.f32.mrb[0].mxu0
        %v716 = vadd.f32 0.0, %v715
        %v717 = vpop.f32.mrb[0].mxu0
        %718 = vmatprep.mubr.f32.mxu0 0.0
        %719 = vmatmul.mubr.f32.gmra.mrb[0].mxu0 %v539
        %v720 = vpop.f32.mrb[0].mxu0
        %v721 = vadd.f32 0.0, %v720
        %v722 = vpop.f32.mrb[0].mxu0
        %723 = vmatprep.mubr.f32.mxu0 0.0
        %724 = vmatmul.mubr.f32.gmra.mrb[0].mxu0 %v542
        %v725 = vpop.f32.mrb[0].mxu0
        %v726 = vadd.f32 0.0, %v725
        %v727 = vpop.f32.mrb[0].mxu0
        %728 = vmatprep.mubr.f32.mxu0 0.0
        %729 = vmatmul.mubr.f32.gmra.mrb[0].mxu0 %v545
        %v730 = vpop.f32.mrb[0].mxu0
        %v731 = vadd.f32 0.0, %v730
        %v732 = vpop.f32.mrb[0].mxu0
        %733 = vmatprep.mubr.f32.mxu0 0.0
        %734 = vmatmul.mubr.f32.gmra.mrb[0].mxu0 %v548
        %v735 = vpop.f32.mrb[0].mxu0
        %v736 = vadd.f32 0.0, %v735
        %v737 = vpop.f32.mrb[0].mxu0
        %738 = vmatprep.mubr.f32.mxu0 0.0
        %739 = vmatmul.mubr.f32.gmra.mrb[0].mxu0 %v551
        %v740 = vpop.f32.mrb[0].mxu0
        %v741 = vadd.f32 0.0, %v740
        %v742 = vpop.f32.mrb[0].mxu0
        %743 = vmatprep.mubr.f32.mxu0 0.0
        %744 = vmatmul.mubr.f32.gmra.mrb[0].mxu0 %v554
        %v745 = vpop.f32.mrb[0].mxu0
        %v746 = vadd.f32 0.0, %v745
        %v747 = vpop.f32.mrb[0].mxu0
        %748 = vmatprep.mubr.f32.mxu0 0.0
        %749 = vmatmul.mubr.f32.gmra.mrb[0].mxu0 %v557
        %v750 = vpop.f32.mrb[0].mxu0
        %v751 = vadd.f32 0.0, %v750
        %v752 = vpop.f32.mrb[0].mxu0
        %753 = vmatprep.mubr.f32.mxu0 0.0
        %754 = vmatmul.mubr.f32.gmra.mrb[0].mxu0 %v560
        %v755 = vpop.f32.mrb[0].mxu0
        %v756 = vadd.f32 0.0, %v755
        %v757 = vpop.f32.mrb[0].mxu0
        %758 = vmatprep.mubr.f32.mxu0 0.0
        %759 = vmatmul.mubr.f32.gmra.mrb[0].mxu0 %v563
        %v760 = vpop.f32.mrb[0].mxu0
        %v761 = vadd.f32 0.0, %v760
        %v762 = vpop.f32.mrb[0].mxu0
        %763 = vmatprep.mubr.f32.mxu0 0.0
        %764 = vmatmul.mubr.f32.gmra.mrb[0].mxu0 %v566
        %v765 = vpop.f32.mrb[0].mxu0
        %v766 = vadd.f32 0.0, %v765
        %v767 = vpop.f32.mrb[0].mxu0
        %768 = vmatprep.mubr.f32.mxu0 0.0
        %769 = vmatmul.mubr.f32.gmra.mrb[0].mxu0 %v569
        %v770 = vpop.f32.mrb[0].mxu0
        %v771 = vadd.f32 0.0, %v770
        %v772 = vpop.f32.mrb[0].mxu0
        %773 = vmatprep.mubr.f32.mxu0 0.0
        %774 = vmatmul.mubr.f32.gmra.mrb[0].mxu0 %v572
        %v775 = vpop.f32.mrb[0].mxu0
        %v776 = vadd.f32 0.0, %v775
        %v777 = vpop.f32.mrb[0].mxu0
        %778 = vmatprep.mubr.f32.mxu0 0.0
        %779 = vmatmul.mubr.f32.gmra.mrb[0].mxu0 %v575
        %v780 = vpop.f32.mrb[0].mxu0
        %v781 = vadd.f32 0.0, %v780
        %v782 = vpop.f32.mrb[0].mxu0
        %783 = vmatprep.mubr.f32.mxu0 0.0
        %784 = vmatmul.mubr.f32.gmra.mrb[0].mxu0 %v578
        %v785 = vpop.f32.mrb[0].mxu0
        %v786 = vadd.f32 0.0, %v785
        %v787 = vpop.f32.mrb[0].mxu0
        %788 = vmatprep.mubr.f32.mxu0 0.0
        %789 = vmatmul.mubr.f32.gmra.mrb[0].mxu0 %v581
        %v790 = vpop.f32.mrb[0].mxu0
        %v791 = vadd.f32 0.0, %v790
        %v792 = vpop.f32.mrb[0].mxu0
        %793 = vmatprep.mubr.f32.mxu0 0.0
        %794 = vmatmul.mubr.f32.gmra.mrb[0].mxu0 %v584
        %v795 = vpop.f32.mrb[0].mxu0
        %v796 = vadd.f32 0.0, %v795
        %v797 = vpop.f32.mrb[0].mxu0
        %798 = vmatprep.mubr.f32.mxu0 0.0
        %799 = vmatmul.mubr.f32.gmra.mrb[0].mxu0 %v587
        %v800 = vpop.f32.mrb[0].mxu0
        %v801 = vadd.f32 0.0, %v800
        %v802 = vpop.f32.mrb[0].mxu0
        %803 = vmatprep.mubr.f32.mxu0 0.0
        %804 = vmatmul.mubr.f32.gmra.mrb[0].mxu0 %v590
        %v805 = vpop.f32.mrb[0].mxu0
        %v806 = vadd.f32 0.0, %v805
        %v807 = vpop.f32.mrb[0].mxu0
        %808 = vmatprep.mubr.f32.mxu0 0.0
        %809 = vmatmul.mubr.f32.gmra.mrb[0].mxu0 %v593
        %v810 = vpop.f32.mrb[0].mxu0
        %v811 = vadd.f32 0.0, %v810
        %v812 = vpop.f32.mrb[0].mxu0
        %813 = vmatprep.mubr.f32.mxu0 0.0
        %814 = vmatmul.mubr.f32.gmra.mrb[0].mxu0 %v596
        %v815 = vpop.f32.mrb[0].mxu0
        %v816 = vadd.f32 0.0, %v815
        %v817 = vpop.f32.mrb[0].mxu0
        %818 = vmatprep.mubr.f32.mxu0 0.0
        %819 = vmatmul.mubr.f32.gmra.mrb[0].mxu0 %v599
        %v820 = vpop.f32.mrb[0].mxu0
        %v821 = vadd.f32 0.0, %v820
        %v822 = vpop.f32.mrb[0].mxu0
        %823 = vmatprep.mubr.f32.mxu0 0.0
        %824 = vmatmul.mubr.f32.gmra.mrb[0].mxu0 %v602
        %v825 = vpop.f32.mrb[0].mxu0
        %v826 = vadd.f32 0.0, %v825
        %v827 = vpop.f32.mrb[0].mxu0
        %828 = vdwg.mxu0
        %v830 = vlaneseq
        %v831 = vshrl.u32 %v830, 7
        %v832 = vsub.s32 0, %v831
        %v833 = vrot.slane %v413, %v832
        %v835 = vmul.f32 %v671, %v833
        %v836 = vmul.f32 %v676, %v833
        %v837 = vmul.f32 %v681, %v833
        %v838 = vmul.f32 %v686, %v833
        %v839 = vmul.f32 %v691, %v833
        %v840 = vmul.f32 %v696, %v833
        %v841 = vmul.f32 %v701, %v833
        %v842 = vmul.f32 %v706, %v833
        %v843 = vmul.f32 %v711, %v833
        %v844 = vmul.f32 %v716, %v833
        %v845 = vmul.f32 %v721, %v833
        %v846 = vmul.f32 %v726, %v833
        %v847 = vmul.f32 %v731, %v833
        %v848 = vmul.f32 %v736, %v833
        %v849 = vmul.f32 %v741, %v833
        %v850 = vmul.f32 %v746, %v833
        %v851 = vmul.f32 %v751, %v833
        %v852 = vmul.f32 %v756, %v833
        %v853 = vmul.f32 %v761, %v833
        %v854 = vmul.f32 %v766, %v833
        %v855 = vmul.f32 %v771, %v833
        %v856 = vmul.f32 %v776, %v833
        %v857 = vmul.f32 %v781, %v833
        %v858 = vmul.f32 %v786, %v833
        %v859 = vmul.f32 %v791, %v833
        %v860 = vmul.f32 %v796, %v833
        %v861 = vmul.f32 %v801, %v833
        %v862 = vmul.f32 %v806, %v833
        %v863 = vmul.f32 %v811, %v833
        %v864 = vmul.f32 %v816, %v833
        %v865 = vmul.f32 %v821, %v833
        %v866 = vmul.f32 %v826, %v833
        %v868 = vlaneseq
        %v869 = vshrl.u32 %v868, 7
        %v870 = vsub.s32 0, %v869
        %v871 = vrot.slane %v414, %v870
        %v873 = vadd.f32 %v835, %v871
        %v874 = vadd.f32 %v836, %v871
        %v875 = vadd.f32 %v837, %v871
        %v876 = vadd.f32 %v838, %v871
        %v877 = vadd.f32 %v839, %v871
        %v878 = vadd.f32 %v840, %v871
        %v879 = vadd.f32 %v841, %v871
        %v880 = vadd.f32 %v842, %v871
        %v881 = vadd.f32 %v843, %v871
        %v882 = vadd.f32 %v844, %v871
        %v883 = vadd.f32 %v845, %v871
        %v884 = vadd.f32 %v846, %v871
        %v885 = vadd.f32 %v847, %v871
        %v886 = vadd.f32 %v848, %v871
        %v887 = vadd.f32 %v849, %v871
        %v888 = vadd.f32 %v850, %v871
        %v889 = vadd.f32 %v851, %v871
        %v890 = vadd.f32 %v852, %v871
        %v891 = vadd.f32 %v853, %v871
        %v892 = vadd.f32 %v854, %v871
        %v893 = vadd.f32 %v855, %v871
        %v894 = vadd.f32 %v856, %v871
        %v895 = vadd.f32 %v857, %v871
        %v896 = vadd.f32 %v858, %v871
        %v897 = vadd.f32 %v859, %v871
        %v898 = vadd.f32 %v860, %v871
        %v899 = vadd.f32 %v861, %v871
        %v900 = vadd.f32 %v862, %v871
        %v901 = vadd.f32 %v863, %v871
        %v902 = vadd.f32 %v864, %v871
        %v903 = vadd.f32 %v865, %v871
        %v904 = vadd.f32 %v866, %v871
        %v905 = vmax.f32 %v873, 0.0
        %v906 = vmax.f32 %v874, 0.0
        %v907 = vmax.f32 %v875, 0.0
        %v908 = vmax.f32 %v876, 0.0
        %v909 = vmax.f32 %v877, 0.0
        %v910 = vmax.f32 %v878, 0.0
        %v911 = vmax.f32 %v879, 0.0
        %v912 = vmax.f32 %v880, 0.0
        %v913 = vmax.f32 %v881, 0.0
        %v914 = vmax.f32 %v882, 0.0
        %v915 = vmax.f32 %v883, 0.0
        %v916 = vmax.f32 %v884, 0.0
        %v917 = vmax.f32 %v885, 0.0
        %v918 = vmax.f32 %v886, 0.0
        %v919 = vmax.f32 %v887, 0.0
        %v920 = vmax.f32 %v888, 0.0
        %v921 = vmax.f32 %v889, 0.0
        %v922 = vmax.f32 %v890, 0.0
        %v923 = vmax.f32 %v891, 0.0
        %v924 = vmax.f32 %v892, 0.0
        %v925 = vmax.f32 %v893, 0.0
        %v926 = vmax.f32 %v894, 0.0
        %v927 = vmax.f32 %v895, 0.0
        %v928 = vmax.f32 %v896, 0.0
        %v929 = vmax.f32 %v897, 0.0
        %v930 = vmax.f32 %v898, 0.0
        %v931 = vmax.f32 %v899, 0.0
        %v932 = vmax.f32 %v900, 0.0
        %v933 = vmax.f32 %v901, 0.0
        %v934 = vmax.f32 %v902, 0.0
        %v935 = vmax.f32 %v903, 0.0
        %v936 = vmax.f32 %v904, 0.0
        %s937 = scalar_lea.vmem [#allocation2], 48
        %938 = vst.msk [vmem:[%s937 + $0x2] sm:$0xff] %vm419, %v905
        %939 = vst.msk [vmem:[%s937 + $0xa] sm:$0xff] %vm419, %v906
        %940 = vst.msk [vmem:[%s937 + $0x1a] sm:$0xff] %vm419, %v907
        %941 = vst.msk [vmem:[%s937 + $0x22] sm:$0xff] %vm419, %v908
        %942 = vst.msk [vmem:[%s937 + $0x32] sm:$0xff] %vm419, %v909
        %943 = vst.msk [vmem:[%s937 + $0x3a] sm:$0xff] %vm419, %v910
        %944 = vst.msk [vmem:[%s937 + $0x4a] sm:$0xff] %vm419, %v911
        %945 = vst.msk [vmem:[%s937 + $0x52] sm:$0xff] %vm419, %v912
        %946 = vst.msk [vmem:[%s937 + $0x62] sm:$0xff] %vm419, %v913
        %947 = vst.msk [vmem:[%s937 + $0x6a] sm:$0xff] %vm419, %v914
        %948 = vst.msk [vmem:[%s937 + $0x7a] sm:$0xff] %vm419, %v915
        %949 = vst.msk [vmem:[%s937 + $0x82] sm:$0xff] %vm419, %v916
        %950 = vst.msk [vmem:[%s937 + $0x92] sm:$0xff] %vm419, %v917
        %951 = vst.msk [vmem:[%s937 + $0x9a] sm:$0xff] %vm419, %v918
        %952 = vst.msk [vmem:[%s937 + $0xaa] sm:$0xff] %vm419, %v919
        %953 = vst.msk [vmem:[%s937 + $0xb2] sm:$0xff] %vm419, %v920
        %954 = vst.msk [vmem:[%s937 + $0xc2] sm:$0xff] %vm419, %v921
        %955 = vst.msk [vmem:[%s937 + $0xca] sm:$0xff] %vm419, %v922
        %956 = vst.msk [vmem:[%s937 + $0xda] sm:$0xff] %vm419, %v923
        %957 = vst.msk [vmem:[%s937 + $0xe2] sm:$0xff] %vm419, %v924
        %958 = vst.msk [vmem:[%s937 + $0xf2] sm:$0xff] %vm419, %v925
        %959 = vst.msk [vmem:[%s937 + $0xfa] sm:$0xff] %vm419, %v926
        %960 = vst.msk [vmem:[%s937 + $0x10a] sm:$0xff] %vm419, %v927
        %961 = vst.msk [vmem:[%s937 + $0x112] sm:$0xff] %vm419, %v928
        %962 = vst.msk [vmem:[%s937 + $0x122] sm:$0xff] %vm419, %v929
        %963 = vst.msk [vmem:[%s937 + $0x12a] sm:$0xff] %vm419, %v930
        %964 = vst.msk [vmem:[%s937 + $0x13a] sm:$0xff] %vm419, %v931
        %965 = vst.msk [vmem:[%s937 + $0x142] sm:$0xff] %vm419, %v932
        %966 = vst.msk [vmem:[%s937 + $0x152] sm:$0xff] %vm419, %v933
        %967 = vst.msk [vmem:[%s937 + $0x15a] sm:$0xff] %vm419, %v934
        %968 = vst.msk [vmem:[%s937 + $0x16a] sm:$0xff] %vm419, %v935
        %969 = vst.msk [vmem:[%s937 + $0x172] sm:$0xff] %vm419, %v936
        %v970 = vld [vmem:[#allocation2] sm:$0xff]
        %v971 = vld [vmem:[#allocation2 + $0x8] sm:$0xff]
        %v972 = vld [vmem:[#allocation2 + $0x18] sm:$0xff]
        %v973 = vld [vmem:[#allocation2 + $0x20] sm:$0xff]
        %v974 = vld [vmem:[#allocation2 + $0x30] sm:$0xff]
        %v975 = vld [vmem:[#allocation2 + $0x38] sm:$0xff]
        %v976 = vld [vmem:[#allocation2 + $0x48] sm:$0xff]
        %v977 = vld [vmem:[#allocation2 + $0x50] sm:$0xff]
        %v978 = vld [vmem:[#allocation2 + $0x60] sm:$0xff]
        %v979 = vld [vmem:[#allocation2 + $0x68] sm:$0xff]
        %v980 = vld [vmem:[#allocation2 + $0x78] sm:$0xff]
        %v981 = vld [vmem:[#allocation2 + $0x80] sm:$0xff]
        %v982 = vld [vmem:[#allocation2 + $0x90] sm:$0xff]
        %v983 = vld [vmem:[#allocation2 + $0x98] sm:$0xff]
        %v984 = vld [vmem:[#allocation2 + $0xa8] sm:$0xff]
        %v985 = vld [vmem:[#allocation2 + $0xb0] sm:$0xff]
        %v986 = vld [vmem:[#allocation2 + $0xc0] sm:$0xff]
        %v987 = vld [vmem:[#allocation2 + $0xc8] sm:$0xff]
        %v988 = vld [vmem:[#allocation2 + $0xd8] sm:$0xff]
        %v989 = vld [vmem:[#allocation2 + $0xe0] sm:$0xff]
        %v990 = vld [vmem:[#allocation2 + $0xf0] sm:$0xff]
        %v991 = vld [vmem:[#allocation2 + $0xf8] sm:$0xff]
        %v992 = vld [vmem:[#allocation2 + $0x108] sm:$0xff]
        %v993 = vld [vmem:[#allocation2 + $0x110] sm:$0xff]
        %v994 = vld [vmem:[#allocation2 + $0x120] sm:$0xff]
        %v995 = vld [vmem:[#allocation2 + $0x128] sm:$0xff]
        %v996 = vld [vmem:[#allocation2 + $0x138] sm:$0xff]
        %v997 = vld [vmem:[#allocation2 + $0x140] sm:$0xff]
        %v998 = vld [vmem:[#allocation2 + $0x150] sm:$0xff]
        %v999 = vld [vmem:[#allocation2 + $0x158] sm:$0xff]
        %v1000 = vld [vmem:[#allocation2 + $0x168] sm:$0xff]
        %v1001 = vld [vmem:[#allocation2 + $0x170] sm:$0xff]
        %v1002 = vld [vmem:[#allocation2 + $0x2] sm:$0xff]
        %v1003 = vld [vmem:[#allocation2 + $0xa] sm:$0xff]
        %v1004 = vld [vmem:[#allocation2 + $0x1a] sm:$0xff]
        %v1005 = vld [vmem:[#allocation2 + $0x22] sm:$0xff]
        %v1006 = vld [vmem:[#allocation2 + $0x32] sm:$0xff]
        %v1007 = vld [vmem:[#allocation2 + $0x3a] sm:$0xff]
        %v1008 = vld [vmem:[#allocation2 + $0x4a] sm:$0xff]
        %v1009 = vld [vmem:[#allocation2 + $0x52] sm:$0xff]
        %v1010 = vld [vmem:[#allocation2 + $0x62] sm:$0xff]
        %v1011 = vld [vmem:[#allocation2 + $0x6a] sm:$0xff]
        %v1012 = vld [vmem:[#allocation2 + $0x7a] sm:$0xff]
        %v1013 = vld [vmem:[#allocation2 + $0x82] sm:$0xff]
        %v1014 = vld [vmem:[#allocation2 + $0x92] sm:$0xff]
        %v1015 = vld [vmem:[#allocation2 + $0x9a] sm:$0xff]
        %v1016 = vld [vmem:[#allocation2 + $0xaa] sm:$0xff]
        %v1017 = vld [vmem:[#allocation2 + $0xb2] sm:$0xff]
        %v1018 = vld [vmem:[#allocation2 + $0xc2] sm:$0xff]
        %v1019 = vld [vmem:[#allocation2 + $0xca] sm:$0xff]
        %v1020 = vld [vmem:[#allocation2 + $0xda] sm:$0xff]
        %v1021 = vld [vmem:[#allocation2 + $0xe2] sm:$0xff]
        %v1022 = vld [vmem:[#allocation2 + $0xf2] sm:$0xff]
        %v1023 = vld [vmem:[#allocation2 + $0xfa] sm:$0xff]
        %v1024 = vld [vmem:[#allocation2 + $0x10a] sm:$0xff]
        %v1025 = vld [vmem:[#allocation2 + $0x112] sm:$0xff]
        %v1026 = vld [vmem:[#allocation2 + $0x122] sm:$0xff]
        %v1027 = vld [vmem:[#allocation2 + $0x12a] sm:$0xff]
        %v1028 = vld [vmem:[#allocation2 + $0x13a] sm:$0xff]
        %v1029 = vld [vmem:[#allocation2 + $0x142] sm:$0xff]
        %v1030 = vld [vmem:[#allocation2 + $0x152] sm:$0xff]
        %v1031 = vld [vmem:[#allocation2 + $0x15a] sm:$0xff]
        %v1032 = vld [vmem:[#allocation2 + $0x16a] sm:$0xff]
        %v1033 = vld [vmem:[#allocation2 + $0x172] sm:$0xff]
        %v1035 = vsel %vm419, %v1002, 0
        %v1038 = vsel %vm419, %v1003, 0
        %v1041 = vsel %vm419, %v1004, 0
        %v1044 = vsel %vm419, %v1005, 0
        %v1047 = vsel %vm419, %v1006, 0
        %v1050 = vsel %vm419, %v1007, 0
        %v1053 = vsel %vm419, %v1008, 0
        %v1056 = vsel %vm419, %v1009, 0
        %v1059 = vsel %vm419, %v1010, 0
        %v1062 = vsel %vm419, %v1011, 0
        %v1065 = vsel %vm419, %v1012, 0
        %v1068 = vsel %vm419, %v1013, 0
        %v1071 = vsel %vm419, %v1014, 0
        %v1074 = vsel %vm419, %v1015, 0
        %v1077 = vsel %vm419, %v1016, 0
        %v1080 = vsel %vm419, %v1017, 0
        %v1083 = vsel %vm419, %v1018, 0
        %v1086 = vsel %vm419, %v1019, 0
        %v1089 = vsel %vm419, %v1020, 0
        %v1092 = vsel %vm419, %v1021, 0
        %v1095 = vsel %vm419, %v1022, 0
        %v1098 = vsel %vm419, %v1023, 0
        %v1101 = vsel %vm419, %v1024, 0
        %v1104 = vsel %vm419, %v1025, 0
        %v1107 = vsel %vm419, %v1026, 0
        %v1110 = vsel %vm419, %v1027, 0
        %v1113 = vsel %vm419, %v1028, 0
        %v1116 = vsel %vm419, %v1029, 0
        %v1119 = vsel %vm419, %v1030, 0
        %v1122 = vsel %vm419, %v1031, 0
        %v1125 = vsel %vm419, %v1032, 0
        %v1128 = vsel %vm419, %v1033, 0
        %vm1130 = vcmask 1043456
        %v1132 = vsel %vm1130, %v398, 0
        %1134 = vmatprep.subr.mxu0 0.0
        %1135 = vmatpush1.msra.mxu0 %v1132
        %1136 = vmatprep.subr.mxu0 0.0
        %1137 = vmatpush1.msra.mxu0 0.0
        %1138 = vmatprep.subr.mxu0 0.0
        %1139 = vmatpush1.msra.mxu0 0.0
        %1140 = vmatprep.subr.mxu0 0.0
        %1141 = vmatpush1.msra.mxu0 0.0
        %1142 = vmatprep.subr.mxu0 0.0
        %1143 = vmatpush1.msra.mxu0 0.0
        %1144 = vmatprep.subr.mxu0 0.0
        %1145 = vmatpush1.msra.mxu0 0.0
        %1146 = vmatprep.subr.mxu0 0.0
        %1147 = vmatpush1.msra.mxu0 0.0
        %1148 = vmatprep.subr.mxu0 0.0
        %1149 = vmatpush1.msra.mxu0 0.0
        %1150 = vmatprep.subr.mxu0 0.0
        %1151 = vmatpush1.msra.mxu0 0.0
        %1152 = vmatprep.subr.mxu0 0.0
        %1153 = vmatpush1.msra.mxu0 0.0
        %1154 = vmatprep.subr.mxu0 0.0
        %1155 = vmatpush1.msra.mxu0 0.0
        %1156 = vmatprep.subr.mxu0 0.0
        %1157 = vmatpush1.msra.mxu0 0.0
        %1158 = vmatprep.subr.mxu0 0.0
        %1159 = vmatpush1.msra.mxu0 0.0
        %1160 = vmatprep.subr.mxu0 0.0
        %1161 = vmatpush1.msra.mxu0 0.0
        %1162 = vmatprep.subr.mxu0 0.0
        %1163 = vmatpush1.msra.mxu0 0.0
        %1164 = vmatprep.subr.mxu0 0.0
        %1165 = vmatpush1.msra.mxu0 0.0
        %1166 = vmatprep.subr.mxu0 0.0
        %1167 = vmatpush1.msra.mxu0 0.0
        %1168 = vmatprep.subr.mxu0 0.0
        %1169 = vmatpush1.msra.mxu0 0.0
        %1170 = vmatprep.subr.mxu0 0.0
        %1171 = vmatpush1.msra.mxu0 0.0
        %1172 = vmatprep.subr.mxu0 0.0
        %1173 = vmatpush1.msra.mxu0 0.0
        %1174 = vmatprep.subr.mxu0 0.0
        %1175 = vmatpush1.msra.mxu0 0.0
        %1176 = vmatprep.subr.mxu0 0.0
        %1177 = vmatpush1.msra.mxu0 0.0
        %1178 = vmatprep.subr.mxu0 0.0
        %1179 = vmatpush1.msra.mxu0 0.0
        %1180 = vmatprep.subr.mxu0 0.0
        %1181 = vmatpush1.msra.mxu0 0.0
        %1182 = vmatprep.subr.mxu0 0.0
        %1183 = vmatpush1.msra.mxu0 0.0
        %1184 = vmatprep.subr.mxu0 0.0
        %1185 = vmatpush1.msra.mxu0 0.0
        %1186 = vmatprep.subr.mxu0 0.0
        %1187 = vmatpush1.msra.mxu0 0.0
        %1188 = vmatprep.subr.mxu0 0.0
        %1189 = vmatpush1.msra.mxu0 0.0
        %1190 = vmatprep.subr.mxu0 0.0
        %1191 = vmatpush1.msra.mxu0 0.0
        %1192 = vmatprep.subr.mxu0 0.0
        %1193 = vmatpush1.msra.mxu0 0.0
        %1194 = vmatprep.subr.mxu0 0.0
        %1195 = vmatpush1.msra.mxu0 0.0
        %1196 = vmatprep.subr.mxu0 0.0
        %1197 = vmatpush1.msra.mxu0 0.0
        %1198 = vmatprep.mubr.f32.mxu0 0.0
        %1199 = vmatmul.mubr.f32.gmra.mrb[0].mxu0 %v1035
        %v1200 = vpop.f32.mrb[0].mxu0
        %v1201 = vadd.f32 0.0, %v1200
        %v1202 = vpop.f32.mrb[0].mxu0
        %1203 = vmatprep.mubr.f32.mxu0 0.0
        %1204 = vmatmul.mubr.f32.gmra.mrb[0].mxu0 %v1038
        %v1205 = vpop.f32.mrb[0].mxu0
        %v1206 = vadd.f32 0.0, %v1205
        %v1207 = vpop.f32.mrb[0].mxu0
        %1208 = vmatprep.mubr.f32.mxu0 0.0
        %1209 = vmatmul.mubr.f32.gmra.mrb[0].mxu0 %v1041
        %v1210 = vpop.f32.mrb[0].mxu0
        %v1211 = vadd.f32 0.0, %v1210
        %v1212 = vpop.f32.mrb[0].mxu0
        %1213 = vmatprep.mubr.f32.mxu0 0.0
        %1214 = vmatmul.mubr.f32.gmra.mrb[0].mxu0 %v1044
        %v1215 = vpop.f32.mrb[0].mxu0
        %v1216 = vadd.f32 0.0, %v1215
        %v1217 = vpop.f32.mrb[0].mxu0
        %1218 = vmatprep.mubr.f32.mxu0 0.0
        %1219 = vmatmul.mubr.f32.gmra.mrb[0].mxu0 %v1047
        %v1220 = vpop.f32.mrb[0].mxu0
        %v1221 = vadd.f32 0.0, %v1220
        %v1222 = vpop.f32.mrb[0].mxu0
        %1223 = vmatprep.mubr.f32.mxu0 0.0
        %1224 = vmatmul.mubr.f32.gmra.mrb[0].mxu0 %v1050
        %v1225 = vpop.f32.mrb[0].mxu0
        %v1226 = vadd.f32 0.0, %v1225
        %v1227 = vpop.f32.mrb[0].mxu0
        %1228 = vmatprep.mubr.f32.mxu0 0.0
        %1229 = vmatmul.mubr.f32.gmra.mrb[0].mxu0 %v1053
        %v1230 = vpop.f32.mrb[0].mxu0
        %v1231 = vadd.f32 0.0, %v1230
        %v1232 = vpop.f32.mrb[0].mxu0
        %1233 = vmatprep.mubr.f32.mxu0 0.0
        %1234 = vmatmul.mubr.f32.gmra.mrb[0].mxu0 %v1056
        %v1235 = vpop.f32.mrb[0].mxu0
        %v1236 = vadd.f32 0.0, %v1235
        %v1237 = vpop.f32.mrb[0].mxu0
        %1238 = vmatprep.mubr.f32.mxu0 0.0
        %1239 = vmatmul.mubr.f32.gmra.mrb[0].mxu0 %v1059
        %v1240 = vpop.f32.mrb[0].mxu0
        %v1241 = vadd.f32 0.0, %v1240
        %v1242 = vpop.f32.mrb[0].mxu0
        %1243 = vmatprep.mubr.f32.mxu0 0.0
        %1244 = vmatmul.mubr.f32.gmra.mrb[0].mxu0 %v1062
        %v1245 = vpop.f32.mrb[0].mxu0
        %v1246 = vadd.f32 0.0, %v1245
        %v1247 = vpop.f32.mrb[0].mxu0
        %1248 = vmatprep.mubr.f32.mxu0 0.0
        %1249 = vmatmul.mubr.f32.gmra.mrb[0].mxu0 %v1065
        %v1250 = vpop.f32.mrb[0].mxu0
        %v1251 = vadd.f32 0.0, %v1250
        %v1252 = vpop.f32.mrb[0].mxu0
        %1253 = vmatprep.mubr.f32.mxu0 0.0
        %1254 = vmatmul.mubr.f32.gmra.mrb[0].mxu0 %v1068
        %v1255 = vpop.f32.mrb[0].mxu0
        %v1256 = vadd.f32 0.0, %v1255
        %v1257 = vpop.f32.mrb[0].mxu0
        %1258 = vmatprep.mubr.f32.mxu0 0.0
        %1259 = vmatmul.mubr.f32.gmra.mrb[0].mxu0 %v1071
        %v1260 = vpop.f32.mrb[0].mxu0
        %v1261 = vadd.f32 0.0, %v1260
        %v1262 = vpop.f32.mrb[0].mxu0
        %1263 = vmatprep.mubr.f32.mxu0 0.0
        %1264 = vmatmul.mubr.f32.gmra.mrb[0].mxu0 %v1074
        %v1265 = vpop.f32.mrb[0].mxu0
        %v1266 = vadd.f32 0.0, %v1265
        %v1267 = vpop.f32.mrb[0].mxu0
        %1268 = vmatprep.mubr.f32.mxu0 0.0
        %1269 = vmatmul.mubr.f32.gmra.mrb[0].mxu0 %v1077
        %v1270 = vpop.f32.mrb[0].mxu0
        %v1271 = vadd.f32 0.0, %v1270
        %v1272 = vpop.f32.mrb[0].mxu0
        %1273 = vmatprep.mubr.f32.mxu0 0.0
        %1274 = vmatmul.mubr.f32.gmra.mrb[0].mxu0 %v1080
        %v1275 = vpop.f32.mrb[0].mxu0
        %v1276 = vadd.f32 0.0, %v1275
        %v1277 = vpop.f32.mrb[0].mxu0
        %1278 = vmatprep.mubr.f32.mxu0 0.0
        %1279 = vmatmul.mubr.f32.gmra.mrb[0].mxu0 %v1083
        %v1280 = vpop.f32.mrb[0].mxu0
        %v1281 = vadd.f32 0.0, %v1280
        %v1282 = vpop.f32.mrb[0].mxu0
        %1283 = vmatprep.mubr.f32.mxu0 0.0
        %1284 = vmatmul.mubr.f32.gmra.mrb[0].mxu0 %v1086
        %v1285 = vpop.f32.mrb[0].mxu0
        %v1286 = vadd.f32 0.0, %v1285
        %v1287 = vpop.f32.mrb[0].mxu0
        %1288 = vmatprep.mubr.f32.mxu0 0.0
        %1289 = vmatmul.mubr.f32.gmra.mrb[0].mxu0 %v1089
        %v1290 = vpop.f32.mrb[0].mxu0
        %v1291 = vadd.f32 0.0, %v1290
        %v1292 = vpop.f32.mrb[0].mxu0
        %1293 = vmatprep.mubr.f32.mxu0 0.0
        %1294 = vmatmul.mubr.f32.gmra.mrb[0].mxu0 %v1092
        %v1295 = vpop.f32.mrb[0].mxu0
        %v1296 = vadd.f32 0.0, %v1295
        %v1297 = vpop.f32.mrb[0].mxu0
        %1298 = vmatprep.mubr.f32.mxu0 0.0
        %1299 = vmatmul.mubr.f32.gmra.mrb[0].mxu0 %v1095
        %v1300 = vpop.f32.mrb[0].mxu0
        %v1301 = vadd.f32 0.0, %v1300
        %v1302 = vpop.f32.mrb[0].mxu0
        %1303 = vmatprep.mubr.f32.mxu0 0.0
        %1304 = vmatmul.mubr.f32.gmra.mrb[0].mxu0 %v1098
        %v1305 = vpop.f32.mrb[0].mxu0
        %v1306 = vadd.f32 0.0, %v1305
        %v1307 = vpop.f32.mrb[0].mxu0
        %1308 = vmatprep.mubr.f32.mxu0 0.0
        %1309 = vmatmul.mubr.f32.gmra.mrb[0].mxu0 %v1101
        %v1310 = vpop.f32.mrb[0].mxu0
        %v1311 = vadd.f32 0.0, %v1310
        %v1312 = vpop.f32.mrb[0].mxu0
        %1313 = vmatprep.mubr.f32.mxu0 0.0
        %1314 = vmatmul.mubr.f32.gmra.mrb[0].mxu0 %v1104
        %v1315 = vpop.f32.mrb[0].mxu0
        %v1316 = vadd.f32 0.0, %v1315
        %v1317 = vpop.f32.mrb[0].mxu0
        %1318 = vmatprep.mubr.f32.mxu0 0.0
        %1319 = vmatmul.mubr.f32.gmra.mrb[0].mxu0 %v1107
        %v1320 = vpop.f32.mrb[0].mxu0
        %v1321 = vadd.f32 0.0, %v1320
        %v1322 = vpop.f32.mrb[0].mxu0
        %1323 = vmatprep.mubr.f32.mxu0 0.0
        %1324 = vmatmul.mubr.f32.gmra.mrb[0].mxu0 %v1110
        %v1325 = vpop.f32.mrb[0].mxu0
        %v1326 = vadd.f32 0.0, %v1325
        %v1327 = vpop.f32.mrb[0].mxu0
        %1328 = vmatprep.mubr.f32.mxu0 0.0
        %1329 = vmatmul.mubr.f32.gmra.mrb[0].mxu0 %v1113
        %v1330 = vpop.f32.mrb[0].mxu0
        %v1331 = vadd.f32 0.0, %v1330
        %v1332 = vpop.f32.mrb[0].mxu0
        %1333 = vmatprep.mubr.f32.mxu0 0.0
        %1334 = vmatmul.mubr.f32.gmra.mrb[0].mxu0 %v1116
        %v1335 = vpop.f32.mrb[0].mxu0
        %v1336 = vadd.f32 0.0, %v1335
        %v1337 = vpop.f32.mrb[0].mxu0
        %1338 = vmatprep.mubr.f32.mxu0 0.0
        %1339 = vmatmul.mubr.f32.gmra.mrb[0].mxu0 %v1119
        %v1340 = vpop.f32.mrb[0].mxu0
        %v1341 = vadd.f32 0.0, %v1340
        %v1342 = vpop.f32.mrb[0].mxu0
        %1343 = vmatprep.mubr.f32.mxu0 0.0
        %1344 = vmatmul.mubr.f32.gmra.mrb[0].mxu0 %v1122
        %v1345 = vpop.f32.mrb[0].mxu0
        %v1346 = vadd.f32 0.0, %v1345
        %v1347 = vpop.f32.mrb[0].mxu0
        %1348 = vmatprep.mubr.f32.mxu0 0.0
        %1349 = vmatmul.mubr.f32.gmra.mrb[0].mxu0 %v1125
        %v1350 = vpop.f32.mrb[0].mxu0
        %v1351 = vadd.f32 0.0, %v1350
        %v1352 = vpop.f32.mrb[0].mxu0
        %1353 = vmatprep.mubr.f32.mxu0 0.0
        %1354 = vmatmul.mubr.f32.gmra.mrb[0].mxu0 %v1128
        %v1355 = vpop.f32.mrb[0].mxu0
        %v1356 = vadd.f32 0.0, %v1355
        %v1357 = vpop.f32.mrb[0].mxu0
        %1358 = vdwg.mxu0
        %v1360 = vsel %vm419, %v970, 0
        %v1363 = vsel %vm419, %v971, 0
        %v1366 = vsel %vm419, %v972, 0
        %v1369 = vsel %vm419, %v973, 0
        %v1372 = vsel %vm419, %v974, 0
        %v1375 = vsel %vm419, %v975, 0
        %v1378 = vsel %vm419, %v976, 0
        %v1381 = vsel %vm419, %v977, 0
        %v1384 = vsel %vm419, %v978, 0
        %v1387 = vsel %vm419, %v979, 0
        %v1390 = vsel %vm419, %v980, 0
        %v1393 = vsel %vm419, %v981, 0
        %v1396 = vsel %vm419, %v982, 0
        %v1399 = vsel %vm419, %v983, 0
        %v1402 = vsel %vm419, %v984, 0
        %v1405 = vsel %vm419, %v985, 0
        %v1408 = vsel %vm419, %v986, 0
        %v1411 = vsel %vm419, %v987, 0
        %v1414 = vsel %vm419, %v988, 0
        %v1417 = vsel %vm419, %v989, 0
        %v1420 = vsel %vm419, %v990, 0
        %v1423 = vsel %vm419, %v991, 0
        %v1426 = vsel %vm419, %v992, 0
        %v1429 = vsel %vm419, %v993, 0
        %v1432 = vsel %vm419, %v994, 0
        %v1435 = vsel %vm419, %v995, 0
        %v1438 = vsel %vm419, %v996, 0
        %v1441 = vsel %vm419, %v997, 0
        %v1444 = vsel %vm419, %v998, 0
        %v1447 = vsel %vm419, %v999, 0
        %v1450 = vsel %vm419, %v1000, 0
        %v1453 = vsel %vm419, %v1001, 0
        %v1456 = vsel %vm1130, %v396, 0
        %1458 = vmatprep.subr.mxu0 0.0
        %1459 = vmatpush1.msra.mxu0 %v1456
        %1460 = vmatprep.subr.mxu0 0.0
        %1461 = vmatpush1.msra.mxu0 0.0
        %1462 = vmatprep.subr.mxu0 0.0
        %1463 = vmatpush1.msra.mxu0 0.0
        %1464 = vmatprep.subr.mxu0 0.0
        %1465 = vmatpush1.msra.mxu0 0.0
        %1466 = vmatprep.subr.mxu0 0.0
        %1467 = vmatpush1.msra.mxu0 0.0
        %1468 = vmatprep.subr.mxu0 0.0
        %1469 = vmatpush1.msra.mxu0 0.0
        %1470 = vmatprep.subr.mxu0 0.0
        %1471 = vmatpush1.msra.mxu0 0.0
        %1472 = vmatprep.subr.mxu0 0.0
        %1473 = vmatpush1.msra.mxu0 0.0
        %1474 = vmatprep.subr.mxu0 0.0
        %1475 = vmatpush1.msra.mxu0 0.0
        %1476 = vmatprep.subr.mxu0 0.0
        %1477 = vmatpush1.msra.mxu0 0.0
        %1478 = vmatprep.subr.mxu0 0.0
        %1479 = vmatpush1.msra.mxu0 0.0
        %1480 = vmatprep.subr.mxu0 0.0
        %1481 = vmatpush1.msra.mxu0 0.0
        %1482 = vmatprep.subr.mxu0 0.0
        %1483 = vmatpush1.msra.mxu0 0.0
        %1484 = vmatprep.subr.mxu0 0.0
        %1485 = vmatpush1.msra.mxu0 0.0
        %1486 = vmatprep.subr.mxu0 0.0
        %1487 = vmatpush1.msra.mxu0 0.0
        %1488 = vmatprep.subr.mxu0 0.0
        %1489 = vmatpush1.msra.mxu0 0.0
        %1490 = vmatprep.subr.mxu0 0.0
        %1491 = vmatpush1.msra.mxu0 0.0
        %1492 = vmatprep.subr.mxu0 0.0
        %1493 = vmatpush1.msra.mxu0 0.0
        %1494 = vmatprep.subr.mxu0 0.0
        %1495 = vmatpush1.msra.mxu0 0.0
        %1496 = vmatprep.subr.mxu0 0.0
        %1497 = vmatpush1.msra.mxu0 0.0
        %1498 = vmatprep.subr.mxu0 0.0
        %1499 = vmatpush1.msra.mxu0 0.0
        %1500 = vmatprep.subr.mxu0 0.0
        %1501 = vmatpush1.msra.mxu0 0.0
        %1502 = vmatprep.subr.mxu0 0.0
        %1503 = vmatpush1.msra.mxu0 0.0
        %1504 = vmatprep.subr.mxu0 0.0
        %1505 = vmatpush1.msra.mxu0 0.0
        %1506 = vmatprep.subr.mxu0 0.0
        %1507 = vmatpush1.msra.mxu0 0.0
        %1508 = vmatprep.subr.mxu0 0.0
        %1509 = vmatpush1.msra.mxu0 0.0
        %1510 = vmatprep.subr.mxu0 0.0
        %1511 = vmatpush1.msra.mxu0 0.0
        %1512 = vmatprep.subr.mxu0 0.0
        %1513 = vmatpush1.msra.mxu0 0.0
        %1514 = vmatprep.subr.mxu0 0.0
        %1515 = vmatpush1.msra.mxu0 0.0
        %1516 = vmatprep.subr.mxu0 0.0
        %1517 = vmatpush1.msra.mxu0 0.0
        %1518 = vmatprep.subr.mxu0 0.0
        %1519 = vmatpush1.msra.mxu0 0.0
        %1520 = vmatprep.subr.mxu0 0.0
        %1521 = vmatpush1.msra.mxu0 0.0
        %1522 = vmatprep.mubr.f32.mxu0 0.0
        %1523 = vmatmul.mubr.f32.gmra.mrb[0].mxu0 %v1360
        %v1524 = vpop.f32.mrb[0].mxu0
        %v1525 = vadd.f32 %v1201, %v1524
        %v1526 = vpop.f32.mrb[0].mxu0
        %1527 = vmatprep.mubr.f32.mxu0 0.0
        %1528 = vmatmul.mubr.f32.gmra.mrb[0].mxu0 %v1363
        %v1529 = vpop.f32.mrb[0].mxu0
        %v1530 = vadd.f32 %v1206, %v1529
        %v1531 = vpop.f32.mrb[0].mxu0
        %1532 = vmatprep.mubr.f32.mxu0 0.0
        %1533 = vmatmul.mubr.f32.gmra.mrb[0].mxu0 %v1366
        %v1534 = vpop.f32.mrb[0].mxu0
        %v1535 = vadd.f32 %v1211, %v1534
        %v1536 = vpop.f32.mrb[0].mxu0
        %1537 = vmatprep.mubr.f32.mxu0 0.0
        %1538 = vmatmul.mubr.f32.gmra.mrb[0].mxu0 %v1369
        %v1539 = vpop.f32.mrb[0].mxu0
        %v1540 = vadd.f32 %v1216, %v1539
        %v1541 = vpop.f32.mrb[0].mxu0
        %1542 = vmatprep.mubr.f32.mxu0 0.0
        %1543 = vmatmul.mubr.f32.gmra.mrb[0].mxu0 %v1372
        %v1544 = vpop.f32.mrb[0].mxu0
        %v1545 = vadd.f32 %v1221, %v1544
        %v1546 = vpop.f32.mrb[0].mxu0
        %1547 = vmatprep.mubr.f32.mxu0 0.0
        %1548 = vmatmul.mubr.f32.gmra.mrb[0].mxu0 %v1375
        %v1549 = vpop.f32.mrb[0].mxu0
        %v1550 = vadd.f32 %v1226, %v1549
        %v1551 = vpop.f32.mrb[0].mxu0
        %1552 = vmatprep.mubr.f32.mxu0 0.0
        %1553 = vmatmul.mubr.f32.gmra.mrb[0].mxu0 %v1378
        %v1554 = vpop.f32.mrb[0].mxu0
        %v1555 = vadd.f32 %v1231, %v1554
        %v1556 = vpop.f32.mrb[0].mxu0
        %1557 = vmatprep.mubr.f32.mxu0 0.0
        %1558 = vmatmul.mubr.f32.gmra.mrb[0].mxu0 %v1381
        %v1559 = vpop.f32.mrb[0].mxu0
        %v1560 = vadd.f32 %v1236, %v1559
        %v1561 = vpop.f32.mrb[0].mxu0
        %1562 = vmatprep.mubr.f32.mxu0 0.0
        %1563 = vmatmul.mubr.f32.gmra.mrb[0].mxu0 %v1384
        %v1564 = vpop.f32.mrb[0].mxu0
        %v1565 = vadd.f32 %v1241, %v1564
        %v1566 = vpop.f32.mrb[0].mxu0
        %1567 = vmatprep.mubr.f32.mxu0 0.0
        %1568 = vmatmul.mubr.f32.gmra.mrb[0].mxu0 %v1387
        %v1569 = vpop.f32.mrb[0].mxu0
        %v1570 = vadd.f32 %v1246, %v1569
        %v1571 = vpop.f32.mrb[0].mxu0
        %1572 = vmatprep.mubr.f32.mxu0 0.0
        %1573 = vmatmul.mubr.f32.gmra.mrb[0].mxu0 %v1390
        %v1574 = vpop.f32.mrb[0].mxu0
        %v1575 = vadd.f32 %v1251, %v1574
        %v1576 = vpop.f32.mrb[0].mxu0
        %1577 = vmatprep.mubr.f32.mxu0 0.0
        %1578 = vmatmul.mubr.f32.gmra.mrb[0].mxu0 %v1393
        %v1579 = vpop.f32.mrb[0].mxu0
        %v1580 = vadd.f32 %v1256, %v1579
        %v1581 = vpop.f32.mrb[0].mxu0
        %1582 = vmatprep.mubr.f32.mxu0 0.0
        %1583 = vmatmul.mubr.f32.gmra.mrb[0].mxu0 %v1396
        %v1584 = vpop.f32.mrb[0].mxu0
        %v1585 = vadd.f32 %v1261, %v1584
        %v1586 = vpop.f32.mrb[0].mxu0
        %1587 = vmatprep.mubr.f32.mxu0 0.0
        %1588 = vmatmul.mubr.f32.gmra.mrb[0].mxu0 %v1399
        %v1589 = vpop.f32.mrb[0].mxu0
        %v1590 = vadd.f32 %v1266, %v1589
        %v1591 = vpop.f32.mrb[0].mxu0
        %1592 = vmatprep.mubr.f32.mxu0 0.0
        %1593 = vmatmul.mubr.f32.gmra.mrb[0].mxu0 %v1402
        %v1594 = vpop.f32.mrb[0].mxu0
        %v1595 = vadd.f32 %v1271, %v1594
        %v1596 = vpop.f32.mrb[0].mxu0
        %1597 = vmatprep.mubr.f32.mxu0 0.0
        %1598 = vmatmul.mubr.f32.gmra.mrb[0].mxu0 %v1405
        %v1599 = vpop.f32.mrb[0].mxu0
        %v1600 = vadd.f32 %v1276, %v1599
        %v1601 = vpop.f32.mrb[0].mxu0
        %1602 = vmatprep.mubr.f32.mxu0 0.0
        %1603 = vmatmul.mubr.f32.gmra.mrb[0].mxu0 %v1408
        %v1604 = vpop.f32.mrb[0].mxu0
        %v1605 = vadd.f32 %v1281, %v1604
        %v1606 = vpop.f32.mrb[0].mxu0
        %1607 = vmatprep.mubr.f32.mxu0 0.0
        %1608 = vmatmul.mubr.f32.gmra.mrb[0].mxu0 %v1411
        %v1609 = vpop.f32.mrb[0].mxu0
        %v1610 = vadd.f32 %v1286, %v1609
        %v1611 = vpop.f32.mrb[0].mxu0
        %1612 = vmatprep.mubr.f32.mxu0 0.0
        %1613 = vmatmul.mubr.f32.gmra.mrb[0].mxu0 %v1414
        %v1614 = vpop.f32.mrb[0].mxu0
        %v1615 = vadd.f32 %v1291, %v1614
        %v1616 = vpop.f32.mrb[0].mxu0
        %1617 = vmatprep.mubr.f32.mxu0 0.0
        %1618 = vmatmul.mubr.f32.gmra.mrb[0].mxu0 %v1417
        %v1619 = vpop.f32.mrb[0].mxu0
        %v1620 = vadd.f32 %v1296, %v1619
        %v1621 = vpop.f32.mrb[0].mxu0
        %1622 = vmatprep.mubr.f32.mxu0 0.0
        %1623 = vmatmul.mubr.f32.gmra.mrb[0].mxu0 %v1420
        %v1624 = vpop.f32.mrb[0].mxu0
        %v1625 = vadd.f32 %v1301, %v1624
        %v1626 = vpop.f32.mrb[0].mxu0
        %1627 = vmatprep.mubr.f32.mxu0 0.0
        %1628 = vmatmul.mubr.f32.gmra.mrb[0].mxu0 %v1423
        %v1629 = vpop.f32.mrb[0].mxu0
        %v1630 = vadd.f32 %v1306, %v1629
        %v1631 = vpop.f32.mrb[0].mxu0
        %1632 = vmatprep.mubr.f32.mxu0 0.0
        %1633 = vmatmul.mubr.f32.gmra.mrb[0].mxu0 %v1426
        %v1634 = vpop.f32.mrb[0].mxu0
        %v1635 = vadd.f32 %v1311, %v1634
        %v1636 = vpop.f32.mrb[0].mxu0
        %1637 = vmatprep.mubr.f32.mxu0 0.0
        %1638 = vmatmul.mubr.f32.gmra.mrb[0].mxu0 %v1429
        %v1639 = vpop.f32.mrb[0].mxu0
        %v1640 = vadd.f32 %v1316, %v1639
        %v1641 = vpop.f32.mrb[0].mxu0
        %1642 = vmatprep.mubr.f32.mxu0 0.0
        %1643 = vmatmul.mubr.f32.gmra.mrb[0].mxu0 %v1432
        %v1644 = vpop.f32.mrb[0].mxu0
        %v1645 = vadd.f32 %v1321, %v1644
        %v1646 = vpop.f32.mrb[0].mxu0
        %1647 = vmatprep.mubr.f32.mxu0 0.0
        %1648 = vmatmul.mubr.f32.gmra.mrb[0].mxu0 %v1435
        %v1649 = vpop.f32.mrb[0].mxu0
        %v1650 = vadd.f32 %v1326, %v1649
        %v1651 = vpop.f32.mrb[0].mxu0
        %1652 = vmatprep.mubr.f32.mxu0 0.0
        %1653 = vmatmul.mubr.f32.gmra.mrb[0].mxu0 %v1438
        %v1654 = vpop.f32.mrb[0].mxu0
        %v1655 = vadd.f32 %v1331, %v1654
        %v1656 = vpop.f32.mrb[0].mxu0
        %1657 = vmatprep.mubr.f32.mxu0 0.0
        %1658 = vmatmul.mubr.f32.gmra.mrb[0].mxu0 %v1441
        %v1659 = vpop.f32.mrb[0].mxu0
        %v1660 = vadd.f32 %v1336, %v1659
        %v1661 = vpop.f32.mrb[0].mxu0
        %1662 = vmatprep.mubr.f32.mxu0 0.0
        %1663 = vmatmul.mubr.f32.gmra.mrb[0].mxu0 %v1444
        %v1664 = vpop.f32.mrb[0].mxu0
        %v1665 = vadd.f32 %v1341, %v1664
        %v1666 = vpop.f32.mrb[0].mxu0
        %1667 = vmatprep.mubr.f32.mxu0 0.0
        %1668 = vmatmul.mubr.f32.gmra.mrb[0].mxu0 %v1447
        %v1669 = vpop.f32.mrb[0].mxu0
        %v1670 = vadd.f32 %v1346, %v1669
        %v1671 = vpop.f32.mrb[0].mxu0
        %1672 = vmatprep.mubr.f32.mxu0 0.0
        %1673 = vmatmul.mubr.f32.gmra.mrb[0].mxu0 %v1450
        %v1674 = vpop.f32.mrb[0].mxu0
        %v1675 = vadd.f32 %v1351, %v1674
        %v1676 = vpop.f32.mrb[0].mxu0
        %1677 = vmatprep.mubr.f32.mxu0 0.0
        %1678 = vmatmul.mubr.f32.gmra.mrb[0].mxu0 %v1453
        %v1679 = vpop.f32.mrb[0].mxu0
        %v1680 = vadd.f32 %v1356, %v1679
        %v1681 = vpop.f32.mrb[0].mxu0
        %1682 = vdwg.mxu0
        %v1683 = vld [vmem:[#allocation2 + $0x4] sm:$0xff]
        %v1684 = vld [vmem:[#allocation2 + $0xc] sm:$0xff]
        %v1685 = vld [vmem:[#allocation2 + $0x1c] sm:$0xff]
        %v1686 = vld [vmem:[#allocation2 + $0x24] sm:$0xff]
        %v1687 = vld [vmem:[#allocation2 + $0x34] sm:$0xff]
        %v1688 = vld [vmem:[#allocation2 + $0x3c] sm:$0xff]
        %v1689 = vld [vmem:[#allocation2 + $0x4c] sm:$0xff]
        %v1690 = vld [vmem:[#allocation2 + $0x54] sm:$0xff]
        %v1691 = vld [vmem:[#allocation2 + $0x64] sm:$0xff]
        %v1692 = vld [vmem:[#allocation2 + $0x6c] sm:$0xff]
        %v1693 = vld [vmem:[#allocation2 + $0x7c] sm:$0xff]
        %v1694 = vld [vmem:[#allocation2 + $0x84] sm:$0xff]
        %v1695 = vld [vmem:[#allocation2 + $0x94] sm:$0xff]
        %v1696 = vld [vmem:[#allocation2 + $0x9c] sm:$0xff]
        %v1697 = vld [vmem:[#allocation2 + $0xac] sm:$0xff]
        %v1698 = vld [vmem:[#allocation2 + $0xb4] sm:$0xff]
        %v1699 = vld [vmem:[#allocation2 + $0xc4] sm:$0xff]
        %v1700 = vld [vmem:[#allocation2 + $0xcc] sm:$0xff]
        %v1701 = vld [vmem:[#allocation2 + $0xdc] sm:$0xff]
        %v1702 = vld [vmem:[#allocation2 + $0xe4] sm:$0xff]
        %v1703 = vld [vmem:[#allocation2 + $0xf4] sm:$0xff]
        %v1704 = vld [vmem:[#allocation2 + $0xfc] sm:$0xff]
        %v1705 = vld [vmem:[#allocation2 + $0x10c] sm:$0xff]
        %v1706 = vld [vmem:[#allocation2 + $0x114] sm:$0xff]
        %v1707 = vld [vmem:[#allocation2 + $0x124] sm:$0xff]
        %v1708 = vld [vmem:[#allocation2 + $0x12c] sm:$0xff]
        %v1709 = vld [vmem:[#allocation2 + $0x13c] sm:$0xff]
        %v1710 = vld [vmem:[#allocation2 + $0x144] sm:$0xff]
        %v1711 = vld [vmem:[#allocation2 + $0x154] sm:$0xff]
        %v1712 = vld [vmem:[#allocation2 + $0x15c] sm:$0xff]
        %v1713 = vld [vmem:[#allocation2 + $0x16c] sm:$0xff]
        %v1714 = vld [vmem:[#allocation2 + $0x174] sm:$0xff]
        %v1716 = vsel %vm419, %v1683, 0
        %v1719 = vsel %vm419, %v1684, 0
        %v1722 = vsel %vm419, %v1685, 0
        %v1725 = vsel %vm419, %v1686, 0
        %v1728 = vsel %vm419, %v1687, 0
        %v1731 = vsel %vm419, %v1688, 0
        %v1734 = vsel %vm419, %v1689, 0
        %v1737 = vsel %vm419, %v1690, 0
        %v1740 = vsel %vm419, %v1691, 0
        %v1743 = vsel %vm419, %v1692, 0
        %v1746 = vsel %vm419, %v1693, 0
        %v1749 = vsel %vm419, %v1694, 0
        %v1752 = vsel %vm419, %v1695, 0
        %v1755 = vsel %vm419, %v1696, 0
        %v1758 = vsel %vm419, %v1697, 0
        %v1761 = vsel %vm419, %v1698, 0
        %v1764 = vsel %vm419, %v1699, 0
        %v1767 = vsel %vm419, %v1700, 0
        %v1770 = vsel %vm419, %v1701, 0
        %v1773 = vsel %vm419, %v1702, 0
        %v1776 = vsel %vm419, %v1703, 0
        %v1779 = vsel %vm419, %v1704, 0
        %v1782 = vsel %vm419, %v1705, 0
        %v1785 = vsel %vm419, %v1706, 0
        %v1788 = vsel %vm419, %v1707, 0
        %v1791 = vsel %vm419, %v1708, 0
        %v1794 = vsel %vm419, %v1709, 0
        %v1797 = vsel %vm419, %v1710, 0
        %v1800 = vsel %vm419, %v1711, 0
        %v1803 = vsel %vm419, %v1712, 0
        %v1806 = vsel %vm419, %v1713, 0
        %v1809 = vsel %vm419, %v1714, 0
        %v1812 = vsel %vm1130, %v400, 0
        %1814 = vmatprep.subr.mxu0 0.0
        %1815 = vmatpush1.msra.mxu0 %v1812
        %1816 = vmatprep.subr.mxu0 0.0
        %1817 = vmatpush1.msra.mxu0 0.0
        %1818 = vmatprep.subr.mxu0 0.0
        %1819 = vmatpush1.msra.mxu0 0.0
        %1820 = vmatprep.subr.mxu0 0.0
        %1821 = vmatpush1.msra.mxu0 0.0
        %1822 = vmatprep.subr.mxu0 0.0
        %1823 = vmatpush1.msra.mxu0 0.0
        %1824 = vmatprep.subr.mxu0 0.0
        %1825 = vmatpush1.msra.mxu0 0.0
        %1826 = vmatprep.subr.mxu0 0.0
        %1827 = vmatpush1.msra.mxu0 0.0
        %1828 = vmatprep.subr.mxu0 0.0
        %1829 = vmatpush1.msra.mxu0 0.0
        %1830 = vmatprep.subr.mxu0 0.0
        %1831 = vmatpush1.msra.mxu0 0.0
        %1832 = vmatprep.subr.mxu0 0.0
        %1833 = vmatpush1.msra.mxu0 0.0
        %1834 = vmatprep.subr.mxu0 0.0
        %1835 = vmatpush1.msra.mxu0 0.0
        %1836 = vmatprep.subr.mxu0 0.0
        %1837 = vmatpush1.msra.mxu0 0.0
        %1838 = vmatprep.subr.mxu0 0.0
        %1839 = vmatpush1.msra.mxu0 0.0
        %1840 = vmatprep.subr.mxu0 0.0
        %1841 = vmatpush1.msra.mxu0 0.0
        %1842 = vmatprep.subr.mxu0 0.0
        %1843 = vmatpush1.msra.mxu0 0.0
        %1844 = vmatprep.subr.mxu0 0.0
        %1845 = vmatpush1.msra.mxu0 0.0
        %1846 = vmatprep.subr.mxu0 0.0
        %1847 = vmatpush1.msra.mxu0 0.0
        %1848 = vmatprep.subr.mxu0 0.0
        %1849 = vmatpush1.msra.mxu0 0.0
        %1850 = vmatprep.subr.mxu0 0.0
        %1851 = vmatpush1.msra.mxu0 0.0
        %1852 = vmatprep.subr.mxu0 0.0
        %1853 = vmatpush1.msra.mxu0 0.0
        %1854 = vmatprep.subr.mxu0 0.0
        %1855 = vmatpush1.msra.mxu0 0.0
        %1856 = vmatprep.subr.mxu0 0.0
        %1857 = vmatpush1.msra.mxu0 0.0
        %1858 = vmatprep.subr.mxu0 0.0
        %1859 = vmatpush1.msra.mxu0 0.0
        %1860 = vmatprep.subr.mxu0 0.0
        %1861 = vmatpush1.msra.mxu0 0.0
        %1862 = vmatprep.subr.mxu0 0.0
        %1863 = vmatpush1.msra.mxu0 0.0
        %1864 = vmatprep.subr.mxu0 0.0
        %1865 = vmatpush1.msra.mxu0 0.0
        %1866 = vmatprep.subr.mxu0 0.0
        %1867 = vmatpush1.msra.mxu0 0.0
        %1868 = vmatprep.subr.mxu0 0.0
        %1869 = vmatpush1.msra.mxu0 0.0
        %1870 = vmatprep.subr.mxu0 0.0
        %1871 = vmatpush1.msra.mxu0 0.0
        %1872 = vmatprep.subr.mxu0 0.0
        %1873 = vmatpush1.msra.mxu0 0.0
        %1874 = vmatprep.subr.mxu0 0.0
        %1875 = vmatpush1.msra.mxu0 0.0
        %1876 = vmatprep.subr.mxu0 0.0
        %1877 = vmatpush1.msra.mxu0 0.0
        %1878 = vmatprep.mubr.f32.mxu0 0.0
        %1879 = vmatmul.mubr.f32.gmra.mrb[0].mxu0 %v1716
        %v1880 = vpop.f32.mrb[0].mxu0
        %v1881 = vadd.f32 0.0, %v1880
        %v1882 = vpop.f32.mrb[0].mxu0
        %1883 = vmatprep.mubr.f32.mxu0 0.0
        %1884 = vmatmul.mubr.f32.gmra.mrb[0].mxu0 %v1719
        %v1885 = vpop.f32.mrb[0].mxu0
        %v1886 = vadd.f32 0.0, %v1885
        %v1887 = vpop.f32.mrb[0].mxu0
        %1888 = vmatprep.mubr.f32.mxu0 0.0
        %1889 = vmatmul.mubr.f32.gmra.mrb[0].mxu0 %v1722
        %v1890 = vpop.f32.mrb[0].mxu0
        %v1891 = vadd.f32 0.0, %v1890
        %v1892 = vpop.f32.mrb[0].mxu0
        %1893 = vmatprep.mubr.f32.mxu0 0.0
        %1894 = vmatmul.mubr.f32.gmra.mrb[0].mxu0 %v1725
        %v1895 = vpop.f32.mrb[0].mxu0
        %v1896 = vadd.f32 0.0, %v1895
        %v1897 = vpop.f32.mrb[0].mxu0
        %1898 = vmatprep.mubr.f32.mxu0 0.0
        %1899 = vmatmul.mubr.f32.gmra.mrb[0].mxu0 %v1728
        %v1900 = vpop.f32.mrb[0].mxu0
        %v1901 = vadd.f32 0.0, %v1900
        %v1902 = vpop.f32.mrb[0].mxu0
        %1903 = vmatprep.mubr.f32.mxu0 0.0
        %1904 = vmatmul.mubr.f32.gmra.mrb[0].mxu0 %v1731
        %v1905 = vpop.f32.mrb[0].mxu0
        %v1906 = vadd.f32 0.0, %v1905
        %v1907 = vpop.f32.mrb[0].mxu0
        %1908 = vmatprep.mubr.f32.mxu0 0.0
        %1909 = vmatmul.mubr.f32.gmra.mrb[0].mxu0 %v1734
        %v1910 = vpop.f32.mrb[0].mxu0
        %v1911 = vadd.f32 0.0, %v1910
        %v1912 = vpop.f32.mrb[0].mxu0
        %1913 = vmatprep.mubr.f32.mxu0 0.0
        %1914 = vmatmul.mubr.f32.gmra.mrb[0].mxu0 %v1737
        %v1915 = vpop.f32.mrb[0].mxu0
        %v1916 = vadd.f32 0.0, %v1915
        %v1917 = vpop.f32.mrb[0].mxu0
        %1918 = vmatprep.mubr.f32.mxu0 0.0
        %1919 = vmatmul.mubr.f32.gmra.mrb[0].mxu0 %v1740
        %v1920 = vpop.f32.mrb[0].mxu0
        %v1921 = vadd.f32 0.0, %v1920
        %v1922 = vpop.f32.mrb[0].mxu0
        %1923 = vmatprep.mubr.f32.mxu0 0.0
        %1924 = vmatmul.mubr.f32.gmra.mrb[0].mxu0 %v1743
        %v1925 = vpop.f32.mrb[0].mxu0
        %v1926 = vadd.f32 0.0, %v1925
        %v1927 = vpop.f32.mrb[0].mxu0
        %1928 = vmatprep.mubr.f32.mxu0 0.0
        %1929 = vmatmul.mubr.f32.gmra.mrb[0].mxu0 %v1746
        %v1930 = vpop.f32.mrb[0].mxu0
        %v1931 = vadd.f32 0.0, %v1930
        %v1932 = vpop.f32.mrb[0].mxu0
        %1933 = vmatprep.mubr.f32.mxu0 0.0
        %1934 = vmatmul.mubr.f32.gmra.mrb[0].mxu0 %v1749
        %v1935 = vpop.f32.mrb[0].mxu0
        %v1936 = vadd.f32 0.0, %v1935
        %v1937 = vpop.f32.mrb[0].mxu0
        %1938 = vmatprep.mubr.f32.mxu0 0.0
        %1939 = vmatmul.mubr.f32.gmra.mrb[0].mxu0 %v1752
        %v1940 = vpop.f32.mrb[0].mxu0
        %v1941 = vadd.f32 0.0, %v1940
        %v1942 = vpop.f32.mrb[0].mxu0
        %1943 = vmatprep.mubr.f32.mxu0 0.0
        %1944 = vmatmul.mubr.f32.gmra.mrb[0].mxu0 %v1755
        %v1945 = vpop.f32.mrb[0].mxu0
        %v1946 = vadd.f32 0.0, %v1945
        %v1947 = vpop.f32.mrb[0].mxu0
        %1948 = vmatprep.mubr.f32.mxu0 0.0
        %1949 = vmatmul.mubr.f32.gmra.mrb[0].mxu0 %v1758
        %v1950 = vpop.f32.mrb[0].mxu0
        %v1951 = vadd.f32 0.0, %v1950
        %v1952 = vpop.f32.mrb[0].mxu0
        %1953 = vmatprep.mubr.f32.mxu0 0.0
        %1954 = vmatmul.mubr.f32.gmra.mrb[0].mxu0 %v1761
        %v1955 = vpop.f32.mrb[0].mxu0
        %v1956 = vadd.f32 0.0, %v1955
        %v1957 = vpop.f32.mrb[0].mxu0
        %1958 = vmatprep.mubr.f32.mxu0 0.0
        %1959 = vmatmul.mubr.f32.gmra.mrb[0].mxu0 %v1764
        %v1960 = vpop.f32.mrb[0].mxu0
        %v1961 = vadd.f32 0.0, %v1960
        %v1962 = vpop.f32.mrb[0].mxu0
        %1963 = vmatprep.mubr.f32.mxu0 0.0
        %1964 = vmatmul.mubr.f32.gmra.mrb[0].mxu0 %v1767
        %v1965 = vpop.f32.mrb[0].mxu0
        %v1966 = vadd.f32 0.0, %v1965
        %v1967 = vpop.f32.mrb[0].mxu0
        %1968 = vmatprep.mubr.f32.mxu0 0.0
        %1969 = vmatmul.mubr.f32.gmra.mrb[0].mxu0 %v1770
        %v1970 = vpop.f32.mrb[0].mxu0
        %v1971 = vadd.f32 0.0, %v1970
        %v1972 = vpop.f32.mrb[0].mxu0
        %1973 = vmatprep.mubr.f32.mxu0 0.0
        %1974 = vmatmul.mubr.f32.gmra.mrb[0].mxu0 %v1773
        %v1975 = vpop.f32.mrb[0].mxu0
        %v1976 = vadd.f32 0.0, %v1975
        %v1977 = vpop.f32.mrb[0].mxu0
        %1978 = vmatprep.mubr.f32.mxu0 0.0
        %1979 = vmatmul.mubr.f32.gmra.mrb[0].mxu0 %v1776
        %v1980 = vpop.f32.mrb[0].mxu0
        %v1981 = vadd.f32 0.0, %v1980
        %v1982 = vpop.f32.mrb[0].mxu0
        %1983 = vmatprep.mubr.f32.mxu0 0.0
        %1984 = vmatmul.mubr.f32.gmra.mrb[0].mxu0 %v1779
        %v1985 = vpop.f32.mrb[0].mxu0
        %v1986 = vadd.f32 0.0, %v1985
        %v1987 = vpop.f32.mrb[0].mxu0
        %1988 = vmatprep.mubr.f32.mxu0 0.0
        %1989 = vmatmul.mubr.f32.gmra.mrb[0].mxu0 %v1782
        %v1990 = vpop.f32.mrb[0].mxu0
        %v1991 = vadd.f32 0.0, %v1990
        %v1992 = vpop.f32.mrb[0].mxu0
        %1993 = vmatprep.mubr.f32.mxu0 0.0
        %1994 = vmatmul.mubr.f32.gmra.mrb[0].mxu0 %v1785
        %v1995 = vpop.f32.mrb[0].mxu0
        %v1996 = vadd.f32 0.0, %v1995
        %v1997 = vpop.f32.mrb[0].mxu0
        %1998 = vmatprep.mubr.f32.mxu0 0.0
        %1999 = vmatmul.mubr.f32.gmra.mrb[0].mxu0 %v1788
        %v2000 = vpop.f32.mrb[0].mxu0
        %v2001 = vadd.f32 0.0, %v2000
        %v2002 = vpop.f32.mrb[0].mxu0
        %2003 = vmatprep.mubr.f32.mxu0 0.0
        %2004 = vmatmul.mubr.f32.gmra.mrb[0].mxu0 %v1791
        %v2005 = vpop.f32.mrb[0].mxu0
        %v2006 = vadd.f32 0.0, %v2005
        %v2007 = vpop.f32.mrb[0].mxu0
        %2008 = vmatprep.mubr.f32.mxu0 0.0
        %2009 = vmatmul.mubr.f32.gmra.mrb[0].mxu0 %v1794
        %v2010 = vpop.f32.mrb[0].mxu0
        %v2011 = vadd.f32 0.0, %v2010
        %v2012 = vpop.f32.mrb[0].mxu0
        %2013 = vmatprep.mubr.f32.mxu0 0.0
        %2014 = vmatmul.mubr.f32.gmra.mrb[0].mxu0 %v1797
        %v2015 = vpop.f32.mrb[0].mxu0
        %v2016 = vadd.f32 0.0, %v2015
        %v2017 = vpop.f32.mrb[0].mxu0
        %2018 = vmatprep.mubr.f32.mxu0 0.0
        %2019 = vmatmul.mubr.f32.gmra.mrb[0].mxu0 %v1800
        %v2020 = vpop.f32.mrb[0].mxu0
        %v2021 = vadd.f32 0.0, %v2020
        %v2022 = vpop.f32.mrb[0].mxu0
        %2023 = vmatprep.mubr.f32.mxu0 0.0
        %2024 = vmatmul.mubr.f32.gmra.mrb[0].mxu0 %v1803
        %v2025 = vpop.f32.mrb[0].mxu0
        %v2026 = vadd.f32 0.0, %v2025
        %v2027 = vpop.f32.mrb[0].mxu0
        %2028 = vmatprep.mubr.f32.mxu0 0.0
        %2029 = vmatmul.mubr.f32.gmra.mrb[0].mxu0 %v1806
        %v2030 = vpop.f32.mrb[0].mxu0
        %v2031 = vadd.f32 0.0, %v2030
        %v2032 = vpop.f32.mrb[0].mxu0
        %2033 = vmatprep.mubr.f32.mxu0 0.0
        %2034 = vmatmul.mubr.f32.gmra.mrb[0].mxu0 %v1809
        %v2035 = vpop.f32.mrb[0].mxu0
        %v2036 = vadd.f32 0.0, %v2035
        %v2037 = vpop.f32.mrb[0].mxu0
        %2038 = vdwg.mxu0
        %v2039 = vadd.f32 %v1525, %v1881
        %v2040 = vadd.f32 %v1530, %v1886
        %v2041 = vadd.f32 %v1535, %v1891
        %v2042 = vadd.f32 %v1540, %v1896
        %v2043 = vadd.f32 %v1545, %v1901
        %v2044 = vadd.f32 %v1550, %v1906
        %v2045 = vadd.f32 %v1555, %v1911
        %v2046 = vadd.f32 %v1560, %v1916
        %v2047 = vadd.f32 %v1565, %v1921
        %v2048 = vadd.f32 %v1570, %v1926
        %v2049 = vadd.f32 %v1575, %v1931
        %v2050 = vadd.f32 %v1580, %v1936
        %v2051 = vadd.f32 %v1585, %v1941
        %v2052 = vadd.f32 %v1590, %v1946
        %v2053 = vadd.f32 %v1595, %v1951
        %v2054 = vadd.f32 %v1600, %v1956
        %v2055 = vadd.f32 %v1605, %v1961
        %v2056 = vadd.f32 %v1610, %v1966
        %v2057 = vadd.f32 %v1615, %v1971
        %v2058 = vadd.f32 %v1620, %v1976
        %v2059 = vadd.f32 %v1625, %v1981
        %v2060 = vadd.f32 %v1630, %v1986
        %v2061 = vadd.f32 %v1635, %v1991
        %v2062 = vadd.f32 %v1640, %v1996
        %v2063 = vadd.f32 %v1645, %v2001
        %v2064 = vadd.f32 %v1650, %v2006
        %v2065 = vadd.f32 %v1655, %v2011
        %v2066 = vadd.f32 %v1660, %v2016
        %v2067 = vadd.f32 %v1665, %v2021
        %v2068 = vadd.f32 %v1670, %v2026
        %v2069 = vadd.f32 %v1675, %v2031
        %v2070 = vadd.f32 %v1680, %v2036
        %v2071 = vld [vmem:[%s937] sm:$0xff]
        %v2072 = vld [vmem:[%s937 + $0x8] sm:$0xff]
        %v2073 = vld [vmem:[%s937 + $0x18] sm:$0xff]
        %v2074 = vld [vmem:[%s937 + $0x20] sm:$0xff]
        %v2075 = vld [vmem:[%s937 + $0x30] sm:$0xff]
        %v2076 = vld [vmem:[%s937 + $0x38] sm:$0xff]
        %v2077 = vld [vmem:[%s937 + $0x48] sm:$0xff]
        %v2078 = vld [vmem:[%s937 + $0x50] sm:$0xff]
        %v2079 = vld [vmem:[%s937 + $0x60] sm:$0xff]
        %v2080 = vld [vmem:[%s937 + $0x68] sm:$0xff]
        %v2081 = vld [vmem:[%s937 + $0x78] sm:$0xff]
        %v2082 = vld [vmem:[%s937 + $0x80] sm:$0xff]
        %v2083 = vld [vmem:[%s937 + $0x90] sm:$0xff]
        %v2084 = vld [vmem:[%s937 + $0x98] sm:$0xff]
        %v2085 = vld [vmem:[%s937 + $0xa8] sm:$0xff]
        %v2086 = vld [vmem:[%s937 + $0xb0] sm:$0xff]
        %v2087 = vld [vmem:[%s937 + $0xc0] sm:$0xff]
        %v2088 = vld [vmem:[%s937 + $0xc8] sm:$0xff]
        %v2089 = vld [vmem:[%s937 + $0xd8] sm:$0xff]
        %v2090 = vld [vmem:[%s937 + $0xe0] sm:$0xff]
        %v2091 = vld [vmem:[%s937 + $0xf0] sm:$0xff]
        %v2092 = vld [vmem:[%s937 + $0xf8] sm:$0xff]
        %v2093 = vld [vmem:[%s937 + $0x108] sm:$0xff]
        %v2094 = vld [vmem:[%s937 + $0x110] sm:$0xff]
        %v2095 = vld [vmem:[%s937 + $0x120] sm:$0xff]
        %v2096 = vld [vmem:[%s937 + $0x128] sm:$0xff]
        %v2097 = vld [vmem:[%s937 + $0x138] sm:$0xff]
        %v2098 = vld [vmem:[%s937 + $0x140] sm:$0xff]
        %v2099 = vld [vmem:[%s937 + $0x150] sm:$0xff]
        %v2100 = vld [vmem:[%s937 + $0x158] sm:$0xff]
        %v2101 = vld [vmem:[%s937 + $0x168] sm:$0xff]
        %v2102 = vld [vmem:[%s937 + $0x170] sm:$0xff]
        %v2104 = vsel %vm419, %v2071, 0
        %v2107 = vsel %vm419, %v2072, 0
        %v2110 = vsel %vm419, %v2073, 0
        %v2113 = vsel %vm419, %v2074, 0
        %v2116 = vsel %vm419, %v2075, 0
        %v2119 = vsel %vm419, %v2076, 0
        %v2122 = vsel %vm419, %v2077, 0
        %v2125 = vsel %vm419, %v2078, 0
        %v2128 = vsel %vm419, %v2079, 0
        %v2131 = vsel %vm419, %v2080, 0
        %v2134 = vsel %vm419, %v2081, 0
        %v2137 = vsel %vm419, %v2082, 0
        %v2140 = vsel %vm419, %v2083, 0
        %v2143 = vsel %vm419, %v2084, 0
        %v2146 = vsel %vm419, %v2085, 0
        %v2149 = vsel %vm419, %v2086, 0
        %v2152 = vsel %vm419, %v2087, 0
        %v2155 = vsel %vm419, %v2088, 0
        %v2158 = vsel %vm419, %v2089, 0
        %v2161 = vsel %vm419, %v2090, 0
        %v2164 = vsel %vm419, %v2091, 0
        %v2167 = vsel %vm419, %v2092, 0
        %v2170 = vsel %vm419, %v2093, 0
        %v2173 = vsel %vm419, %v2094, 0
        %v2176 = vsel %vm419, %v2095, 0
        %v2179 = vsel %vm419, %v2096, 0
        %v2182 = vsel %vm419, %v2097, 0
        %v2185 = vsel %vm419, %v2098, 0
        %v2188 = vsel %vm419, %v2099, 0
        %v2191 = vsel %vm419, %v2100, 0
        %v2194 = vsel %vm419, %v2101, 0
        %v2197 = vsel %vm419, %v2102, 0
        %v2200 = vsel %vm1130, %v402, 0
        %2202 = vmatprep.subr.mxu0 0.0
        %2203 = vmatpush1.msra.mxu0 %v2200
        %2204 = vmatprep.subr.mxu0 0.0
        %2205 = vmatpush1.msra.mxu0 0.0
        %2206 = vmatprep.subr.mxu0 0.0
        %2207 = vmatpush1.msra.mxu0 0.0
        %2208 = vmatprep.subr.mxu0 0.0
        %2209 = vmatpush1.msra.mxu0 0.0
        %2210 = vmatprep.subr.mxu0 0.0
        %2211 = vmatpush1.msra.mxu0 0.0
        %2212 = vmatprep.subr.mxu0 0.0
        %2213 = vmatpush1.msra.mxu0 0.0
        %2214 = vmatprep.subr.mxu0 0.0
        %2215 = vmatpush1.msra.mxu0 0.0
        %2216 = vmatprep.subr.mxu0 0.0
        %2217 = vmatpush1.msra.mxu0 0.0
        %2218 = vmatprep.subr.mxu0 0.0
        %2219 = vmatpush1.msra.mxu0 0.0
        %2220 = vmatprep.subr.mxu0 0.0
        %2221 = vmatpush1.msra.mxu0 0.0
        %2222 = vmatprep.subr.mxu0 0.0
        %2223 = vmatpush1.msra.mxu0 0.0
        %2224 = vmatprep.subr.mxu0 0.0
        %2225 = vmatpush1.msra.mxu0 0.0
        %2226 = vmatprep.subr.mxu0 0.0
        %2227 = vmatpush1.msra.mxu0 0.0
        %2228 = vmatprep.subr.mxu0 0.0
        %2229 = vmatpush1.msra.mxu0 0.0
        %2230 = vmatprep.subr.mxu0 0.0
        %2231 = vmatpush1.msra.mxu0 0.0
        %2232 = vmatprep.subr.mxu0 0.0
        %2233 = vmatpush1.msra.mxu0 0.0
        %2234 = vmatprep.subr.mxu0 0.0
        %2235 = vmatpush1.msra.mxu0 0.0
        %2236 = vmatprep.subr.mxu0 0.0
        %2237 = vmatpush1.msra.mxu0 0.0
        %2238 = vmatprep.subr.mxu0 0.0
        %2239 = vmatpush1.msra.mxu0 0.0
        %2240 = vmatprep.subr.mxu0 0.0
        %2241 = vmatpush1.msra.mxu0 0.0
        %2242 = vmatprep.subr.mxu0 0.0
        %2243 = vmatpush1.msra.mxu0 0.0
        %2244 = vmatprep.subr.mxu0 0.0
        %2245 = vmatpush1.msra.mxu0 0.0
        %2246 = vmatprep.subr.mxu0 0.0
        %2247 = vmatpush1.msra.mxu0 0.0
        %2248 = vmatprep.subr.mxu0 0.0
        %2249 = vmatpush1.msra.mxu0 0.0
        %2250 = vmatprep.subr.mxu0 0.0
        %2251 = vmatpush1.msra.mxu0 0.0
        %2252 = vmatprep.subr.mxu0 0.0
        %2253 = vmatpush1.msra.mxu0 0.0
        %2254 = vmatprep.subr.mxu0 0.0
        %2255 = vmatpush1.msra.mxu0 0.0
        %2256 = vmatprep.subr.mxu0 0.0
        %2257 = vmatpush1.msra.mxu0 0.0
        %2258 = vmatprep.subr.mxu0 0.0
        %2259 = vmatpush1.msra.mxu0 0.0
        %2260 = vmatprep.subr.mxu0 0.0
        %2261 = vmatpush1.msra.mxu0 0.0
        %2262 = vmatprep.subr.mxu0 0.0
        %2263 = vmatpush1.msra.mxu0 0.0
        %2264 = vmatprep.subr.mxu0 0.0
        %2265 = vmatpush1.msra.mxu0 0.0
        %2266 = vmatprep.mubr.f32.mxu0 0.0
        %2267 = vmatmul.mubr.f32.gmra.mrb[0].mxu0 %v2104
        %v2268 = vpop.f32.mrb[0].mxu0
        %v2269 = vadd.f32 0.0, %v2268
        %v2270 = vpop.f32.mrb[0].mxu0
        %2271 = vmatprep.mubr.f32.mxu0 0.0
        %2272 = vmatmul.mubr.f32.gmra.mrb[0].mxu0 %v2107
        %v2273 = vpop.f32.mrb[0].mxu0
        %v2274 = vadd.f32 0.0, %v2273
        %v2275 = vpop.f32.mrb[0].mxu0
        %2276 = vmatprep.mubr.f32.mxu0 0.0
        %2277 = vmatmul.mubr.f32.gmra.mrb[0].mxu0 %v2110
        %v2278 = vpop.f32.mrb[0].mxu0
        %v2279 = vadd.f32 0.0, %v2278
        %v2280 = vpop.f32.mrb[0].mxu0
        %2281 = vmatprep.mubr.f32.mxu0 0.0
        %2282 = vmatmul.mubr.f32.gmra.mrb[0].mxu0 %v2113
        %v2283 = vpop.f32.mrb[0].mxu0
        %v2284 = vadd.f32 0.0, %v2283
        %v2285 = vpop.f32.mrb[0].mxu0
        %2286 = vmatprep.mubr.f32.mxu0 0.0
        %2287 = vmatmul.mubr.f32.gmra.mrb[0].mxu0 %v2116
        %v2288 = vpop.f32.mrb[0].mxu0
        %v2289 = vadd.f32 0.0, %v2288
        %v2290 = vpop.f32.mrb[0].mxu0
        %2291 = vmatprep.mubr.f32.mxu0 0.0
        %2292 = vmatmul.mubr.f32.gmra.mrb[0].mxu0 %v2119
        %v2293 = vpop.f32.mrb[0].mxu0
        %v2294 = vadd.f32 0.0, %v2293
        %v2295 = vpop.f32.mrb[0].mxu0
        %2296 = vmatprep.mubr.f32.mxu0 0.0
        %2297 = vmatmul.mubr.f32.gmra.mrb[0].mxu0 %v2122
        %v2298 = vpop.f32.mrb[0].mxu0
        %v2299 = vadd.f32 0.0, %v2298
        %v2300 = vpop.f32.mrb[0].mxu0
        %2301 = vmatprep.mubr.f32.mxu0 0.0
        %2302 = vmatmul.mubr.f32.gmra.mrb[0].mxu0 %v2125
        %v2303 = vpop.f32.mrb[0].mxu0
        %v2304 = vadd.f32 0.0, %v2303
        %v2305 = vpop.f32.mrb[0].mxu0
        %2306 = vmatprep.mubr.f32.mxu0 0.0
        %2307 = vmatmul.mubr.f32.gmra.mrb[0].mxu0 %v2128
        %v2308 = vpop.f32.mrb[0].mxu0
        %v2309 = vadd.f32 0.0, %v2308
        %v2310 = vpop.f32.mrb[0].mxu0
        %2311 = vmatprep.mubr.f32.mxu0 0.0
        %2312 = vmatmul.mubr.f32.gmra.mrb[0].mxu0 %v2131
        %v2313 = vpop.f32.mrb[0].mxu0
        %v2314 = vadd.f32 0.0, %v2313
        %v2315 = vpop.f32.mrb[0].mxu0
        %2316 = vmatprep.mubr.f32.mxu0 0.0
        %2317 = vmatmul.mubr.f32.gmra.mrb[0].mxu0 %v2134
        %v2318 = vpop.f32.mrb[0].mxu0
        %v2319 = vadd.f32 0.0, %v2318
        %v2320 = vpop.f32.mrb[0].mxu0
        %2321 = vmatprep.mubr.f32.mxu0 0.0
        %2322 = vmatmul.mubr.f32.gmra.mrb[0].mxu0 %v2137
        %v2323 = vpop.f32.mrb[0].mxu0
        %v2324 = vadd.f32 0.0, %v2323
        %v2325 = vpop.f32.mrb[0].mxu0
        %2326 = vmatprep.mubr.f32.mxu0 0.0
        %2327 = vmatmul.mubr.f32.gmra.mrb[0].mxu0 %v2140
        %v2328 = vpop.f32.mrb[0].mxu0
        %v2329 = vadd.f32 0.0, %v2328
        %v2330 = vpop.f32.mrb[0].mxu0
        %2331 = vmatprep.mubr.f32.mxu0 0.0
        %2332 = vmatmul.mubr.f32.gmra.mrb[0].mxu0 %v2143
        %v2333 = vpop.f32.mrb[0].mxu0
        %v2334 = vadd.f32 0.0, %v2333
        %v2335 = vpop.f32.mrb[0].mxu0
        %2336 = vmatprep.mubr.f32.mxu0 0.0
        %2337 = vmatmul.mubr.f32.gmra.mrb[0].mxu0 %v2146
        %v2338 = vpop.f32.mrb[0].mxu0
        %v2339 = vadd.f32 0.0, %v2338
        %v2340 = vpop.f32.mrb[0].mxu0
        %2341 = vmatprep.mubr.f32.mxu0 0.0
        %2342 = vmatmul.mubr.f32.gmra.mrb[0].mxu0 %v2149
        %v2343 = vpop.f32.mrb[0].mxu0
        %v2344 = vadd.f32 0.0, %v2343
        %v2345 = vpop.f32.mrb[0].mxu0
        %2346 = vmatprep.mubr.f32.mxu0 0.0
        %2347 = vmatmul.mubr.f32.gmra.mrb[0].mxu0 %v2152
        %v2348 = vpop.f32.mrb[0].mxu0
        %v2349 = vadd.f32 0.0, %v2348
        %v2350 = vpop.f32.mrb[0].mxu0
        %2351 = vmatprep.mubr.f32.mxu0 0.0
        %2352 = vmatmul.mubr.f32.gmra.mrb[0].mxu0 %v2155
        %v2353 = vpop.f32.mrb[0].mxu0
        %v2354 = vadd.f32 0.0, %v2353
        %v2355 = vpop.f32.mrb[0].mxu0
        %2356 = vmatprep.mubr.f32.mxu0 0.0
        %2357 = vmatmul.mubr.f32.gmra.mrb[0].mxu0 %v2158
        %v2358 = vpop.f32.mrb[0].mxu0
        %v2359 = vadd.f32 0.0, %v2358
        %v2360 = vpop.f32.mrb[0].mxu0
        %2361 = vmatprep.mubr.f32.mxu0 0.0
        %2362 = vmatmul.mubr.f32.gmra.mrb[0].mxu0 %v2161
        %v2363 = vpop.f32.mrb[0].mxu0
        %v2364 = vadd.f32 0.0, %v2363
        %v2365 = vpop.f32.mrb[0].mxu0
        %2366 = vmatprep.mubr.f32.mxu0 0.0
        %2367 = vmatmul.mubr.f32.gmra.mrb[0].mxu0 %v2164
        %v2368 = vpop.f32.mrb[0].mxu0
        %v2369 = vadd.f32 0.0, %v2368
        %v2370 = vpop.f32.mrb[0].mxu0
        %2371 = vmatprep.mubr.f32.mxu0 0.0
        %2372 = vmatmul.mubr.f32.gmra.mrb[0].mxu0 %v2167
        %v2373 = vpop.f32.mrb[0].mxu0
        %v2374 = vadd.f32 0.0, %v2373
        %v2375 = vpop.f32.mrb[0].mxu0
        %2376 = vmatprep.mubr.f32.mxu0 0.0
        %2377 = vmatmul.mubr.f32.gmra.mrb[0].mxu0 %v2170
        %v2378 = vpop.f32.mrb[0].mxu0
        %v2379 = vadd.f32 0.0, %v2378
        %v2380 = vpop.f32.mrb[0].mxu0
        %2381 = vmatprep.mubr.f32.mxu0 0.0
        %2382 = vmatmul.mubr.f32.gmra.mrb[0].mxu0 %v2173
        %v2383 = vpop.f32.mrb[0].mxu0
        %v2384 = vadd.f32 0.0, %v2383
        %v2385 = vpop.f32.mrb[0].mxu0
        %2386 = vmatprep.mubr.f32.mxu0 0.0
        %2387 = vmatmul.mubr.f32.gmra.mrb[0].mxu0 %v2176
        %v2388 = vpop.f32.mrb[0].mxu0
        %v2389 = vadd.f32 0.0, %v2388
        %v2390 = vpop.f32.mrb[0].mxu0
        %2391 = vmatprep.mubr.f32.mxu0 0.0
        %2392 = vmatmul.mubr.f32.gmra.mrb[0].mxu0 %v2179
        %v2393 = vpop.f32.mrb[0].mxu0
        %v2394 = vadd.f32 0.0, %v2393
        %v2395 = vpop.f32.mrb[0].mxu0
        %2396 = vmatprep.mubr.f32.mxu0 0.0
        %2397 = vmatmul.mubr.f32.gmra.mrb[0].mxu0 %v2182
        %v2398 = vpop.f32.mrb[0].mxu0
        %v2399 = vadd.f32 0.0, %v2398
        %v2400 = vpop.f32.mrb[0].mxu0
        %2401 = vmatprep.mubr.f32.mxu0 0.0
        %2402 = vmatmul.mubr.f32.gmra.mrb[0].mxu0 %v2185
        %v2403 = vpop.f32.mrb[0].mxu0
        %v2404 = vadd.f32 0.0, %v2403
        %v2405 = vpop.f32.mrb[0].mxu0
        %2406 = vmatprep.mubr.f32.mxu0 0.0
        %2407 = vmatmul.mubr.f32.gmra.mrb[0].mxu0 %v2188
        %v2408 = vpop.f32.mrb[0].mxu0
        %v2409 = vadd.f32 0.0, %v2408
        %v2410 = vpop.f32.mrb[0].mxu0
        %2411 = vmatprep.mubr.f32.mxu0 0.0
        %2412 = vmatmul.mubr.f32.gmra.mrb[0].mxu0 %v2191
        %v2413 = vpop.f32.mrb[0].mxu0
        %v2414 = vadd.f32 0.0, %v2413
        %v2415 = vpop.f32.mrb[0].mxu0
        %2416 = vmatprep.mubr.f32.mxu0 0.0
        %2417 = vmatmul.mubr.f32.gmra.mrb[0].mxu0 %v2194
        %v2418 = vpop.f32.mrb[0].mxu0
        %v2419 = vadd.f32 0.0, %v2418
        %v2420 = vpop.f32.mrb[0].mxu0
        %2421 = vmatprep.mubr.f32.mxu0 0.0
        %2422 = vmatmul.mubr.f32.gmra.mrb[0].mxu0 %v2197
        %v2423 = vpop.f32.mrb[0].mxu0
        %v2424 = vadd.f32 0.0, %v2423
        %v2425 = vpop.f32.mrb[0].mxu0
        %2426 = vdwg.mxu0
        %v2427 = vadd.f32 %v2039, %v2269
        %v2428 = vadd.f32 %v2040, %v2274
        %v2429 = vadd.f32 %v2041, %v2279
        %v2430 = vadd.f32 %v2042, %v2284
        %v2431 = vadd.f32 %v2043, %v2289
        %v2432 = vadd.f32 %v2044, %v2294
        %v2433 = vadd.f32 %v2045, %v2299
        %v2434 = vadd.f32 %v2046, %v2304
        %v2435 = vadd.f32 %v2047, %v2309
        %v2436 = vadd.f32 %v2048, %v2314
        %v2437 = vadd.f32 %v2049, %v2319
        %v2438 = vadd.f32 %v2050, %v2324
        %v2439 = vadd.f32 %v2051, %v2329
        %v2440 = vadd.f32 %v2052, %v2334
        %v2441 = vadd.f32 %v2053, %v2339
        %v2442 = vadd.f32 %v2054, %v2344
        %v2443 = vadd.f32 %v2055, %v2349
        %v2444 = vadd.f32 %v2056, %v2354
        %v2445 = vadd.f32 %v2057, %v2359
        %v2446 = vadd.f32 %v2058, %v2364
        %v2447 = vadd.f32 %v2059, %v2369
        %v2448 = vadd.f32 %v2060, %v2374
        %v2449 = vadd.f32 %v2061, %v2379
        %v2450 = vadd.f32 %v2062, %v2384
        %v2451 = vadd.f32 %v2063, %v2389
        %v2452 = vadd.f32 %v2064, %v2394
        %v2453 = vadd.f32 %v2065, %v2399
        %v2454 = vadd.f32 %v2066, %v2404
        %v2455 = vadd.f32 %v2067, %v2409
        %v2456 = vadd.f32 %v2068, %v2414
        %v2457 = vadd.f32 %v2069, %v2419
        %v2458 = vadd.f32 %v2070, %v2424
        %v2459 = vld [vmem:[%s937 + $0x2] sm:$0xff]
        %v2460 = vld [vmem:[%s937 + $0xa] sm:$0xff]
        %v2461 = vld [vmem:[%s937 + $0x1a] sm:$0xff]
        %v2462 = vld [vmem:[%s937 + $0x22] sm:$0xff]
        %v2463 = vld [vmem:[%s937 + $0x32] sm:$0xff]
        %v2464 = vld [vmem:[%s937 + $0x3a] sm:$0xff]
        %v2465 = vld [vmem:[%s937 + $0x4a] sm:$0xff]
        %v2466 = vld [vmem:[%s937 + $0x52] sm:$0xff]
        %v2467 = vld [vmem:[%s937 + $0x62] sm:$0xff]
        %v2468 = vld [vmem:[%s937 + $0x6a] sm:$0xff]
        %v2469 = vld [vmem:[%s937 + $0x7a] sm:$0xff]
        %v2470 = vld [vmem:[%s937 + $0x82] sm:$0xff]
        %v2471 = vld [vmem:[%s937 + $0x92] sm:$0xff]
        %v2472 = vld [vmem:[%s937 + $0x9a] sm:$0xff]
        %v2473 = vld [vmem:[%s937 + $0xaa] sm:$0xff]
        %v2474 = vld [vmem:[%s937 + $0xb2] sm:$0xff]
        %v2475 = vld [vmem:[%s937 + $0xc2] sm:$0xff]
        %v2476 = vld [vmem:[%s937 + $0xca] sm:$0xff]
        %v2477 = vld [vmem:[%s937 + $0xda] sm:$0xff]
        %v2478 = vld [vmem:[%s937 + $0xe2] sm:$0xff]
        %v2479 = vld [vmem:[%s937 + $0xf2] sm:$0xff]
        %v2480 = vld [vmem:[%s937 + $0xfa] sm:$0xff]
        %v2481 = vld [vmem:[%s937 + $0x10a] sm:$0xff]
        %v2482 = vld [vmem:[%s937 + $0x112] sm:$0xff]
        %v2483 = vld [vmem:[%s937 + $0x122] sm:$0xff]
        %v2484 = vld [vmem:[%s937 + $0x12a] sm:$0xff]
        %v2485 = vld [vmem:[%s937 + $0x13a] sm:$0xff]
        %v2486 = vld [vmem:[%s937 + $0x142] sm:$0xff]
        %v2487 = vld [vmem:[%s937 + $0x152] sm:$0xff]
        %v2488 = vld [vmem:[%s937 + $0x15a] sm:$0xff]
        %v2489 = vld [vmem:[%s937 + $0x16a] sm:$0xff]
        %v2490 = vld [vmem:[%s937 + $0x172] sm:$0xff]
        %v2492 = vsel %vm419, %v2459, 0
        %v2495 = vsel %vm419, %v2460, 0
        %v2498 = vsel %vm419, %v2461, 0
        %v2501 = vsel %vm419, %v2462, 0
        %v2504 = vsel %vm419, %v2463, 0
        %v2507 = vsel %vm419, %v2464, 0
        %v2510 = vsel %vm419, %v2465, 0
        %v2513 = vsel %vm419, %v2466, 0
        %v2516 = vsel %vm419, %v2467, 0
        %v2519 = vsel %vm419, %v2468, 0
        %v2522 = vsel %vm419, %v2469, 0
        %v2525 = vsel %vm419, %v2470, 0
        %v2528 = vsel %vm419, %v2471, 0
        %v2531 = vsel %vm419, %v2472, 0
        %v2534 = vsel %vm419, %v2473, 0
        %v2537 = vsel %vm419, %v2474, 0
        %v2540 = vsel %vm419, %v2475, 0
        %v2543 = vsel %vm419, %v2476, 0
        %v2546 = vsel %vm419, %v2477, 0
        %v2549 = vsel %vm419, %v2478, 0
        %v2552 = vsel %vm419, %v2479, 0
        %v2555 = vsel %vm419, %v2480, 0
        %v2558 = vsel %vm419, %v2481, 0
        %v2561 = vsel %vm419, %v2482, 0
        %v2564 = vsel %vm419, %v2483, 0
        %v2567 = vsel %vm419, %v2484, 0
        %v2570 = vsel %vm419, %v2485, 0
        %v2573 = vsel %vm419, %v2486, 0
        %v2576 = vsel %vm419, %v2487, 0
        %v2579 = vsel %vm419, %v2488, 0
        %v2582 = vsel %vm419, %v2489, 0
        %v2585 = vsel %vm419, %v2490, 0
        %v2588 = vsel %vm1130, %v404, 0
        %2590 = vmatprep.subr.mxu0 0.0
        %2591 = vmatpush1.msra.mxu0 %v2588
        %2592 = vmatprep.subr.mxu0 0.0
        %2593 = vmatpush1.msra.mxu0 0.0
        %2594 = vmatprep.subr.mxu0 0.0
        %2595 = vmatpush1.msra.mxu0 0.0
        %2596 = vmatprep.subr.mxu0 0.0
        %2597 = vmatpush1.msra.mxu0 0.0
        %2598 = vmatprep.subr.mxu0 0.0
        %2599 = vmatpush1.msra.mxu0 0.0
        %2600 = vmatprep.subr.mxu0 0.0
        %2601 = vmatpush1.msra.mxu0 0.0
        %2602 = vmatprep.subr.mxu0 0.0
        %2603 = vmatpush1.msra.mxu0 0.0
        %2604 = vmatprep.subr.mxu0 0.0
        %2605 = vmatpush1.msra.mxu0 0.0
        %2606 = vmatprep.subr.mxu0 0.0
        %2607 = vmatpush1.msra.mxu0 0.0
        %2608 = vmatprep.subr.mxu0 0.0
        %2609 = vmatpush1.msra.mxu0 0.0
        %2610 = vmatprep.subr.mxu0 0.0
        %2611 = vmatpush1.msra.mxu0 0.0
        %2612 = vmatprep.subr.mxu0 0.0
        %2613 = vmatpush1.msra.mxu0 0.0
        %2614 = vmatprep.subr.mxu0 0.0
        %2615 = vmatpush1.msra.mxu0 0.0
        %2616 = vmatprep.subr.mxu0 0.0
        %2617 = vmatpush1.msra.mxu0 0.0
        %2618 = vmatprep.subr.mxu0 0.0
        %2619 = vmatpush1.msra.mxu0 0.0
        %2620 = vmatprep.subr.mxu0 0.0
        %2621 = vmatpush1.msra.mxu0 0.0
        %2622 = vmatprep.subr.mxu0 0.0
        %2623 = vmatpush1.msra.mxu0 0.0
        %2624 = vmatprep.subr.mxu0 0.0
        %2625 = vmatpush1.msra.mxu0 0.0
        %2626 = vmatprep.subr.mxu0 0.0
        %2627 = vmatpush1.msra.mxu0 0.0
        %2628 = vmatprep.subr.mxu0 0.0
        %2629 = vmatpush1.msra.mxu0 0.0
        %2630 = vmatprep.subr.mxu0 0.0
        %2631 = vmatpush1.msra.mxu0 0.0
        %2632 = vmatprep.subr.mxu0 0.0
        %2633 = vmatpush1.msra.mxu0 0.0
        %2634 = vmatprep.subr.mxu0 0.0
        %2635 = vmatpush1.msra.mxu0 0.0
        %2636 = vmatprep.subr.mxu0 0.0
        %2637 = vmatpush1.msra.mxu0 0.0
        %2638 = vmatprep.subr.mxu0 0.0
        %2639 = vmatpush1.msra.mxu0 0.0
        %2640 = vmatprep.subr.mxu0 0.0
        %2641 = vmatpush1.msra.mxu0 0.0
        %2642 = vmatprep.subr.mxu0 0.0
        %2643 = vmatpush1.msra.mxu0 0.0
        %2644 = vmatprep.subr.mxu0 0.0
        %2645 = vmatpush1.msra.mxu0 0.0
        %2646 = vmatprep.subr.mxu0 0.0
        %2647 = vmatpush1.msra.mxu0 0.0
        %2648 = vmatprep.subr.mxu0 0.0
        %2649 = vmatpush1.msra.mxu0 0.0
        %2650 = vmatprep.subr.mxu0 0.0
        %2651 = vmatpush1.msra.mxu0 0.0
        %2652 = vmatprep.subr.mxu0 0.0
        %2653 = vmatpush1.msra.mxu0 0.0
        %2654 = vmatprep.mubr.f32.mxu0 0.0
        %2655 = vmatmul.mubr.f32.gmra.mrb[0].mxu0 %v2492
        %v2656 = vpop.f32.mrb[0].mxu0
        %v2657 = vadd.f32 0.0, %v2656
        %v2658 = vpop.f32.mrb[0].mxu0
        %2659 = vmatprep.mubr.f32.mxu0 0.0
        %2660 = vmatmul.mubr.f32.gmra.mrb[0].mxu0 %v2495
        %v2661 = vpop.f32.mrb[0].mxu0
        %v2662 = vadd.f32 0.0, %v2661
        %v2663 = vpop.f32.mrb[0].mxu0
        %2664 = vmatprep.mubr.f32.mxu0 0.0
        %2665 = vmatmul.mubr.f32.gmra.mrb[0].mxu0 %v2498
        %v2666 = vpop.f32.mrb[0].mxu0
        %v2667 = vadd.f32 0.0, %v2666
        %v2668 = vpop.f32.mrb[0].mxu0
        %2669 = vmatprep.mubr.f32.mxu0 0.0
        %2670 = vmatmul.mubr.f32.gmra.mrb[0].mxu0 %v2501
        %v2671 = vpop.f32.mrb[0].mxu0
        %v2672 = vadd.f32 0.0, %v2671
        %v2673 = vpop.f32.mrb[0].mxu0
        %2674 = vmatprep.mubr.f32.mxu0 0.0
        %2675 = vmatmul.mubr.f32.gmra.mrb[0].mxu0 %v2504
        %v2676 = vpop.f32.mrb[0].mxu0
        %v2677 = vadd.f32 0.0, %v2676
        %v2678 = vpop.f32.mrb[0].mxu0
        %2679 = vmatprep.mubr.f32.mxu0 0.0
        %2680 = vmatmul.mubr.f32.gmra.mrb[0].mxu0 %v2507
        %v2681 = vpop.f32.mrb[0].mxu0
        %v2682 = vadd.f32 0.0, %v2681
        %v2683 = vpop.f32.mrb[0].mxu0
        %2684 = vmatprep.mubr.f32.mxu0 0.0
        %2685 = vmatmul.mubr.f32.gmra.mrb[0].mxu0 %v2510
        %v2686 = vpop.f32.mrb[0].mxu0
        %v2687 = vadd.f32 0.0, %v2686
        %v2688 = vpop.f32.mrb[0].mxu0
        %2689 = vmatprep.mubr.f32.mxu0 0.0
        %2690 = vmatmul.mubr.f32.gmra.mrb[0].mxu0 %v2513
        %v2691 = vpop.f32.mrb[0].mxu0
        %v2692 = vadd.f32 0.0, %v2691
        %v2693 = vpop.f32.mrb[0].mxu0
        %2694 = vmatprep.mubr.f32.mxu0 0.0
        %2695 = vmatmul.mubr.f32.gmra.mrb[0].mxu0 %v2516
        %v2696 = vpop.f32.mrb[0].mxu0
        %v2697 = vadd.f32 0.0, %v2696
        %v2698 = vpop.f32.mrb[0].mxu0
        %2699 = vmatprep.mubr.f32.mxu0 0.0
        %2700 = vmatmul.mubr.f32.gmra.mrb[0].mxu0 %v2519
        %v2701 = vpop.f32.mrb[0].mxu0
        %v2702 = vadd.f32 0.0, %v2701
        %v2703 = vpop.f32.mrb[0].mxu0
        %2704 = vmatprep.mubr.f32.mxu0 0.0
        %2705 = vmatmul.mubr.f32.gmra.mrb[0].mxu0 %v2522
        %v2706 = vpop.f32.mrb[0].mxu0
        %v2707 = vadd.f32 0.0, %v2706
        %v2708 = vpop.f32.mrb[0].mxu0
        %2709 = vmatprep.mubr.f32.mxu0 0.0
        %2710 = vmatmul.mubr.f32.gmra.mrb[0].mxu0 %v2525
        %v2711 = vpop.f32.mrb[0].mxu0
        %v2712 = vadd.f32 0.0, %v2711
        %v2713 = vpop.f32.mrb[0].mxu0
        %2714 = vmatprep.mubr.f32.mxu0 0.0
        %2715 = vmatmul.mubr.f32.gmra.mrb[0].mxu0 %v2528
        %v2716 = vpop.f32.mrb[0].mxu0
        %v2717 = vadd.f32 0.0, %v2716
        %v2718 = vpop.f32.mrb[0].mxu0
        %2719 = vmatprep.mubr.f32.mxu0 0.0
        %2720 = vmatmul.mubr.f32.gmra.mrb[0].mxu0 %v2531
        %v2721 = vpop.f32.mrb[0].mxu0
        %v2722 = vadd.f32 0.0, %v2721
        %v2723 = vpop.f32.mrb[0].mxu0
        %2724 = vmatprep.mubr.f32.mxu0 0.0
        %2725 = vmatmul.mubr.f32.gmra.mrb[0].mxu0 %v2534
        %v2726 = vpop.f32.mrb[0].mxu0
        %v2727 = vadd.f32 0.0, %v2726
        %v2728 = vpop.f32.mrb[0].mxu0
        %2729 = vmatprep.mubr.f32.mxu0 0.0
        %2730 = vmatmul.mubr.f32.gmra.mrb[0].mxu0 %v2537
        %v2731 = vpop.f32.mrb[0].mxu0
        %v2732 = vadd.f32 0.0, %v2731
        %v2733 = vpop.f32.mrb[0].mxu0
        %2734 = vmatprep.mubr.f32.mxu0 0.0
        %2735 = vmatmul.mubr.f32.gmra.mrb[0].mxu0 %v2540
        %v2736 = vpop.f32.mrb[0].mxu0
        %v2737 = vadd.f32 0.0, %v2736
        %v2738 = vpop.f32.mrb[0].mxu0
        %2739 = vmatprep.mubr.f32.mxu0 0.0
        %2740 = vmatmul.mubr.f32.gmra.mrb[0].mxu0 %v2543
        %v2741 = vpop.f32.mrb[0].mxu0
        %v2742 = vadd.f32 0.0, %v2741
        %v2743 = vpop.f32.mrb[0].mxu0
        %2744 = vmatprep.mubr.f32.mxu0 0.0
        %2745 = vmatmul.mubr.f32.gmra.mrb[0].mxu0 %v2546
        %v2746 = vpop.f32.mrb[0].mxu0
        %v2747 = vadd.f32 0.0, %v2746
        %v2748 = vpop.f32.mrb[0].mxu0
        %2749 = vmatprep.mubr.f32.mxu0 0.0
        %2750 = vmatmul.mubr.f32.gmra.mrb[0].mxu0 %v2549
        %v2751 = vpop.f32.mrb[0].mxu0
        %v2752 = vadd.f32 0.0, %v2751
        %v2753 = vpop.f32.mrb[0].mxu0
        %2754 = vmatprep.mubr.f32.mxu0 0.0
        %2755 = vmatmul.mubr.f32.gmra.mrb[0].mxu0 %v2552
        %v2756 = vpop.f32.mrb[0].mxu0
        %v2757 = vadd.f32 0.0, %v2756
        %v2758 = vpop.f32.mrb[0].mxu0
        %2759 = vmatprep.mubr.f32.mxu0 0.0
        %2760 = vmatmul.mubr.f32.gmra.mrb[0].mxu0 %v2555
        %v2761 = vpop.f32.mrb[0].mxu0
        %v2762 = vadd.f32 0.0, %v2761
        %v2763 = vpop.f32.mrb[0].mxu0
        %2764 = vmatprep.mubr.f32.mxu0 0.0
        %2765 = vmatmul.mubr.f32.gmra.mrb[0].mxu0 %v2558
        %v2766 = vpop.f32.mrb[0].mxu0
        %v2767 = vadd.f32 0.0, %v2766
        %v2768 = vpop.f32.mrb[0].mxu0
        %2769 = vmatprep.mubr.f32.mxu0 0.0
        %2770 = vmatmul.mubr.f32.gmra.mrb[0].mxu0 %v2561
        %v2771 = vpop.f32.mrb[0].mxu0
        %v2772 = vadd.f32 0.0, %v2771
        %v2773 = vpop.f32.mrb[0].mxu0
        %2774 = vmatprep.mubr.f32.mxu0 0.0
        %2775 = vmatmul.mubr.f32.gmra.mrb[0].mxu0 %v2564
        %v2776 = vpop.f32.mrb[0].mxu0
        %v2777 = vadd.f32 0.0, %v2776
        %v2778 = vpop.f32.mrb[0].mxu0
        %2779 = vmatprep.mubr.f32.mxu0 0.0
        %2780 = vmatmul.mubr.f32.gmra.mrb[0].mxu0 %v2567
        %v2781 = vpop.f32.mrb[0].mxu0
        %v2782 = vadd.f32 0.0, %v2781
        %v2783 = vpop.f32.mrb[0].mxu0
        %2784 = vmatprep.mubr.f32.mxu0 0.0
        %2785 = vmatmul.mubr.f32.gmra.mrb[0].mxu0 %v2570
        %v2786 = vpop.f32.mrb[0].mxu0
        %v2787 = vadd.f32 0.0, %v2786
        %v2788 = vpop.f32.mrb[0].mxu0
        %2789 = vmatprep.mubr.f32.mxu0 0.0
        %2790 = vmatmul.mubr.f32.gmra.mrb[0].mxu0 %v2573
        %v2791 = vpop.f32.mrb[0].mxu0
        %v2792 = vadd.f32 0.0, %v2791
        %v2793 = vpop.f32.mrb[0].mxu0
        %2794 = vmatprep.mubr.f32.mxu0 0.0
        %2795 = vmatmul.mubr.f32.gmra.mrb[0].mxu0 %v2576
        %v2796 = vpop.f32.mrb[0].mxu0
        %v2797 = vadd.f32 0.0, %v2796
        %v2798 = vpop.f32.mrb[0].mxu0
        %2799 = vmatprep.mubr.f32.mxu0 0.0
        %2800 = vmatmul.mubr.f32.gmra.mrb[0].mxu0 %v2579
        %v2801 = vpop.f32.mrb[0].mxu0
        %v2802 = vadd.f32 0.0, %v2801
        %v2803 = vpop.f32.mrb[0].mxu0
        %2804 = vmatprep.mubr.f32.mxu0 0.0
        %2805 = vmatmul.mubr.f32.gmra.mrb[0].mxu0 %v2582
        %v2806 = vpop.f32.mrb[0].mxu0
        %v2807 = vadd.f32 0.0, %v2806
        %v2808 = vpop.f32.mrb[0].mxu0
        %2809 = vmatprep.mubr.f32.mxu0 0.0
        %2810 = vmatmul.mubr.f32.gmra.mrb[0].mxu0 %v2585
        %v2811 = vpop.f32.mrb[0].mxu0
        %v2812 = vadd.f32 0.0, %v2811
        %v2813 = vpop.f32.mrb[0].mxu0
        %2814 = vdwg.mxu0
        %v2815 = vadd.f32 %v2427, %v2657
        %v2816 = vadd.f32 %v2428, %v2662
        %v2817 = vadd.f32 %v2429, %v2667
        %v2818 = vadd.f32 %v2430, %v2672
        %v2819 = vadd.f32 %v2431, %v2677
        %v2820 = vadd.f32 %v2432, %v2682
        %v2821 = vadd.f32 %v2433, %v2687
        %v2822 = vadd.f32 %v2434, %v2692
        %v2823 = vadd.f32 %v2435, %v2697
        %v2824 = vadd.f32 %v2436, %v2702
        %v2825 = vadd.f32 %v2437, %v2707
        %v2826 = vadd.f32 %v2438, %v2712
        %v2827 = vadd.f32 %v2439, %v2717
        %v2828 = vadd.f32 %v2440, %v2722
        %v2829 = vadd.f32 %v2441, %v2727
        %v2830 = vadd.f32 %v2442, %v2732
        %v2831 = vadd.f32 %v2443, %v2737
        %v2832 = vadd.f32 %v2444, %v2742
        %v2833 = vadd.f32 %v2445, %v2747
        %v2834 = vadd.f32 %v2446, %v2752
        %v2835 = vadd.f32 %v2447, %v2757
        %v2836 = vadd.f32 %v2448, %v2762
        %v2837 = vadd.f32 %v2449, %v2767
        %v2838 = vadd.f32 %v2450, %v2772
        %v2839 = vadd.f32 %v2451, %v2777
        %v2840 = vadd.f32 %v2452, %v2782
        %v2841 = vadd.f32 %v2453, %v2787
        %v2842 = vadd.f32 %v2454, %v2792
        %v2843 = vadd.f32 %v2455, %v2797
        %v2844 = vadd.f32 %v2456, %v2802
        %v2845 = vadd.f32 %v2457, %v2807
        %v2846 = vadd.f32 %v2458, %v2812
        %v2847 = vld [vmem:[%s937 + $0x4] sm:$0xff]
        %v2848 = vld [vmem:[%s937 + $0xc] sm:$0xff]
        %v2849 = vld [vmem:[%s937 + $0x1c] sm:$0xff]
        %v2850 = vld [vmem:[%s937 + $0x24] sm:$0xff]
        %v2851 = vld [vmem:[%s937 + $0x34] sm:$0xff]
        %v2852 = vld [vmem:[%s937 + $0x3c] sm:$0xff]
        %v2853 = vld [vmem:[%s937 + $0x4c] sm:$0xff]
        %v2854 = vld [vmem:[%s937 + $0x54] sm:$0xff]
        %v2855 = vld [vmem:[%s937 + $0x64] sm:$0xff]
        %v2856 = vld [vmem:[%s937 + $0x6c] sm:$0xff]
        %v2857 = vld [vmem:[%s937 + $0x7c] sm:$0xff]
        %v2858 = vld [vmem:[%s937 + $0x84] sm:$0xff]
        %v2859 = vld [vmem:[%s937 + $0x94] sm:$0xff]
        %v2860 = vld [vmem:[%s937 + $0x9c] sm:$0xff]
        %v2861 = vld [vmem:[%s937 + $0xac] sm:$0xff]
        %v2862 = vld [vmem:[%s937 + $0xb4] sm:$0xff]
        %v2863 = vld [vmem:[%s937 + $0xc4] sm:$0xff]
        %v2864 = vld [vmem:[%s937 + $0xcc] sm:$0xff]
        %v2865 = vld [vmem:[%s937 + $0xdc] sm:$0xff]
        %v2866 = vld [vmem:[%s937 + $0xe4] sm:$0xff]
        %v2867 = vld [vmem:[%s937 + $0xf4] sm:$0xff]
        %v2868 = vld [vmem:[%s937 + $0xfc] sm:$0xff]
        %v2869 = vld [vmem:[%s937 + $0x10c] sm:$0xff]
        %v2870 = vld [vmem:[%s937 + $0x114] sm:$0xff]
        %v2871 = vld [vmem:[%s937 + $0x124] sm:$0xff]
        %v2872 = vld [vmem:[%s937 + $0x12c] sm:$0xff]
        %v2873 = vld [vmem:[%s937 + $0x13c] sm:$0xff]
        %v2874 = vld [vmem:[%s937 + $0x144] sm:$0xff]
        %v2875 = vld [vmem:[%s937 + $0x154] sm:$0xff]
        %v2876 = vld [vmem:[%s937 + $0x15c] sm:$0xff]
        %v2877 = vld [vmem:[%s937 + $0x16c] sm:$0xff]
        %v2878 = vld [vmem:[%s937 + $0x174] sm:$0xff]
        %v2880 = vsel %vm419, %v2847, 0
        %v2883 = vsel %vm419, %v2848, 0
        %v2886 = vsel %vm419, %v2849, 0
        %v2889 = vsel %vm419, %v2850, 0
        %v2892 = vsel %vm419, %v2851, 0
        %v2895 = vsel %vm419, %v2852, 0
        %v2898 = vsel %vm419, %v2853, 0
        %v2901 = vsel %vm419, %v2854, 0
        %v2904 = vsel %vm419, %v2855, 0
        %v2907 = vsel %vm419, %v2856, 0
        %v2910 = vsel %vm419, %v2857, 0
        %v2913 = vsel %vm419, %v2858, 0
        %v2916 = vsel %vm419, %v2859, 0
        %v2919 = vsel %vm419, %v2860, 0
        %v2922 = vsel %vm419, %v2861, 0
        %v2925 = vsel %vm419, %v2862, 0
        %v2928 = vsel %vm419, %v2863, 0
        %v2931 = vsel %vm419, %v2864, 0
        %v2934 = vsel %vm419, %v2865, 0
        %v2937 = vsel %vm419, %v2866, 0
        %v2940 = vsel %vm419, %v2867, 0
        %v2943 = vsel %vm419, %v2868, 0
        %v2946 = vsel %vm419, %v2869, 0
        %v2949 = vsel %vm419, %v2870, 0
        %v2952 = vsel %vm419, %v2871, 0
        %v2955 = vsel %vm419, %v2872, 0
        %v2958 = vsel %vm419, %v2873, 0
        %v2961 = vsel %vm419, %v2874, 0
        %v2964 = vsel %vm419, %v2875, 0
        %v2967 = vsel %vm419, %v2876, 0
        %v2970 = vsel %vm419, %v2877, 0
        %v2973 = vsel %vm419, %v2878, 0
        %v2976 = vsel %vm1130, %v406, 0
        %2978 = vmatprep.subr.mxu0 0.0
        %2979 = vmatpush1.msra.mxu0 %v2976
        %2980 = vmatprep.subr.mxu0 0.0
        %2981 = vmatpush1.msra.mxu0 0.0
        %2982 = vmatprep.subr.mxu0 0.0
        %2983 = vmatpush1.msra.mxu0 0.0
        %2984 = vmatprep.subr.mxu0 0.0
        %2985 = vmatpush1.msra.mxu0 0.0
        %2986 = vmatprep.subr.mxu0 0.0
        %2987 = vmatpush1.msra.mxu0 0.0
        %2988 = vmatprep.subr.mxu0 0.0
        %2989 = vmatpush1.msra.mxu0 0.0
        %2990 = vmatprep.subr.mxu0 0.0
        %2991 = vmatpush1.msra.mxu0 0.0
        %2992 = vmatprep.subr.mxu0 0.0
        %2993 = vmatpush1.msra.mxu0 0.0
        %2994 = vmatprep.subr.mxu0 0.0
        %2995 = vmatpush1.msra.mxu0 0.0
        %2996 = vmatprep.subr.mxu0 0.0
        %2997 = vmatpush1.msra.mxu0 0.0
        %2998 = vmatprep.subr.mxu0 0.0
        %2999 = vmatpush1.msra.mxu0 0.0
        %3000 = vmatprep.subr.mxu0 0.0
        %3001 = vmatpush1.msra.mxu0 0.0
        %3002 = vmatprep.subr.mxu0 0.0
        %3003 = vmatpush1.msra.mxu0 0.0
        %3004 = vmatprep.subr.mxu0 0.0
        %3005 = vmatpush1.msra.mxu0 0.0
        %3006 = vmatprep.subr.mxu0 0.0
        %3007 = vmatpush1.msra.mxu0 0.0
        %3008 = vmatprep.subr.mxu0 0.0
        %3009 = vmatpush1.msra.mxu0 0.0
        %3010 = vmatprep.subr.mxu0 0.0
        %3011 = vmatpush1.msra.mxu0 0.0
        %3012 = vmatprep.subr.mxu0 0.0
        %3013 = vmatpush1.msra.mxu0 0.0
        %3014 = vmatprep.subr.mxu0 0.0
        %3015 = vmatpush1.msra.mxu0 0.0
        %3016 = vmatprep.subr.mxu0 0.0
        %3017 = vmatpush1.msra.mxu0 0.0
        %3018 = vmatprep.subr.mxu0 0.0
        %3019 = vmatpush1.msra.mxu0 0.0
        %3020 = vmatprep.subr.mxu0 0.0
        %3021 = vmatpush1.msra.mxu0 0.0
        %3022 = vmatprep.subr.mxu0 0.0
        %3023 = vmatpush1.msra.mxu0 0.0
        %3024 = vmatprep.subr.mxu0 0.0
        %3025 = vmatpush1.msra.mxu0 0.0
        %3026 = vmatprep.subr.mxu0 0.0
        %3027 = vmatpush1.msra.mxu0 0.0
        %3028 = vmatprep.subr.mxu0 0.0
        %3029 = vmatpush1.msra.mxu0 0.0
        %3030 = vmatprep.subr.mxu0 0.0
        %3031 = vmatpush1.msra.mxu0 0.0
        %3032 = vmatprep.subr.mxu0 0.0
        %3033 = vmatpush1.msra.mxu0 0.0
        %3034 = vmatprep.subr.mxu0 0.0
        %3035 = vmatpush1.msra.mxu0 0.0
        %3036 = vmatprep.subr.mxu0 0.0
        %3037 = vmatpush1.msra.mxu0 0.0
        %3038 = vmatprep.subr.mxu0 0.0
        %3039 = vmatpush1.msra.mxu0 0.0
        %3040 = vmatprep.subr.mxu0 0.0
        %3041 = vmatpush1.msra.mxu0 0.0
        %3042 = vmatprep.mubr.f32.mxu0 0.0
        %3043 = vmatmul.mubr.f32.gmra.mrb[0].mxu0 %v2880
        %v3044 = vpop.f32.mrb[0].mxu0
        %v3045 = vadd.f32 0.0, %v3044
        %v3046 = vpop.f32.mrb[0].mxu0
        %3047 = vmatprep.mubr.f32.mxu0 0.0
        %3048 = vmatmul.mubr.f32.gmra.mrb[0].mxu0 %v2883
        %v3049 = vpop.f32.mrb[0].mxu0
        %v3050 = vadd.f32 0.0, %v3049
        %v3051 = vpop.f32.mrb[0].mxu0
        %3052 = vmatprep.mubr.f32.mxu0 0.0
        %3053 = vmatmul.mubr.f32.gmra.mrb[0].mxu0 %v2886
        %v3054 = vpop.f32.mrb[0].mxu0
        %v3055 = vadd.f32 0.0, %v3054
        %v3056 = vpop.f32.mrb[0].mxu0
        %3057 = vmatprep.mubr.f32.mxu0 0.0
        %3058 = vmatmul.mubr.f32.gmra.mrb[0].mxu0 %v2889
        %v3059 = vpop.f32.mrb[0].mxu0
        %v3060 = vadd.f32 0.0, %v3059
        %v3061 = vpop.f32.mrb[0].mxu0
        %3062 = vmatprep.mubr.f32.mxu0 0.0
        %3063 = vmatmul.mubr.f32.gmra.mrb[0].mxu0 %v2892
        %v3064 = vpop.f32.mrb[0].mxu0
        %v3065 = vadd.f32 0.0, %v3064
        %v3066 = vpop.f32.mrb[0].mxu0
        %3067 = vmatprep.mubr.f32.mxu0 0.0
        %3068 = vmatmul.mubr.f32.gmra.mrb[0].mxu0 %v2895
        %v3069 = vpop.f32.mrb[0].mxu0
        %v3070 = vadd.f32 0.0, %v3069
        %v3071 = vpop.f32.mrb[0].mxu0
        %3072 = vmatprep.mubr.f32.mxu0 0.0
        %3073 = vmatmul.mubr.f32.gmra.mrb[0].mxu0 %v2898
        %v3074 = vpop.f32.mrb[0].mxu0
        %v3075 = vadd.f32 0.0, %v3074
        %v3076 = vpop.f32.mrb[0].mxu0
        %3077 = vmatprep.mubr.f32.mxu0 0.0
        %3078 = vmatmul.mubr.f32.gmra.mrb[0].mxu0 %v2901
        %v3079 = vpop.f32.mrb[0].mxu0
        %v3080 = vadd.f32 0.0, %v3079
        %v3081 = vpop.f32.mrb[0].mxu0
        %3082 = vmatprep.mubr.f32.mxu0 0.0
        %3083 = vmatmul.mubr.f32.gmra.mrb[0].mxu0 %v2904
        %v3084 = vpop.f32.mrb[0].mxu0
        %v3085 = vadd.f32 0.0, %v3084
        %v3086 = vpop.f32.mrb[0].mxu0
        %3087 = vmatprep.mubr.f32.mxu0 0.0
        %3088 = vmatmul.mubr.f32.gmra.mrb[0].mxu0 %v2907
        %v3089 = vpop.f32.mrb[0].mxu0
        %v3090 = vadd.f32 0.0, %v3089
        %v3091 = vpop.f32.mrb[0].mxu0
        %3092 = vmatprep.mubr.f32.mxu0 0.0
        %3093 = vmatmul.mubr.f32.gmra.mrb[0].mxu0 %v2910
        %v3094 = vpop.f32.mrb[0].mxu0
        %v3095 = vadd.f32 0.0, %v3094
        %v3096 = vpop.f32.mrb[0].mxu0
        %3097 = vmatprep.mubr.f32.mxu0 0.0
        %3098 = vmatmul.mubr.f32.gmra.mrb[0].mxu0 %v2913
        %v3099 = vpop.f32.mrb[0].mxu0
        %v3100 = vadd.f32 0.0, %v3099
        %v3101 = vpop.f32.mrb[0].mxu0
        %3102 = vmatprep.mubr.f32.mxu0 0.0
        %3103 = vmatmul.mubr.f32.gmra.mrb[0].mxu0 %v2916
        %v3104 = vpop.f32.mrb[0].mxu0
        %v3105 = vadd.f32 0.0, %v3104
        %v3106 = vpop.f32.mrb[0].mxu0
        %3107 = vmatprep.mubr.f32.mxu0 0.0
        %3108 = vmatmul.mubr.f32.gmra.mrb[0].mxu0 %v2919
        %v3109 = vpop.f32.mrb[0].mxu0
        %v3110 = vadd.f32 0.0, %v3109
        %v3111 = vpop.f32.mrb[0].mxu0
        %3112 = vmatprep.mubr.f32.mxu0 0.0
        %3113 = vmatmul.mubr.f32.gmra.mrb[0].mxu0 %v2922
        %v3114 = vpop.f32.mrb[0].mxu0
        %v3115 = vadd.f32 0.0, %v3114
        %v3116 = vpop.f32.mrb[0].mxu0
        %3117 = vmatprep.mubr.f32.mxu0 0.0
        %3118 = vmatmul.mubr.f32.gmra.mrb[0].mxu0 %v2925
        %v3119 = vpop.f32.mrb[0].mxu0
        %v3120 = vadd.f32 0.0, %v3119
        %v3121 = vpop.f32.mrb[0].mxu0
        %3122 = vmatprep.mubr.f32.mxu0 0.0
        %3123 = vmatmul.mubr.f32.gmra.mrb[0].mxu0 %v2928
        %v3124 = vpop.f32.mrb[0].mxu0
        %v3125 = vadd.f32 0.0, %v3124
        %v3126 = vpop.f32.mrb[0].mxu0
        %3127 = vmatprep.mubr.f32.mxu0 0.0
        %3128 = vmatmul.mubr.f32.gmra.mrb[0].mxu0 %v2931
        %v3129 = vpop.f32.mrb[0].mxu0
        %v3130 = vadd.f32 0.0, %v3129
        %v3131 = vpop.f32.mrb[0].mxu0
        %3132 = vmatprep.mubr.f32.mxu0 0.0
        %3133 = vmatmul.mubr.f32.gmra.mrb[0].mxu0 %v2934
        %v3134 = vpop.f32.mrb[0].mxu0
        %v3135 = vadd.f32 0.0, %v3134
        %v3136 = vpop.f32.mrb[0].mxu0
        %3137 = vmatprep.mubr.f32.mxu0 0.0
        %3138 = vmatmul.mubr.f32.gmra.mrb[0].mxu0 %v2937
        %v3139 = vpop.f32.mrb[0].mxu0
        %v3140 = vadd.f32 0.0, %v3139
        %v3141 = vpop.f32.mrb[0].mxu0
        %3142 = vmatprep.mubr.f32.mxu0 0.0
        %3143 = vmatmul.mubr.f32.gmra.mrb[0].mxu0 %v2940
        %v3144 = vpop.f32.mrb[0].mxu0
        %v3145 = vadd.f32 0.0, %v3144
        %v3146 = vpop.f32.mrb[0].mxu0
        %3147 = vmatprep.mubr.f32.mxu0 0.0
        %3148 = vmatmul.mubr.f32.gmra.mrb[0].mxu0 %v2943
        %v3149 = vpop.f32.mrb[0].mxu0
        %v3150 = vadd.f32 0.0, %v3149
        %v3151 = vpop.f32.mrb[0].mxu0
        %3152 = vmatprep.mubr.f32.mxu0 0.0
        %3153 = vmatmul.mubr.f32.gmra.mrb[0].mxu0 %v2946
        %v3154 = vpop.f32.mrb[0].mxu0
        %v3155 = vadd.f32 0.0, %v3154
        %v3156 = vpop.f32.mrb[0].mxu0
        %3157 = vmatprep.mubr.f32.mxu0 0.0
        %3158 = vmatmul.mubr.f32.gmra.mrb[0].mxu0 %v2949
        %v3159 = vpop.f32.mrb[0].mxu0
        %v3160 = vadd.f32 0.0, %v3159
        %v3161 = vpop.f32.mrb[0].mxu0
        %3162 = vmatprep.mubr.f32.mxu0 0.0
        %3163 = vmatmul.mubr.f32.gmra.mrb[0].mxu0 %v2952
        %v3164 = vpop.f32.mrb[0].mxu0
        %v3165 = vadd.f32 0.0, %v3164
        %v3166 = vpop.f32.mrb[0].mxu0
        %3167 = vmatprep.mubr.f32.mxu0 0.0
        %3168 = vmatmul.mubr.f32.gmra.mrb[0].mxu0 %v2955
        %v3169 = vpop.f32.mrb[0].mxu0
        %v3170 = vadd.f32 0.0, %v3169
        %v3171 = vpop.f32.mrb[0].mxu0
        %3172 = vmatprep.mubr.f32.mxu0 0.0
        %3173 = vmatmul.mubr.f32.gmra.mrb[0].mxu0 %v2958
        %v3174 = vpop.f32.mrb[0].mxu0
        %v3175 = vadd.f32 0.0, %v3174
        %v3176 = vpop.f32.mrb[0].mxu0
        %3177 = vmatprep.mubr.f32.mxu0 0.0
        %3178 = vmatmul.mubr.f32.gmra.mrb[0].mxu0 %v2961
        %v3179 = vpop.f32.mrb[0].mxu0
        %v3180 = vadd.f32 0.0, %v3179
        %v3181 = vpop.f32.mrb[0].mxu0
        %3182 = vmatprep.mubr.f32.mxu0 0.0
        %3183 = vmatmul.mubr.f32.gmra.mrb[0].mxu0 %v2964
        %v3184 = vpop.f32.mrb[0].mxu0
        %v3185 = vadd.f32 0.0, %v3184
        %v3186 = vpop.f32.mrb[0].mxu0
        %3187 = vmatprep.mubr.f32.mxu0 0.0
        %3188 = vmatmul.mubr.f32.gmra.mrb[0].mxu0 %v2967
        %v3189 = vpop.f32.mrb[0].mxu0
        %v3190 = vadd.f32 0.0, %v3189
        %v3191 = vpop.f32.mrb[0].mxu0
        %3192 = vmatprep.mubr.f32.mxu0 0.0
        %3193 = vmatmul.mubr.f32.gmra.mrb[0].mxu0 %v2970
        %v3194 = vpop.f32.mrb[0].mxu0
        %v3195 = vadd.f32 0.0, %v3194
        %v3196 = vpop.f32.mrb[0].mxu0
        %3197 = vmatprep.mubr.f32.mxu0 0.0
        %3198 = vmatmul.mubr.f32.gmra.mrb[0].mxu0 %v2973
        %v3199 = vpop.f32.mrb[0].mxu0
        %v3200 = vadd.f32 0.0, %v3199
        %v3201 = vpop.f32.mrb[0].mxu0
        %3202 = vdwg.mxu0
        %v3203 = vadd.f32 %v2815, %v3045
        %v3204 = vadd.f32 %v2816, %v3050
        %v3205 = vadd.f32 %v2817, %v3055
        %v3206 = vadd.f32 %v2818, %v3060
        %v3207 = vadd.f32 %v2819, %v3065
        %v3208 = vadd.f32 %v2820, %v3070
        %v3209 = vadd.f32 %v2821, %v3075
        %v3210 = vadd.f32 %v2822, %v3080
        %v3211 = vadd.f32 %v2823, %v3085
        %v3212 = vadd.f32 %v2824, %v3090
        %v3213 = vadd.f32 %v2825, %v3095
        %v3214 = vadd.f32 %v2826, %v3100
        %v3215 = vadd.f32 %v2827, %v3105
        %v3216 = vadd.f32 %v2828, %v3110
        %v3217 = vadd.f32 %v2829, %v3115
        %v3218 = vadd.f32 %v2830, %v3120
        %v3219 = vadd.f32 %v2831, %v3125
        %v3220 = vadd.f32 %v2832, %v3130
        %v3221 = vadd.f32 %v2833, %v3135
        %v3222 = vadd.f32 %v2834, %v3140
        %v3223 = vadd.f32 %v2835, %v3145
        %v3224 = vadd.f32 %v2836, %v3150
        %v3225 = vadd.f32 %v2837, %v3155
        %v3226 = vadd.f32 %v2838, %v3160
        %v3227 = vadd.f32 %v2839, %v3165
        %v3228 = vadd.f32 %v2840, %v3170
        %v3229 = vadd.f32 %v2841, %v3175
        %v3230 = vadd.f32 %v2842, %v3180
        %v3231 = vadd.f32 %v2843, %v3185
        %v3232 = vadd.f32 %v2844, %v3190
        %v3233 = vadd.f32 %v2845, %v3195
        %v3234 = vadd.f32 %v2846, %v3200
        %s3235 = scalar_lea.vmem [#allocation2], 96
        %v3236 = vld [vmem:[%s3235] sm:$0xff]
        %v3237 = vld [vmem:[%s3235 + $0x8] sm:$0xff]
        %v3238 = vld [vmem:[%s3235 + $0x18] sm:$0xff]
        %v3239 = vld [vmem:[%s3235 + $0x20] sm:$0xff]
        %v3240 = vld [vmem:[%s3235 + $0x30] sm:$0xff]
        %v3241 = vld [vmem:[%s3235 + $0x38] sm:$0xff]
        %v3242 = vld [vmem:[%s3235 + $0x48] sm:$0xff]
        %v3243 = vld [vmem:[%s3235 + $0x50] sm:$0xff]
        %v3244 = vld [vmem:[%s3235 + $0x60] sm:$0xff]
        %v3245 = vld [vmem:[%s3235 + $0x68] sm:$0xff]
        %v3246 = vld [vmem:[%s3235 + $0x78] sm:$0xff]
        %v3247 = vld [vmem:[%s3235 + $0x80] sm:$0xff]
        %v3248 = vld [vmem:[%s3235 + $0x90] sm:$0xff]
        %v3249 = vld [vmem:[%s3235 + $0x98] sm:$0xff]
        %v3250 = vld [vmem:[%s3235 + $0xa8] sm:$0xff]
        %v3251 = vld [vmem:[%s3235 + $0xb0] sm:$0xff]
        %v3252 = vld [vmem:[%s3235 + $0xc0] sm:$0xff]
        %v3253 = vld [vmem:[%s3235 + $0xc8] sm:$0xff]
        %v3254 = vld [vmem:[%s3235 + $0xd8] sm:$0xff]
        %v3255 = vld [vmem:[%s3235 + $0xe0] sm:$0xff]
        %v3256 = vld [vmem:[%s3235 + $0xf0] sm:$0xff]
        %v3257 = vld [vmem:[%s3235 + $0xf8] sm:$0xff]
        %v3258 = vld [vmem:[%s3235 + $0x108] sm:$0xff]
        %v3259 = vld [vmem:[%s3235 + $0x110] sm:$0xff]
        %v3260 = vld [vmem:[%s3235 + $0x120] sm:$0xff]
        %v3261 = vld [vmem:[%s3235 + $0x128] sm:$0xff]
        %v3262 = vld [vmem:[%s3235 + $0x138] sm:$0xff]
        %v3263 = vld [vmem:[%s3235 + $0x140] sm:$0xff]
        %v3264 = vld [vmem:[%s3235 + $0x150] sm:$0xff]
        %v3265 = vld [vmem:[%s3235 + $0x158] sm:$0xff]
        %v3266 = vld [vmem:[%s3235 + $0x168] sm:$0xff]
        %v3267 = vld [vmem:[%s3235 + $0x170] sm:$0xff]
        %v3269 = vsel %vm419, %v3236, 0
        %v3272 = vsel %vm419, %v3237, 0
        %v3275 = vsel %vm419, %v3238, 0
        %v3278 = vsel %vm419, %v3239, 0
        %v3281 = vsel %vm419, %v3240, 0
        %v3284 = vsel %vm419, %v3241, 0
        %v3287 = vsel %vm419, %v3242, 0
        %v3290 = vsel %vm419, %v3243, 0
        %v3293 = vsel %vm419, %v3244, 0
        %v3296 = vsel %vm419, %v3245, 0
        %v3299 = vsel %vm419, %v3246, 0
        %v3302 = vsel %vm419, %v3247, 0
        %v3305 = vsel %vm419, %v3248, 0
        %v3308 = vsel %vm419, %v3249, 0
        %v3311 = vsel %vm419, %v3250, 0
        %v3314 = vsel %vm419, %v3251, 0
        %v3317 = vsel %vm419, %v3252, 0
        %v3320 = vsel %vm419, %v3253, 0
        %v3323 = vsel %vm419, %v3254, 0
        %v3326 = vsel %vm419, %v3255, 0
        %v3329 = vsel %vm419, %v3256, 0
        %v3332 = vsel %vm419, %v3257, 0
        %v3335 = vsel %vm419, %v3258, 0
        %v3338 = vsel %vm419, %v3259, 0
        %v3341 = vsel %vm419, %v3260, 0
        %v3344 = vsel %vm419, %v3261, 0
        %v3347 = vsel %vm419, %v3262, 0
        %v3350 = vsel %vm419, %v3263, 0
        %v3353 = vsel %vm419, %v3264, 0
        %v3356 = vsel %vm419, %v3265, 0
        %v3359 = vsel %vm419, %v3266, 0
        %v3362 = vsel %vm419, %v3267, 0
        %v3365 = vsel %vm1130, %v408, 0
        %3367 = vmatprep.subr.mxu0 0.0
        %3368 = vmatpush1.msra.mxu0 %v3365
        %3369 = vmatprep.subr.mxu0 0.0
        %3370 = vmatpush1.msra.mxu0 0.0
        %3371 = vmatprep.subr.mxu0 0.0
        %3372 = vmatpush1.msra.mxu0 0.0
        %3373 = vmatprep.subr.mxu0 0.0
        %3374 = vmatpush1.msra.mxu0 0.0
        %3375 = vmatprep.subr.mxu0 0.0
        %3376 = vmatpush1.msra.mxu0 0.0
        %3377 = vmatprep.subr.mxu0 0.0
        %3378 = vmatpush1.msra.mxu0 0.0
        %3379 = vmatprep.subr.mxu0 0.0
        %3380 = vmatpush1.msra.mxu0 0.0
        %3381 = vmatprep.subr.mxu0 0.0
        %3382 = vmatpush1.msra.mxu0 0.0
        %3383 = vmatprep.subr.mxu0 0.0
        %3384 = vmatpush1.msra.mxu0 0.0
        %3385 = vmatprep.subr.mxu0 0.0
        %3386 = vmatpush1.msra.mxu0 0.0
        %3387 = vmatprep.subr.mxu0 0.0
        %3388 = vmatpush1.msra.mxu0 0.0
        %3389 = vmatprep.subr.mxu0 0.0
        %3390 = vmatpush1.msra.mxu0 0.0
        %3391 = vmatprep.subr.mxu0 0.0
        %3392 = vmatpush1.msra.mxu0 0.0
        %3393 = vmatprep.subr.mxu0 0.0
        %3394 = vmatpush1.msra.mxu0 0.0
        %3395 = vmatprep.subr.mxu0 0.0
        %3396 = vmatpush1.msra.mxu0 0.0
        %3397 = vmatprep.subr.mxu0 0.0
        %3398 = vmatpush1.msra.mxu0 0.0
        %3399 = vmatprep.subr.mxu0 0.0
        %3400 = vmatpush1.msra.mxu0 0.0
        %3401 = vmatprep.subr.mxu0 0.0
        %3402 = vmatpush1.msra.mxu0 0.0
        %3403 = vmatprep.subr.mxu0 0.0
        %3404 = vmatpush1.msra.mxu0 0.0
        %3405 = vmatprep.subr.mxu0 0.0
        %3406 = vmatpush1.msra.mxu0 0.0
        %3407 = vmatprep.subr.mxu0 0.0
        %3408 = vmatpush1.msra.mxu0 0.0
        %3409 = vmatprep.subr.mxu0 0.0
        %3410 = vmatpush1.msra.mxu0 0.0
        %3411 = vmatprep.subr.mxu0 0.0
        %3412 = vmatpush1.msra.mxu0 0.0
        %3413 = vmatprep.subr.mxu0 0.0
        %3414 = vmatpush1.msra.mxu0 0.0
        %3415 = vmatprep.subr.mxu0 0.0
        %3416 = vmatpush1.msra.mxu0 0.0
        %3417 = vmatprep.subr.mxu0 0.0
        %3418 = vmatpush1.msra.mxu0 0.0
        %3419 = vmatprep.subr.mxu0 0.0
        %3420 = vmatpush1.msra.mxu0 0.0
        %3421 = vmatprep.subr.mxu0 0.0
        %3422 = vmatpush1.msra.mxu0 0.0
        %3423 = vmatprep.subr.mxu0 0.0
        %3424 = vmatpush1.msra.mxu0 0.0
        %3425 = vmatprep.subr.mxu0 0.0
        %3426 = vmatpush1.msra.mxu0 0.0
        %3427 = vmatprep.subr.mxu0 0.0
        %3428 = vmatpush1.msra.mxu0 0.0
        %3429 = vmatprep.subr.mxu0 0.0
        %3430 = vmatpush1.msra.mxu0 0.0
        %3431 = vmatprep.mubr.f32.mxu0 0.0
        %3432 = vmatmul.mubr.f32.gmra.mrb[0].mxu0 %v3269
        %v3433 = vpop.f32.mrb[0].mxu0
        %v3434 = vadd.f32 0.0, %v3433
        %v3435 = vpop.f32.mrb[0].mxu0
        %3436 = vmatprep.mubr.f32.mxu0 0.0
        %3437 = vmatmul.mubr.f32.gmra.mrb[0].mxu0 %v3272
        %v3438 = vpop.f32.mrb[0].mxu0
        %v3439 = vadd.f32 0.0, %v3438
        %v3440 = vpop.f32.mrb[0].mxu0
        %3441 = vmatprep.mubr.f32.mxu0 0.0
        %3442 = vmatmul.mubr.f32.gmra.mrb[0].mxu0 %v3275
        %v3443 = vpop.f32.mrb[0].mxu0
        %v3444 = vadd.f32 0.0, %v3443
        %v3445 = vpop.f32.mrb[0].mxu0
        %3446 = vmatprep.mubr.f32.mxu0 0.0
        %3447 = vmatmul.mubr.f32.gmra.mrb[0].mxu0 %v3278
        %v3448 = vpop.f32.mrb[0].mxu0
        %v3449 = vadd.f32 0.0, %v3448
        %v3450 = vpop.f32.mrb[0].mxu0
        %3451 = vmatprep.mubr.f32.mxu0 0.0
        %3452 = vmatmul.mubr.f32.gmra.mrb[0].mxu0 %v3281
        %v3453 = vpop.f32.mrb[0].mxu0
        %v3454 = vadd.f32 0.0, %v3453
        %v3455 = vpop.f32.mrb[0].mxu0
        %3456 = vmatprep.mubr.f32.mxu0 0.0
        %3457 = vmatmul.mubr.f32.gmra.mrb[0].mxu0 %v3284
        %v3458 = vpop.f32.mrb[0].mxu0
        %v3459 = vadd.f32 0.0, %v3458
        %v3460 = vpop.f32.mrb[0].mxu0
        %3461 = vmatprep.mubr.f32.mxu0 0.0
        %3462 = vmatmul.mubr.f32.gmra.mrb[0].mxu0 %v3287
        %v3463 = vpop.f32.mrb[0].mxu0
        %v3464 = vadd.f32 0.0, %v3463
        %v3465 = vpop.f32.mrb[0].mxu0
        %3466 = vmatprep.mubr.f32.mxu0 0.0
        %3467 = vmatmul.mubr.f32.gmra.mrb[0].mxu0 %v3290
        %v3468 = vpop.f32.mrb[0].mxu0
        %v3469 = vadd.f32 0.0, %v3468
        %v3470 = vpop.f32.mrb[0].mxu0
        %3471 = vmatprep.mubr.f32.mxu0 0.0
        %3472 = vmatmul.mubr.f32.gmra.mrb[0].mxu0 %v3293
        %v3473 = vpop.f32.mrb[0].mxu0
        %v3474 = vadd.f32 0.0, %v3473
        %v3475 = vpop.f32.mrb[0].mxu0
        %3476 = vmatprep.mubr.f32.mxu0 0.0
        %3477 = vmatmul.mubr.f32.gmra.mrb[0].mxu0 %v3296
        %v3478 = vpop.f32.mrb[0].mxu0
        %v3479 = vadd.f32 0.0, %v3478
        %v3480 = vpop.f32.mrb[0].mxu0
        %3481 = vmatprep.mubr.f32.mxu0 0.0
        %3482 = vmatmul.mubr.f32.gmra.mrb[0].mxu0 %v3299
        %v3483 = vpop.f32.mrb[0].mxu0
        %v3484 = vadd.f32 0.0, %v3483
        %v3485 = vpop.f32.mrb[0].mxu0
        %3486 = vmatprep.mubr.f32.mxu0 0.0
        %3487 = vmatmul.mubr.f32.gmra.mrb[0].mxu0 %v3302
        %v3488 = vpop.f32.mrb[0].mxu0
        %v3489 = vadd.f32 0.0, %v3488
        %v3490 = vpop.f32.mrb[0].mxu0
        %3491 = vmatprep.mubr.f32.mxu0 0.0
        %3492 = vmatmul.mubr.f32.gmra.mrb[0].mxu0 %v3305
        %v3493 = vpop.f32.mrb[0].mxu0
        %v3494 = vadd.f32 0.0, %v3493
        %v3495 = vpop.f32.mrb[0].mxu0
        %3496 = vmatprep.mubr.f32.mxu0 0.0
        %3497 = vmatmul.mubr.f32.gmra.mrb[0].mxu0 %v3308
        %v3498 = vpop.f32.mrb[0].mxu0
        %v3499 = vadd.f32 0.0, %v3498
        %v3500 = vpop.f32.mrb[0].mxu0
        %3501 = vmatprep.mubr.f32.mxu0 0.0
        %3502 = vmatmul.mubr.f32.gmra.mrb[0].mxu0 %v3311
        %v3503 = vpop.f32.mrb[0].mxu0
        %v3504 = vadd.f32 0.0, %v3503
        %v3505 = vpop.f32.mrb[0].mxu0
        %3506 = vmatprep.mubr.f32.mxu0 0.0
        %3507 = vmatmul.mubr.f32.gmra.mrb[0].mxu0 %v3314
        %v3508 = vpop.f32.mrb[0].mxu0
        %v3509 = vadd.f32 0.0, %v3508
        %v3510 = vpop.f32.mrb[0].mxu0
        %3511 = vmatprep.mubr.f32.mxu0 0.0
        %3512 = vmatmul.mubr.f32.gmra.mrb[0].mxu0 %v3317
        %v3513 = vpop.f32.mrb[0].mxu0
        %v3514 = vadd.f32 0.0, %v3513
        %v3515 = vpop.f32.mrb[0].mxu0
        %3516 = vmatprep.mubr.f32.mxu0 0.0
        %3517 = vmatmul.mubr.f32.gmra.mrb[0].mxu0 %v3320
        %v3518 = vpop.f32.mrb[0].mxu0
        %v3519 = vadd.f32 0.0, %v3518
        %v3520 = vpop.f32.mrb[0].mxu0
        %3521 = vmatprep.mubr.f32.mxu0 0.0
        %3522 = vmatmul.mubr.f32.gmra.mrb[0].mxu0 %v3323
        %v3523 = vpop.f32.mrb[0].mxu0
        %v3524 = vadd.f32 0.0, %v3523
        %v3525 = vpop.f32.mrb[0].mxu0
        %3526 = vmatprep.mubr.f32.mxu0 0.0
        %3527 = vmatmul.mubr.f32.gmra.mrb[0].mxu0 %v3326
        %v3528 = vpop.f32.mrb[0].mxu0
        %v3529 = vadd.f32 0.0, %v3528
        %v3530 = vpop.f32.mrb[0].mxu0
        %3531 = vmatprep.mubr.f32.mxu0 0.0
        %3532 = vmatmul.mubr.f32.gmra.mrb[0].mxu0 %v3329
        %v3533 = vpop.f32.mrb[0].mxu0
        %v3534 = vadd.f32 0.0, %v3533
        %v3535 = vpop.f32.mrb[0].mxu0
        %3536 = vmatprep.mubr.f32.mxu0 0.0
        %3537 = vmatmul.mubr.f32.gmra.mrb[0].mxu0 %v3332
        %v3538 = vpop.f32.mrb[0].mxu0
        %v3539 = vadd.f32 0.0, %v3538
        %v3540 = vpop.f32.mrb[0].mxu0
        %3541 = vmatprep.mubr.f32.mxu0 0.0
        %3542 = vmatmul.mubr.f32.gmra.mrb[0].mxu0 %v3335
        %v3543 = vpop.f32.mrb[0].mxu0
        %v3544 = vadd.f32 0.0, %v3543
        %v3545 = vpop.f32.mrb[0].mxu0
        %3546 = vmatprep.mubr.f32.mxu0 0.0
        %3547 = vmatmul.mubr.f32.gmra.mrb[0].mxu0 %v3338
        %v3548 = vpop.f32.mrb[0].mxu0
        %v3549 = vadd.f32 0.0, %v3548
        %v3550 = vpop.f32.mrb[0].mxu0
        %3551 = vmatprep.mubr.f32.mxu0 0.0
        %3552 = vmatmul.mubr.f32.gmra.mrb[0].mxu0 %v3341
        %v3553 = vpop.f32.mrb[0].mxu0
        %v3554 = vadd.f32 0.0, %v3553
        %v3555 = vpop.f32.mrb[0].mxu0
        %3556 = vmatprep.mubr.f32.mxu0 0.0
        %3557 = vmatmul.mubr.f32.gmra.mrb[0].mxu0 %v3344
        %v3558 = vpop.f32.mrb[0].mxu0
        %v3559 = vadd.f32 0.0, %v3558
        %v3560 = vpop.f32.mrb[0].mxu0
        %3561 = vmatprep.mubr.f32.mxu0 0.0
        %3562 = vmatmul.mubr.f32.gmra.mrb[0].mxu0 %v3347
        %v3563 = vpop.f32.mrb[0].mxu0
        %v3564 = vadd.f32 0.0, %v3563
        %v3565 = vpop.f32.mrb[0].mxu0
        %3566 = vmatprep.mubr.f32.mxu0 0.0
        %3567 = vmatmul.mubr.f32.gmra.mrb[0].mxu0 %v3350
        %v3568 = vpop.f32.mrb[0].mxu0
        %v3569 = vadd.f32 0.0, %v3568
        %v3570 = vpop.f32.mrb[0].mxu0
        %3571 = vmatprep.mubr.f32.mxu0 0.0
        %3572 = vmatmul.mubr.f32.gmra.mrb[0].mxu0 %v3353
        %v3573 = vpop.f32.mrb[0].mxu0
        %v3574 = vadd.f32 0.0, %v3573
        %v3575 = vpop.f32.mrb[0].mxu0
        %3576 = vmatprep.mubr.f32.mxu0 0.0
        %3577 = vmatmul.mubr.f32.gmra.mrb[0].mxu0 %v3356
        %v3578 = vpop.f32.mrb[0].mxu0
        %v3579 = vadd.f32 0.0, %v3578
        %v3580 = vpop.f32.mrb[0].mxu0
        %3581 = vmatprep.mubr.f32.mxu0 0.0
        %3582 = vmatmul.mubr.f32.gmra.mrb[0].mxu0 %v3359
        %v3583 = vpop.f32.mrb[0].mxu0
        %v3584 = vadd.f32 0.0, %v3583
        %v3585 = vpop.f32.mrb[0].mxu0
        %3586 = vmatprep.mubr.f32.mxu0 0.0
        %3587 = vmatmul.mubr.f32.gmra.mrb[0].mxu0 %v3362
        %v3588 = vpop.f32.mrb[0].mxu0
        %v3589 = vadd.f32 0.0, %v3588
        %v3590 = vpop.f32.mrb[0].mxu0
        %3591 = vdwg.mxu0
        %v3592 = vadd.f32 %v3203, %v3434
        %v3593 = vadd.f32 %v3204, %v3439
        %v3594 = vadd.f32 %v3205, %v3444
        %v3595 = vadd.f32 %v3206, %v3449
        %v3596 = vadd.f32 %v3207, %v3454
        %v3597 = vadd.f32 %v3208, %v3459
        %v3598 = vadd.f32 %v3209, %v3464
        %v3599 = vadd.f32 %v3210, %v3469
        %v3600 = vadd.f32 %v3211, %v3474
        %v3601 = vadd.f32 %v3212, %v3479
        %v3602 = vadd.f32 %v3213, %v3484
        %v3603 = vadd.f32 %v3214, %v3489
        %v3604 = vadd.f32 %v3215, %v3494
        %v3605 = vadd.f32 %v3216, %v3499
        %v3606 = vadd.f32 %v3217, %v3504
        %v3607 = vadd.f32 %v3218, %v3509
        %v3608 = vadd.f32 %v3219, %v3514
        %v3609 = vadd.f32 %v3220, %v3519
        %v3610 = vadd.f32 %v3221, %v3524
        %v3611 = vadd.f32 %v3222, %v3529
        %v3612 = vadd.f32 %v3223, %v3534
        %v3613 = vadd.f32 %v3224, %v3539
        %v3614 = vadd.f32 %v3225, %v3544
        %v3615 = vadd.f32 %v3226, %v3549
        %v3616 = vadd.f32 %v3227, %v3554
        %v3617 = vadd.f32 %v3228, %v3559
        %v3618 = vadd.f32 %v3229, %v3564
        %v3619 = vadd.f32 %v3230, %v3569
        %v3620 = vadd.f32 %v3231, %v3574
        %v3621 = vadd.f32 %v3232, %v3579
        %v3622 = vadd.f32 %v3233, %v3584
        %v3623 = vadd.f32 %v3234, %v3589
        %v3624 = vld [vmem:[%s3235 + $0x2] sm:$0xff]
        %v3625 = vld [vmem:[%s3235 + $0xa] sm:$0xff]
        %v3626 = vld [vmem:[%s3235 + $0x1a] sm:$0xff]
        %v3627 = vld [vmem:[%s3235 + $0x22] sm:$0xff]
        %v3628 = vld [vmem:[%s3235 + $0x32] sm:$0xff]
        %v3629 = vld [vmem:[%s3235 + $0x3a] sm:$0xff]
        %v3630 = vld [vmem:[%s3235 + $0x4a] sm:$0xff]
        %v3631 = vld [vmem:[%s3235 + $0x52] sm:$0xff]
        %v3632 = vld [vmem:[%s3235 + $0x62] sm:$0xff]
        %v3633 = vld [vmem:[%s3235 + $0x6a] sm:$0xff]
        %v3634 = vld [vmem:[%s3235 + $0x7a] sm:$0xff]
        %v3635 = vld [vmem:[%s3235 + $0x82] sm:$0xff]
        %v3636 = vld [vmem:[%s3235 + $0x92] sm:$0xff]
        %v3637 = vld [vmem:[%s3235 + $0x9a] sm:$0xff]
        %v3638 = vld [vmem:[%s3235 + $0xaa] sm:$0xff]
        %v3639 = vld [vmem:[%s3235 + $0xb2] sm:$0xff]
        %v3640 = vld [vmem:[%s3235 + $0xc2] sm:$0xff]
        %v3641 = vld [vmem:[%s3235 + $0xca] sm:$0xff]
        %v3642 = vld [vmem:[%s3235 + $0xda] sm:$0xff]
        %v3643 = vld [vmem:[%s3235 + $0xe2] sm:$0xff]
        %v3644 = vld [vmem:[%s3235 + $0xf2] sm:$0xff]
        %v3645 = vld [vmem:[%s3235 + $0xfa] sm:$0xff]
        %v3646 = vld [vmem:[%s3235 + $0x10a] sm:$0xff]
        %v3647 = vld [vmem:[%s3235 + $0x112] sm:$0xff]
        %v3648 = vld [vmem:[%s3235 + $0x122] sm:$0xff]
        %v3649 = vld [vmem:[%s3235 + $0x12a] sm:$0xff]
        %v3650 = vld [vmem:[%s3235 + $0x13a] sm:$0xff]
        %v3651 = vld [vmem:[%s3235 + $0x142] sm:$0xff]
        %v3652 = vld [vmem:[%s3235 + $0x152] sm:$0xff]
        %v3653 = vld [vmem:[%s3235 + $0x15a] sm:$0xff]
        %v3654 = vld [vmem:[%s3235 + $0x16a] sm:$0xff]
        %v3655 = vld [vmem:[%s3235 + $0x172] sm:$0xff]
        %v3657 = vsel %vm419, %v3624, 0
        %v3660 = vsel %vm419, %v3625, 0
        %v3663 = vsel %vm419, %v3626, 0
        %v3666 = vsel %vm419, %v3627, 0
        %v3669 = vsel %vm419, %v3628, 0
        %v3672 = vsel %vm419, %v3629, 0
        %v3675 = vsel %vm419, %v3630, 0
        %v3678 = vsel %vm419, %v3631, 0
        %v3681 = vsel %vm419, %v3632, 0
        %v3684 = vsel %vm419, %v3633, 0
        %v3687 = vsel %vm419, %v3634, 0
        %v3690 = vsel %vm419, %v3635, 0
        %v3693 = vsel %vm419, %v3636, 0
        %v3696 = vsel %vm419, %v3637, 0
        %v3699 = vsel %vm419, %v3638, 0
        %v3702 = vsel %vm419, %v3639, 0
        %v3705 = vsel %vm419, %v3640, 0
        %v3708 = vsel %vm419, %v3641, 0
        %v3711 = vsel %vm419, %v3642, 0
        %v3714 = vsel %vm419, %v3643, 0
        %v3717 = vsel %vm419, %v3644, 0
        %v3720 = vsel %vm419, %v3645, 0
        %v3723 = vsel %vm419, %v3646, 0
        %v3726 = vsel %vm419, %v3647, 0
        %v3729 = vsel %vm419, %v3648, 0
        %v3732 = vsel %vm419, %v3649, 0
        %v3735 = vsel %vm419, %v3650, 0
        %v3738 = vsel %vm419, %v3651, 0
        %v3741 = vsel %vm419, %v3652, 0
        %v3744 = vsel %vm419, %v3653, 0
        %v3747 = vsel %vm419, %v3654, 0
        %v3750 = vsel %vm419, %v3655, 0
        %v3753 = vsel %vm1130, %v410, 0
        %3755 = vmatprep.subr.mxu0 0.0
        %3756 = vmatpush1.msra.mxu0 %v3753
        %3757 = vmatprep.subr.mxu0 0.0
        %3758 = vmatpush1.msra.mxu0 0.0
        %3759 = vmatprep.subr.mxu0 0.0
        %3760 = vmatpush1.msra.mxu0 0.0
        %3761 = vmatprep.subr.mxu0 0.0
        %3762 = vmatpush1.msra.mxu0 0.0
        %3763 = vmatprep.subr.mxu0 0.0
        %3764 = vmatpush1.msra.mxu0 0.0
        %3765 = vmatprep.subr.mxu0 0.0
        %3766 = vmatpush1.msra.mxu0 0.0
        %3767 = vmatprep.subr.mxu0 0.0
        %3768 = vmatpush1.msra.mxu0 0.0
        %3769 = vmatprep.subr.mxu0 0.0
        %3770 = vmatpush1.msra.mxu0 0.0
        %3771 = vmatprep.subr.mxu0 0.0
        %3772 = vmatpush1.msra.mxu0 0.0
        %3773 = vmatprep.subr.mxu0 0.0
        %3774 = vmatpush1.msra.mxu0 0.0
        %3775 = vmatprep.subr.mxu0 0.0
        %3776 = vmatpush1.msra.mxu0 0.0
        %3777 = vmatprep.subr.mxu0 0.0
        %3778 = vmatpush1.msra.mxu0 0.0
        %3779 = vmatprep.subr.mxu0 0.0
        %3780 = vmatpush1.msra.mxu0 0.0
        %3781 = vmatprep.subr.mxu0 0.0
        %3782 = vmatpush1.msra.mxu0 0.0
        %3783 = vmatprep.subr.mxu0 0.0
        %3784 = vmatpush1.msra.mxu0 0.0
        %3785 = vmatprep.subr.mxu0 0.0
        %3786 = vmatpush1.msra.mxu0 0.0
        %3787 = vmatprep.subr.mxu0 0.0
        %3788 = vmatpush1.msra.mxu0 0.0
        %3789 = vmatprep.subr.mxu0 0.0
        %3790 = vmatpush1.msra.mxu0 0.0
        %3791 = vmatprep.subr.mxu0 0.0
        %3792 = vmatpush1.msra.mxu0 0.0
        %3793 = vmatprep.subr.mxu0 0.0
        %3794 = vmatpush1.msra.mxu0 0.0
        %3795 = vmatprep.subr.mxu0 0.0
        %3796 = vmatpush1.msra.mxu0 0.0
        %3797 = vmatprep.subr.mxu0 0.0
        %3798 = vmatpush1.msra.mxu0 0.0
        %3799 = vmatprep.subr.mxu0 0.0
        %3800 = vmatpush1.msra.mxu0 0.0
        %3801 = vmatprep.subr.mxu0 0.0
        %3802 = vmatpush1.msra.mxu0 0.0
        %3803 = vmatprep.subr.mxu0 0.0
        %3804 = vmatpush1.msra.mxu0 0.0
        %3805 = vmatprep.subr.mxu0 0.0
        %3806 = vmatpush1.msra.mxu0 0.0
        %3807 = vmatprep.subr.mxu0 0.0
        %3808 = vmatpush1.msra.mxu0 0.0
        %3809 = vmatprep.subr.mxu0 0.0
        %3810 = vmatpush1.msra.mxu0 0.0
        %3811 = vmatprep.subr.mxu0 0.0
        %3812 = vmatpush1.msra.mxu0 0.0
        %3813 = vmatprep.subr.mxu0 0.0
        %3814 = vmatpush1.msra.mxu0 0.0
        %3815 = vmatprep.subr.mxu0 0.0
        %3816 = vmatpush1.msra.mxu0 0.0
        %3817 = vmatprep.subr.mxu0 0.0
        %3818 = vmatpush1.msra.mxu0 0.0
        %3819 = vmatprep.mubr.f32.mxu0 0.0
        %3820 = vmatmul.mubr.f32.gmra.mrb[0].mxu0 %v3657
        %v3821 = vpop.f32.mrb[0].mxu0
        %v3822 = vadd.f32 0.0, %v3821
        %v3823 = vpop.f32.mrb[0].mxu0
        %3824 = vmatprep.mubr.f32.mxu0 0.0
        %3825 = vmatmul.mubr.f32.gmra.mrb[0].mxu0 %v3660
        %v3826 = vpop.f32.mrb[0].mxu0
        %v3827 = vadd.f32 0.0, %v3826
        %v3828 = vpop.f32.mrb[0].mxu0
        %3829 = vmatprep.mubr.f32.mxu0 0.0
        %3830 = vmatmul.mubr.f32.gmra.mrb[0].mxu0 %v3663
        %v3831 = vpop.f32.mrb[0].mxu0
        %v3832 = vadd.f32 0.0, %v3831
        %v3833 = vpop.f32.mrb[0].mxu0
        %3834 = vmatprep.mubr.f32.mxu0 0.0
        %3835 = vmatmul.mubr.f32.gmra.mrb[0].mxu0 %v3666
        %v3836 = vpop.f32.mrb[0].mxu0
        %v3837 = vadd.f32 0.0, %v3836
        %v3838 = vpop.f32.mrb[0].mxu0
        %3839 = vmatprep.mubr.f32.mxu0 0.0
        %3840 = vmatmul.mubr.f32.gmra.mrb[0].mxu0 %v3669
        %v3841 = vpop.f32.mrb[0].mxu0
        %v3842 = vadd.f32 0.0, %v3841
        %v3843 = vpop.f32.mrb[0].mxu0
        %3844 = vmatprep.mubr.f32.mxu0 0.0
        %3845 = vmatmul.mubr.f32.gmra.mrb[0].mxu0 %v3672
        %v3846 = vpop.f32.mrb[0].mxu0
        %v3847 = vadd.f32 0.0, %v3846
        %v3848 = vpop.f32.mrb[0].mxu0
        %3849 = vmatprep.mubr.f32.mxu0 0.0
        %3850 = vmatmul.mubr.f32.gmra.mrb[0].mxu0 %v3675
        %v3851 = vpop.f32.mrb[0].mxu0
        %v3852 = vadd.f32 0.0, %v3851
        %v3853 = vpop.f32.mrb[0].mxu0
        %3854 = vmatprep.mubr.f32.mxu0 0.0
        %3855 = vmatmul.mubr.f32.gmra.mrb[0].mxu0 %v3678
        %v3856 = vpop.f32.mrb[0].mxu0
        %v3857 = vadd.f32 0.0, %v3856
        %v3858 = vpop.f32.mrb[0].mxu0
        %3859 = vmatprep.mubr.f32.mxu0 0.0
        %3860 = vmatmul.mubr.f32.gmra.mrb[0].mxu0 %v3681
        %v3861 = vpop.f32.mrb[0].mxu0
        %v3862 = vadd.f32 0.0, %v3861
        %v3863 = vpop.f32.mrb[0].mxu0
        %3864 = vmatprep.mubr.f32.mxu0 0.0
        %3865 = vmatmul.mubr.f32.gmra.mrb[0].mxu0 %v3684
        %v3866 = vpop.f32.mrb[0].mxu0
        %v3867 = vadd.f32 0.0, %v3866
        %v3868 = vpop.f32.mrb[0].mxu0
        %3869 = vmatprep.mubr.f32.mxu0 0.0
        %3870 = vmatmul.mubr.f32.gmra.mrb[0].mxu0 %v3687
        %v3871 = vpop.f32.mrb[0].mxu0
        %v3872 = vadd.f32 0.0, %v3871
        %v3873 = vpop.f32.mrb[0].mxu0
        %3874 = vmatprep.mubr.f32.mxu0 0.0
        %3875 = vmatmul.mubr.f32.gmra.mrb[0].mxu0 %v3690
        %v3876 = vpop.f32.mrb[0].mxu0
        %v3877 = vadd.f32 0.0, %v3876
        %v3878 = vpop.f32.mrb[0].mxu0
        %3879 = vmatprep.mubr.f32.mxu0 0.0
        %3880 = vmatmul.mubr.f32.gmra.mrb[0].mxu0 %v3693
        %v3881 = vpop.f32.mrb[0].mxu0
        %v3882 = vadd.f32 0.0, %v3881
        %v3883 = vpop.f32.mrb[0].mxu0
        %3884 = vmatprep.mubr.f32.mxu0 0.0
        %3885 = vmatmul.mubr.f32.gmra.mrb[0].mxu0 %v3696
        %v3886 = vpop.f32.mrb[0].mxu0
        %v3887 = vadd.f32 0.0, %v3886
        %v3888 = vpop.f32.mrb[0].mxu0
        %3889 = vmatprep.mubr.f32.mxu0 0.0
        %3890 = vmatmul.mubr.f32.gmra.mrb[0].mxu0 %v3699
        %v3891 = vpop.f32.mrb[0].mxu0
        %v3892 = vadd.f32 0.0, %v3891
        %v3893 = vpop.f32.mrb[0].mxu0
        %3894 = vmatprep.mubr.f32.mxu0 0.0
        %3895 = vmatmul.mubr.f32.gmra.mrb[0].mxu0 %v3702
        %v3896 = vpop.f32.mrb[0].mxu0
        %v3897 = vadd.f32 0.0, %v3896
        %v3898 = vpop.f32.mrb[0].mxu0
        %3899 = vmatprep.mubr.f32.mxu0 0.0
        %3900 = vmatmul.mubr.f32.gmra.mrb[0].mxu0 %v3705
        %v3901 = vpop.f32.mrb[0].mxu0
        %v3902 = vadd.f32 0.0, %v3901
        %v3903 = vpop.f32.mrb[0].mxu0
        %3904 = vmatprep.mubr.f32.mxu0 0.0
        %3905 = vmatmul.mubr.f32.gmra.mrb[0].mxu0 %v3708
        %v3906 = vpop.f32.mrb[0].mxu0
        %v3907 = vadd.f32 0.0, %v3906
        %v3908 = vpop.f32.mrb[0].mxu0
        %3909 = vmatprep.mubr.f32.mxu0 0.0
        %3910 = vmatmul.mubr.f32.gmra.mrb[0].mxu0 %v3711
        %v3911 = vpop.f32.mrb[0].mxu0
        %v3912 = vadd.f32 0.0, %v3911
        %v3913 = vpop.f32.mrb[0].mxu0
        %3914 = vmatprep.mubr.f32.mxu0 0.0
        %3915 = vmatmul.mubr.f32.gmra.mrb[0].mxu0 %v3714
        %v3916 = vpop.f32.mrb[0].mxu0
        %v3917 = vadd.f32 0.0, %v3916
        %v3918 = vpop.f32.mrb[0].mxu0
        %3919 = vmatprep.mubr.f32.mxu0 0.0
        %3920 = vmatmul.mubr.f32.gmra.mrb[0].mxu0 %v3717
        %v3921 = vpop.f32.mrb[0].mxu0
        %v3922 = vadd.f32 0.0, %v3921
        %v3923 = vpop.f32.mrb[0].mxu0
        %3924 = vmatprep.mubr.f32.mxu0 0.0
        %3925 = vmatmul.mubr.f32.gmra.mrb[0].mxu0 %v3720
        %v3926 = vpop.f32.mrb[0].mxu0
        %v3927 = vadd.f32 0.0, %v3926
        %v3928 = vpop.f32.mrb[0].mxu0
        %3929 = vmatprep.mubr.f32.mxu0 0.0
        %3930 = vmatmul.mubr.f32.gmra.mrb[0].mxu0 %v3723
        %v3931 = vpop.f32.mrb[0].mxu0
        %v3932 = vadd.f32 0.0, %v3931
        %v3933 = vpop.f32.mrb[0].mxu0
        %3934 = vmatprep.mubr.f32.mxu0 0.0
        %3935 = vmatmul.mubr.f32.gmra.mrb[0].mxu0 %v3726
        %v3936 = vpop.f32.mrb[0].mxu0
        %v3937 = vadd.f32 0.0, %v3936
        %v3938 = vpop.f32.mrb[0].mxu0
        %3939 = vmatprep.mubr.f32.mxu0 0.0
        %3940 = vmatmul.mubr.f32.gmra.mrb[0].mxu0 %v3729
        %v3941 = vpop.f32.mrb[0].mxu0
        %v3942 = vadd.f32 0.0, %v3941
        %v3943 = vpop.f32.mrb[0].mxu0
        %3944 = vmatprep.mubr.f32.mxu0 0.0
        %3945 = vmatmul.mubr.f32.gmra.mrb[0].mxu0 %v3732
        %v3946 = vpop.f32.mrb[0].mxu0
        %v3947 = vadd.f32 0.0, %v3946
        %v3948 = vpop.f32.mrb[0].mxu0
        %3949 = vmatprep.mubr.f32.mxu0 0.0
        %3950 = vmatmul.mubr.f32.gmra.mrb[0].mxu0 %v3735
        %v3951 = vpop.f32.mrb[0].mxu0
        %v3952 = vadd.f32 0.0, %v3951
        %v3953 = vpop.f32.mrb[0].mxu0
        %3954 = vmatprep.mubr.f32.mxu0 0.0
        %3955 = vmatmul.mubr.f32.gmra.mrb[0].mxu0 %v3738
        %v3956 = vpop.f32.mrb[0].mxu0
        %v3957 = vadd.f32 0.0, %v3956
        %v3958 = vpop.f32.mrb[0].mxu0
        %3959 = vmatprep.mubr.f32.mxu0 0.0
        %3960 = vmatmul.mubr.f32.gmra.mrb[0].mxu0 %v3741
        %v3961 = vpop.f32.mrb[0].mxu0
        %v3962 = vadd.f32 0.0, %v3961
        %v3963 = vpop.f32.mrb[0].mxu0
        %3964 = vmatprep.mubr.f32.mxu0 0.0
        %3965 = vmatmul.mubr.f32.gmra.mrb[0].mxu0 %v3744
        %v3966 = vpop.f32.mrb[0].mxu0
        %v3967 = vadd.f32 0.0, %v3966
        %v3968 = vpop.f32.mrb[0].mxu0
        %3969 = vmatprep.mubr.f32.mxu0 0.0
        %3970 = vmatmul.mubr.f32.gmra.mrb[0].mxu0 %v3747
        %v3971 = vpop.f32.mrb[0].mxu0
        %v3972 = vadd.f32 0.0, %v3971
        %v3973 = vpop.f32.mrb[0].mxu0
        %3974 = vmatprep.mubr.f32.mxu0 0.0
        %3975 = vmatmul.mubr.f32.gmra.mrb[0].mxu0 %v3750
        %v3976 = vpop.f32.mrb[0].mxu0
        %v3977 = vadd.f32 0.0, %v3976
        %v3978 = vpop.f32.mrb[0].mxu0
        %3979 = vdwg.mxu0
        %v3980 = vadd.f32 %v3592, %v3822
        %v3981 = vadd.f32 %v3593, %v3827
        %v3982 = vadd.f32 %v3594, %v3832
        %v3983 = vadd.f32 %v3595, %v3837
        %v3984 = vadd.f32 %v3596, %v3842
        %v3985 = vadd.f32 %v3597, %v3847
        %v3986 = vadd.f32 %v3598, %v3852
        %v3987 = vadd.f32 %v3599, %v3857
        %v3988 = vadd.f32 %v3600, %v3862
        %v3989 = vadd.f32 %v3601, %v3867
        %v3990 = vadd.f32 %v3602, %v3872
        %v3991 = vadd.f32 %v3603, %v3877
        %v3992 = vadd.f32 %v3604, %v3882
        %v3993 = vadd.f32 %v3605, %v3887
        %v3994 = vadd.f32 %v3606, %v3892
        %v3995 = vadd.f32 %v3607, %v3897
        %v3996 = vadd.f32 %v3608, %v3902
        %v3997 = vadd.f32 %v3609, %v3907
        %v3998 = vadd.f32 %v3610, %v3912
        %v3999 = vadd.f32 %v3611, %v3917
        %v4000 = vadd.f32 %v3612, %v3922
        %v4001 = vadd.f32 %v3613, %v3927
        %v4002 = vadd.f32 %v3614, %v3932
        %v4003 = vadd.f32 %v3615, %v3937
        %v4004 = vadd.f32 %v3616, %v3942
        %v4005 = vadd.f32 %v3617, %v3947
        %v4006 = vadd.f32 %v3618, %v3952
        %v4007 = vadd.f32 %v3619, %v3957
        %v4008 = vadd.f32 %v3620, %v3962
        %v4009 = vadd.f32 %v3621, %v3967
        %v4010 = vadd.f32 %v3622, %v3972
        %v4011 = vadd.f32 %v3623, %v3977
        %v4012 = vld [vmem:[%s3235 + $0x4] sm:$0xff]
        %v4013 = vld [vmem:[%s3235 + $0xc] sm:$0xff]
        %v4014 = vld [vmem:[%s3235 + $0x1c] sm:$0xff]
        %v4015 = vld [vmem:[%s3235 + $0x24] sm:$0xff]
        %v4016 = vld [vmem:[%s3235 + $0x34] sm:$0xff]
        %v4017 = vld [vmem:[%s3235 + $0x3c] sm:$0xff]
        %v4018 = vld [vmem:[%s3235 + $0x4c] sm:$0xff]
        %v4019 = vld [vmem:[%s3235 + $0x54] sm:$0xff]
        %v4020 = vld [vmem:[%s3235 + $0x64] sm:$0xff]
        %v4021 = vld [vmem:[%s3235 + $0x6c] sm:$0xff]
        %v4022 = vld [vmem:[%s3235 + $0x7c] sm:$0xff]
        %v4023 = vld [vmem:[%s3235 + $0x84] sm:$0xff]
        %v4024 = vld [vmem:[%s3235 + $0x94] sm:$0xff]
        %v4025 = vld [vmem:[%s3235 + $0x9c] sm:$0xff]
        %v4026 = vld [vmem:[%s3235 + $0xac] sm:$0xff]
        %v4027 = vld [vmem:[%s3235 + $0xb4] sm:$0xff]
        %v4028 = vld [vmem:[%s3235 + $0xc4] sm:$0xff]
        %v4029 = vld [vmem:[%s3235 + $0xcc] sm:$0xff]
        %v4030 = vld [vmem:[%s3235 + $0xdc] sm:$0xff]
        %v4031 = vld [vmem:[%s3235 + $0xe4] sm:$0xff]
        %v4032 = vld [vmem:[%s3235 + $0xf4] sm:$0xff]
        %v4033 = vld [vmem:[%s3235 + $0xfc] sm:$0xff]
        %v4034 = vld [vmem:[%s3235 + $0x10c] sm:$0xff]
        %v4035 = vld [vmem:[%s3235 + $0x114] sm:$0xff]
        %v4036 = vld [vmem:[%s3235 + $0x124] sm:$0xff]
        %v4037 = vld [vmem:[%s3235 + $0x12c] sm:$0xff]
        %v4038 = vld [vmem:[%s3235 + $0x13c] sm:$0xff]
        %v4039 = vld [vmem:[%s3235 + $0x144] sm:$0xff]
        %v4040 = vld [vmem:[%s3235 + $0x154] sm:$0xff]
        %v4041 = vld [vmem:[%s3235 + $0x15c] sm:$0xff]
        %v4042 = vld [vmem:[%s3235 + $0x16c] sm:$0xff]
        %v4043 = vld [vmem:[%s3235 + $0x174] sm:$0xff]
        %v4045 = vsel %vm419, %v4012, 0
        %v4048 = vsel %vm419, %v4013, 0
        %v4051 = vsel %vm419, %v4014, 0
        %v4054 = vsel %vm419, %v4015, 0
        %v4057 = vsel %vm419, %v4016, 0
        %v4060 = vsel %vm419, %v4017, 0
        %v4063 = vsel %vm419, %v4018, 0
        %v4066 = vsel %vm419, %v4019, 0
        %v4069 = vsel %vm419, %v4020, 0
        %v4072 = vsel %vm419, %v4021, 0
        %v4075 = vsel %vm419, %v4022, 0
        %v4078 = vsel %vm419, %v4023, 0
        %v4081 = vsel %vm419, %v4024, 0
        %v4084 = vsel %vm419, %v4025, 0
        %v4087 = vsel %vm419, %v4026, 0
        %v4090 = vsel %vm419, %v4027, 0
        %v4093 = vsel %vm419, %v4028, 0
        %v4096 = vsel %vm419, %v4029, 0
        %v4099 = vsel %vm419, %v4030, 0
        %v4102 = vsel %vm419, %v4031, 0
        %v4105 = vsel %vm419, %v4032, 0
        %v4108 = vsel %vm419, %v4033, 0
        %v4111 = vsel %vm419, %v4034, 0
        %v4114 = vsel %vm419, %v4035, 0
        %v4117 = vsel %vm419, %v4036, 0
        %v4120 = vsel %vm419, %v4037, 0
        %v4123 = vsel %vm419, %v4038, 0
        %v4126 = vsel %vm419, %v4039, 0
        %v4129 = vsel %vm419, %v4040, 0
        %v4132 = vsel %vm419, %v4041, 0
        %v4135 = vsel %vm419, %v4042, 0
        %v4138 = vsel %vm419, %v4043, 0
        %v4141 = vsel %vm1130, %v412, 0
        %4143 = vmatprep.subr.mxu0 0.0
        %4144 = vmatpush1.msra.mxu0 %v4141
        %4145 = vmatprep.subr.mxu0 0.0
        %4146 = vmatpush1.msra.mxu0 0.0
        %4147 = vmatprep.subr.mxu0 0.0
        %4148 = vmatpush1.msra.mxu0 0.0
        %4149 = vmatprep.subr.mxu0 0.0
        %4150 = vmatpush1.msra.mxu0 0.0
        %4151 = vmatprep.subr.mxu0 0.0
        %4152 = vmatpush1.msra.mxu0 0.0
        %4153 = vmatprep.subr.mxu0 0.0
        %4154 = vmatpush1.msra.mxu0 0.0
        %4155 = vmatprep.subr.mxu0 0.0
        %4156 = vmatpush1.msra.mxu0 0.0
        %4157 = vmatprep.subr.mxu0 0.0
        %4158 = vmatpush1.msra.mxu0 0.0
        %4159 = vmatprep.subr.mxu0 0.0
        %4160 = vmatpush1.msra.mxu0 0.0
        %4161 = vmatprep.subr.mxu0 0.0
        %4162 = vmatpush1.msra.mxu0 0.0
        %4163 = vmatprep.subr.mxu0 0.0
        %4164 = vmatpush1.msra.mxu0 0.0
        %4165 = vmatprep.subr.mxu0 0.0
        %4166 = vmatpush1.msra.mxu0 0.0
        %4167 = vmatprep.subr.mxu0 0.0
        %4168 = vmatpush1.msra.mxu0 0.0
        %4169 = vmatprep.subr.mxu0 0.0
        %4170 = vmatpush1.msra.mxu0 0.0
        %4171 = vmatprep.subr.mxu0 0.0
        %4172 = vmatpush1.msra.mxu0 0.0
        %4173 = vmatprep.subr.mxu0 0.0
        %4174 = vmatpush1.msra.mxu0 0.0
        %4175 = vmatprep.subr.mxu0 0.0
        %4176 = vmatpush1.msra.mxu0 0.0
        %4177 = vmatprep.subr.mxu0 0.0
        %4178 = vmatpush1.msra.mxu0 0.0
        %4179 = vmatprep.subr.mxu0 0.0
        %4180 = vmatpush1.msra.mxu0 0.0
        %4181 = vmatprep.subr.mxu0 0.0
        %4182 = vmatpush1.msra.mxu0 0.0
        %4183 = vmatprep.subr.mxu0 0.0
        %4184 = vmatpush1.msra.mxu0 0.0
        %4185 = vmatprep.subr.mxu0 0.0
        %4186 = vmatpush1.msra.mxu0 0.0
        %4187 = vmatprep.subr.mxu0 0.0
        %4188 = vmatpush1.msra.mxu0 0.0
        %4189 = vmatprep.subr.mxu0 0.0
        %4190 = vmatpush1.msra.mxu0 0.0
        %4191 = vmatprep.subr.mxu0 0.0
        %4192 = vmatpush1.msra.mxu0 0.0
        %4193 = vmatprep.subr.mxu0 0.0
        %4194 = vmatpush1.msra.mxu0 0.0
        %4195 = vmatprep.subr.mxu0 0.0
        %4196 = vmatpush1.msra.mxu0 0.0
        %4197 = vmatprep.subr.mxu0 0.0
        %4198 = vmatpush1.msra.mxu0 0.0
        %4199 = vmatprep.subr.mxu0 0.0
        %4200 = vmatpush1.msra.mxu0 0.0
        %4201 = vmatprep.subr.mxu0 0.0
        %4202 = vmatpush1.msra.mxu0 0.0
        %4203 = vmatprep.subr.mxu0 0.0
        %4204 = vmatpush1.msra.mxu0 0.0
        %4205 = vmatprep.subr.mxu0 0.0
        %4206 = vmatpush1.msra.mxu0 0.0
        %4207 = vmatprep.mubr.f32.mxu0 0.0
        %4208 = vmatmul.mubr.f32.gmra.mrb[0].mxu0 %v4045
        %v4209 = vpop.f32.mrb[0].mxu0
        %v4210 = vadd.f32 0.0, %v4209
        %v4211 = vpop.f32.mrb[0].mxu0
        %4212 = vmatprep.mubr.f32.mxu0 0.0
        %4213 = vmatmul.mubr.f32.gmra.mrb[0].mxu0 %v4048
        %v4214 = vpop.f32.mrb[0].mxu0
        %v4215 = vadd.f32 0.0, %v4214
        %v4216 = vpop.f32.mrb[0].mxu0
        %4217 = vmatprep.mubr.f32.mxu0 0.0
        %4218 = vmatmul.mubr.f32.gmra.mrb[0].mxu0 %v4051
        %v4219 = vpop.f32.mrb[0].mxu0
        %v4220 = vadd.f32 0.0, %v4219
        %v4221 = vpop.f32.mrb[0].mxu0
        %4222 = vmatprep.mubr.f32.mxu0 0.0
        %4223 = vmatmul.mubr.f32.gmra.mrb[0].mxu0 %v4054
        %v4224 = vpop.f32.mrb[0].mxu0
        %v4225 = vadd.f32 0.0, %v4224
        %v4226 = vpop.f32.mrb[0].mxu0
        %4227 = vmatprep.mubr.f32.mxu0 0.0
        %4228 = vmatmul.mubr.f32.gmra.mrb[0].mxu0 %v4057
        %v4229 = vpop.f32.mrb[0].mxu0
        %v4230 = vadd.f32 0.0, %v4229
        %v4231 = vpop.f32.mrb[0].mxu0
        %4232 = vmatprep.mubr.f32.mxu0 0.0
        %4233 = vmatmul.mubr.f32.gmra.mrb[0].mxu0 %v4060
        %v4234 = vpop.f32.mrb[0].mxu0
        %v4235 = vadd.f32 0.0, %v4234
        %v4236 = vpop.f32.mrb[0].mxu0
        %4237 = vmatprep.mubr.f32.mxu0 0.0
        %4238 = vmatmul.mubr.f32.gmra.mrb[0].mxu0 %v4063
        %v4239 = vpop.f32.mrb[0].mxu0
        %v4240 = vadd.f32 0.0, %v4239
        %v4241 = vpop.f32.mrb[0].mxu0
        %4242 = vmatprep.mubr.f32.mxu0 0.0
        %4243 = vmatmul.mubr.f32.gmra.mrb[0].mxu0 %v4066
        %v4244 = vpop.f32.mrb[0].mxu0
        %v4245 = vadd.f32 0.0, %v4244
        %v4246 = vpop.f32.mrb[0].mxu0
        %4247 = vmatprep.mubr.f32.mxu0 0.0
        %4248 = vmatmul.mubr.f32.gmra.mrb[0].mxu0 %v4069
        %v4249 = vpop.f32.mrb[0].mxu0
        %v4250 = vadd.f32 0.0, %v4249
        %v4251 = vpop.f32.mrb[0].mxu0
        %4252 = vmatprep.mubr.f32.mxu0 0.0
        %4253 = vmatmul.mubr.f32.gmra.mrb[0].mxu0 %v4072
        %v4254 = vpop.f32.mrb[0].mxu0
        %v4255 = vadd.f32 0.0, %v4254
        %v4256 = vpop.f32.mrb[0].mxu0
        %4257 = vmatprep.mubr.f32.mxu0 0.0
        %4258 = vmatmul.mubr.f32.gmra.mrb[0].mxu0 %v4075
        %v4259 = vpop.f32.mrb[0].mxu0
        %v4260 = vadd.f32 0.0, %v4259
        %v4261 = vpop.f32.mrb[0].mxu0
        %4262 = vmatprep.mubr.f32.mxu0 0.0
        %4263 = vmatmul.mubr.f32.gmra.mrb[0].mxu0 %v4078
        %v4264 = vpop.f32.mrb[0].mxu0
        %v4265 = vadd.f32 0.0, %v4264
        %v4266 = vpop.f32.mrb[0].mxu0
        %4267 = vmatprep.mubr.f32.mxu0 0.0
        %4268 = vmatmul.mubr.f32.gmra.mrb[0].mxu0 %v4081
        %v4269 = vpop.f32.mrb[0].mxu0
        %v4270 = vadd.f32 0.0, %v4269
        %v4271 = vpop.f32.mrb[0].mxu0
        %4272 = vmatprep.mubr.f32.mxu0 0.0
        %4273 = vmatmul.mubr.f32.gmra.mrb[0].mxu0 %v4084
        %v4274 = vpop.f32.mrb[0].mxu0
        %v4275 = vadd.f32 0.0, %v4274
        %v4276 = vpop.f32.mrb[0].mxu0
        %4277 = vmatprep.mubr.f32.mxu0 0.0
        %4278 = vmatmul.mubr.f32.gmra.mrb[0].mxu0 %v4087
        %v4279 = vpop.f32.mrb[0].mxu0
        %v4280 = vadd.f32 0.0, %v4279
        %v4281 = vpop.f32.mrb[0].mxu0
        %4282 = vmatprep.mubr.f32.mxu0 0.0
        %4283 = vmatmul.mubr.f32.gmra.mrb[0].mxu0 %v4090
        %v4284 = vpop.f32.mrb[0].mxu0
        %v4285 = vadd.f32 0.0, %v4284
        %v4286 = vpop.f32.mrb[0].mxu0
        %4287 = vmatprep.mubr.f32.mxu0 0.0
        %4288 = vmatmul.mubr.f32.gmra.mrb[0].mxu0 %v4093
        %v4289 = vpop.f32.mrb[0].mxu0
        %v4290 = vadd.f32 0.0, %v4289
        %v4291 = vpop.f32.mrb[0].mxu0
        %4292 = vmatprep.mubr.f32.mxu0 0.0
        %4293 = vmatmul.mubr.f32.gmra.mrb[0].mxu0 %v4096
        %v4294 = vpop.f32.mrb[0].mxu0
        %v4295 = vadd.f32 0.0, %v4294
        %v4296 = vpop.f32.mrb[0].mxu0
        %4297 = vmatprep.mubr.f32.mxu0 0.0
        %4298 = vmatmul.mubr.f32.gmra.mrb[0].mxu0 %v4099
        %v4299 = vpop.f32.mrb[0].mxu0
        %v4300 = vadd.f32 0.0, %v4299
        %v4301 = vpop.f32.mrb[0].mxu0
        %4302 = vmatprep.mubr.f32.mxu0 0.0
        %4303 = vmatmul.mubr.f32.gmra.mrb[0].mxu0 %v4102
        %v4304 = vpop.f32.mrb[0].mxu0
        %v4305 = vadd.f32 0.0, %v4304
        %v4306 = vpop.f32.mrb[0].mxu0
        %4307 = vmatprep.mubr.f32.mxu0 0.0
        %4308 = vmatmul.mubr.f32.gmra.mrb[0].mxu0 %v4105
        %v4309 = vpop.f32.mrb[0].mxu0
        %v4310 = vadd.f32 0.0, %v4309
        %v4311 = vpop.f32.mrb[0].mxu0
        %4312 = vmatprep.mubr.f32.mxu0 0.0
        %4313 = vmatmul.mubr.f32.gmra.mrb[0].mxu0 %v4108
        %v4314 = vpop.f32.mrb[0].mxu0
        %v4315 = vadd.f32 0.0, %v4314
        %v4316 = vpop.f32.mrb[0].mxu0
        %4317 = vmatprep.mubr.f32.mxu0 0.0
        %4318 = vmatmul.mubr.f32.gmra.mrb[0].mxu0 %v4111
        %v4319 = vpop.f32.mrb[0].mxu0
        %v4320 = vadd.f32 0.0, %v4319
        %v4321 = vpop.f32.mrb[0].mxu0
        %4322 = vmatprep.mubr.f32.mxu0 0.0
        %4323 = vmatmul.mubr.f32.gmra.mrb[0].mxu0 %v4114
        %v4324 = vpop.f32.mrb[0].mxu0
        %v4325 = vadd.f32 0.0, %v4324
        %v4326 = vpop.f32.mrb[0].mxu0
        %4327 = vmatprep.mubr.f32.mxu0 0.0
        %4328 = vmatmul.mubr.f32.gmra.mrb[0].mxu0 %v4117
        %v4329 = vpop.f32.mrb[0].mxu0
        %v4330 = vadd.f32 0.0, %v4329
        %v4331 = vpop.f32.mrb[0].mxu0
        %4332 = vmatprep.mubr.f32.mxu0 0.0
        %4333 = vmatmul.mubr.f32.gmra.mrb[0].mxu0 %v4120
        %v4334 = vpop.f32.mrb[0].mxu0
        %v4335 = vadd.f32 0.0, %v4334
        %v4336 = vpop.f32.mrb[0].mxu0
        %4337 = vmatprep.mubr.f32.mxu0 0.0
        %4338 = vmatmul.mubr.f32.gmra.mrb[0].mxu0 %v4123
        %v4339 = vpop.f32.mrb[0].mxu0
        %v4340 = vadd.f32 0.0, %v4339
        %v4341 = vpop.f32.mrb[0].mxu0
        %4342 = vmatprep.mubr.f32.mxu0 0.0
        %4343 = vmatmul.mubr.f32.gmra.mrb[0].mxu0 %v4126
        %v4344 = vpop.f32.mrb[0].mxu0
        %v4345 = vadd.f32 0.0, %v4344
        %v4346 = vpop.f32.mrb[0].mxu0
        %4347 = vmatprep.mubr.f32.mxu0 0.0
        %4348 = vmatmul.mubr.f32.gmra.mrb[0].mxu0 %v4129
        %v4349 = vpop.f32.mrb[0].mxu0
        %v4350 = vadd.f32 0.0, %v4349
        %v4351 = vpop.f32.mrb[0].mxu0
        %4352 = vmatprep.mubr.f32.mxu0 0.0
        %4353 = vmatmul.mubr.f32.gmra.mrb[0].mxu0 %v4132
        %v4354 = vpop.f32.mrb[0].mxu0
        %v4355 = vadd.f32 0.0, %v4354
        %v4356 = vpop.f32.mrb[0].mxu0
        %4357 = vmatprep.mubr.f32.mxu0 0.0
        %4358 = vmatmul.mubr.f32.gmra.mrb[0].mxu0 %v4135
        %v4359 = vpop.f32.mrb[0].mxu0
        %v4360 = vadd.f32 0.0, %v4359
        %v4361 = vpop.f32.mrb[0].mxu0
        %4362 = vmatprep.mubr.f32.mxu0 0.0
        %4363 = vmatmul.mubr.f32.gmra.mrb[0].mxu0 %v4138
        %v4364 = vpop.f32.mrb[0].mxu0
        %v4365 = vadd.f32 0.0, %v4364
        %v4366 = vpop.f32.mrb[0].mxu0
        %4367 = vdwg.mxu0
        %v4368 = vadd.f32 %v3980, %v4210
        %v4369 = vadd.f32 %v3981, %v4215
        %v4370 = vadd.f32 %v3982, %v4220
        %v4371 = vadd.f32 %v3983, %v4225
        %v4372 = vadd.f32 %v3984, %v4230
        %v4373 = vadd.f32 %v3985, %v4235
        %v4374 = vadd.f32 %v3986, %v4240
        %v4375 = vadd.f32 %v3987, %v4245
        %v4376 = vadd.f32 %v3988, %v4250
        %v4377 = vadd.f32 %v3989, %v4255
        %v4378 = vadd.f32 %v3990, %v4260
        %v4379 = vadd.f32 %v3991, %v4265
        %v4380 = vadd.f32 %v3992, %v4270
        %v4381 = vadd.f32 %v3993, %v4275
        %v4382 = vadd.f32 %v3994, %v4280
        %v4383 = vadd.f32 %v3995, %v4285
        %v4384 = vadd.f32 %v3996, %v4290
        %v4385 = vadd.f32 %v3997, %v4295
        %v4386 = vadd.f32 %v3998, %v4300
        %v4387 = vadd.f32 %v3999, %v4305
        %v4388 = vadd.f32 %v4000, %v4310
        %v4389 = vadd.f32 %v4001, %v4315
        %v4390 = vadd.f32 %v4002, %v4320
        %v4391 = vadd.f32 %v4003, %v4325
        %v4392 = vadd.f32 %v4004, %v4330
        %v4393 = vadd.f32 %v4005, %v4335
        %v4394 = vadd.f32 %v4006, %v4340
        %v4395 = vadd.f32 %v4007, %v4345
        %v4396 = vadd.f32 %v4008, %v4350
        %v4397 = vadd.f32 %v4009, %v4355
        %v4398 = vadd.f32 %v4010, %v4360
        %v4399 = vadd.f32 %v4011, %v4365
        %v4401 = vlaneseq
        %v4402 = vshrl.u32 %v4401, 7
        %v4403 = vsub.s32 0, %v4402
        %v4404 = vrot.slane %v415, %v4403
        %v4406 = vmul.f32 %v4368, %v4404
        %v4407 = vmul.f32 %v4369, %v4404
        %v4408 = vmul.f32 %v4370, %v4404
        %v4409 = vmul.f32 %v4371, %v4404
        %v4410 = vmul.f32 %v4372, %v4404
        %v4411 = vmul.f32 %v4373, %v4404
        %v4412 = vmul.f32 %v4374, %v4404
        %v4413 = vmul.f32 %v4375, %v4404
        %v4414 = vmul.f32 %v4376, %v4404
        %v4415 = vmul.f32 %v4377, %v4404
        %v4416 = vmul.f32 %v4378, %v4404
        %v4417 = vmul.f32 %v4379, %v4404
        %v4418 = vmul.f32 %v4380, %v4404
        %v4419 = vmul.f32 %v4381, %v4404
        %v4420 = vmul.f32 %v4382, %v4404
        %v4421 = vmul.f32 %v4383, %v4404
        %v4422 = vmul.f32 %v4384, %v4404
        %v4423 = vmul.f32 %v4385, %v4404
        %v4424 = vmul.f32 %v4386, %v4404
        %v4425 = vmul.f32 %v4387, %v4404
        %v4426 = vmul.f32 %v4388, %v4404
        %v4427 = vmul.f32 %v4389, %v4404
        %v4428 = vmul.f32 %v4390, %v4404
        %v4429 = vmul.f32 %v4391, %v4404
        %v4430 = vmul.f32 %v4392, %v4404
        %v4431 = vmul.f32 %v4393, %v4404
        %v4432 = vmul.f32 %v4394, %v4404
        %v4433 = vmul.f32 %v4395, %v4404
        %v4434 = vmul.f32 %v4396, %v4404
        %v4435 = vmul.f32 %v4397, %v4404
        %v4436 = vmul.f32 %v4398, %v4404
        %v4437 = vmul.f32 %v4399, %v4404
        %v4439 = vlaneseq
        %v4440 = vshrl.u32 %v4439, 7
        %v4441 = vsub.s32 0, %v4440
        %v4442 = vrot.slane %v416, %v4441
        %v4444 = vadd.f32 %v4406, %v4442
        %v4445 = vadd.f32 %v4407, %v4442
        %v4446 = vadd.f32 %v4408, %v4442
        %v4447 = vadd.f32 %v4409, %v4442
        %v4448 = vadd.f32 %v4410, %v4442
        %v4449 = vadd.f32 %v4411, %v4442
        %v4450 = vadd.f32 %v4412, %v4442
        %v4451 = vadd.f32 %v4413, %v4442
        %v4452 = vadd.f32 %v4414, %v4442
        %v4453 = vadd.f32 %v4415, %v4442
        %v4454 = vadd.f32 %v4416, %v4442
        %v4455 = vadd.f32 %v4417, %v4442
        %v4456 = vadd.f32 %v4418, %v4442
        %v4457 = vadd.f32 %v4419, %v4442
        %v4458 = vadd.f32 %v4420, %v4442
        %v4459 = vadd.f32 %v4421, %v4442
        %v4460 = vadd.f32 %v4422, %v4442
        %v4461 = vadd.f32 %v4423, %v4442
        %v4462 = vadd.f32 %v4424, %v4442
        %v4463 = vadd.f32 %v4425, %v4442
        %v4464 = vadd.f32 %v4426, %v4442
        %v4465 = vadd.f32 %v4427, %v4442
        %v4466 = vadd.f32 %v4428, %v4442
        %v4467 = vadd.f32 %v4429, %v4442
        %v4468 = vadd.f32 %v4430, %v4442
        %v4469 = vadd.f32 %v4431, %v4442
        %v4470 = vadd.f32 %v4432, %v4442
        %v4471 = vadd.f32 %v4433, %v4442
        %v4472 = vadd.f32 %v4434, %v4442
        %v4473 = vadd.f32 %v4435, %v4442
        %v4474 = vadd.f32 %v4436, %v4442
        %v4475 = vadd.f32 %v4437, %v4442
        %v4476 = vmax.f32 %v4444, 0.0
        %v4477 = vmax.f32 %v4445, 0.0
        %v4478 = vmax.f32 %v4446, 0.0
        %v4479 = vmax.f32 %v4447, 0.0
        %v4480 = vmax.f32 %v4448, 0.0
        %v4481 = vmax.f32 %v4449, 0.0
        %v4482 = vmax.f32 %v4450, 0.0
        %v4483 = vmax.f32 %v4451, 0.0
        %v4484 = vmax.f32 %v4452, 0.0
        %v4485 = vmax.f32 %v4453, 0.0
        %v4486 = vmax.f32 %v4454, 0.0
        %v4487 = vmax.f32 %v4455, 0.0
        %v4488 = vmax.f32 %v4456, 0.0
        %v4489 = vmax.f32 %v4457, 0.0
        %v4490 = vmax.f32 %v4458, 0.0
        %v4491 = vmax.f32 %v4459, 0.0
        %v4492 = vmax.f32 %v4460, 0.0
        %v4493 = vmax.f32 %v4461, 0.0
        %v4494 = vmax.f32 %v4462, 0.0
        %v4495 = vmax.f32 %v4463, 0.0
        %v4496 = vmax.f32 %v4464, 0.0
        %v4497 = vmax.f32 %v4465, 0.0
        %v4498 = vmax.f32 %v4466, 0.0
        %v4499 = vmax.f32 %v4467, 0.0
        %v4500 = vmax.f32 %v4468, 0.0
        %v4501 = vmax.f32 %v4469, 0.0
        %v4502 = vmax.f32 %v4470, 0.0
        %v4503 = vmax.f32 %v4471, 0.0
        %v4504 = vmax.f32 %v4472, 0.0
        %v4505 = vmax.f32 %v4473, 0.0
        %v4506 = vmax.f32 %v4474, 0.0
        %v4507 = vmax.f32 %v4475, 0.0
        %v4509 = vsel %vm419, %v4476, 0
        %v4512 = vsel %vm419, %v4477, 0
        %v4515 = vsel %vm419, %v4478, 0
        %v4518 = vsel %vm419, %v4479, 0
        %v4521 = vsel %vm419, %v4480, 0
        %v4524 = vsel %vm419, %v4481, 0
        %v4527 = vsel %vm419, %v4482, 0
        %v4530 = vsel %vm419, %v4483, 0
        %v4533 = vsel %vm419, %v4484, 0
        %v4536 = vsel %vm419, %v4485, 0
        %v4539 = vsel %vm419, %v4486, 0
        %v4542 = vsel %vm419, %v4487, 0
        %v4545 = vsel %vm419, %v4488, 0
        %v4548 = vsel %vm419, %v4489, 0
        %v4551 = vsel %vm419, %v4490, 0
        %v4554 = vsel %vm419, %v4491, 0
        %v4557 = vsel %vm419, %v4492, 0
        %v4560 = vsel %vm419, %v4493, 0
        %v4563 = vsel %vm419, %v4494, 0
        %v4566 = vsel %vm419, %v4495, 0
        %v4569 = vsel %vm419, %v4496, 0
        %v4572 = vsel %vm419, %v4497, 0
        %v4575 = vsel %vm419, %v4498, 0
        %v4578 = vsel %vm419, %v4499, 0
        %v4581 = vsel %vm419, %v4500, 0
        %v4584 = vsel %vm419, %v4501, 0
        %v4587 = vsel %vm419, %v4502, 0
        %v4590 = vsel %vm419, %v4503, 0
        %v4593 = vsel %vm419, %v4504, 0
        %v4596 = vsel %vm419, %v4505, 0
        %v4599 = vsel %vm419, %v4506, 0
        %v4602 = vsel %vm419, %v4507, 0
        %v4605 = vsel %vm1130, %v395, 0
        %4607 = vmatprep.subr.mxu0 0.0
        %4608 = vmatpush1.msra.mxu0 %v4605
        %4609 = vmatprep.subr.mxu0 0.0
        %4610 = vmatpush1.msra.mxu0 0.0
        %4611 = vmatprep.subr.mxu0 0.0
        %4612 = vmatpush1.msra.mxu0 0.0
        %4613 = vmatprep.subr.mxu0 0.0
        %4614 = vmatpush1.msra.mxu0 0.0
        %4615 = vmatprep.subr.mxu0 0.0
        %4616 = vmatpush1.msra.mxu0 0.0
        %4617 = vmatprep.subr.mxu0 0.0
        %4618 = vmatpush1.msra.mxu0 0.0
        %4619 = vmatprep.subr.mxu0 0.0
        %4620 = vmatpush1.msra.mxu0 0.0
        %4621 = vmatprep.subr.mxu0 0.0
        %4622 = vmatpush1.msra.mxu0 0.0
        %4623 = vmatprep.subr.mxu0 0.0
        %4624 = vmatpush1.msra.mxu0 0.0
        %4625 = vmatprep.subr.mxu0 0.0
        %4626 = vmatpush1.msra.mxu0 0.0
        %4627 = vmatprep.subr.mxu0 0.0
        %4628 = vmatpush1.msra.mxu0 0.0
        %4629 = vmatprep.subr.mxu0 0.0
        %4630 = vmatpush1.msra.mxu0 0.0
        %4631 = vmatprep.subr.mxu0 0.0
        %4632 = vmatpush1.msra.mxu0 0.0
        %4633 = vmatprep.subr.mxu0 0.0
        %4634 = vmatpush1.msra.mxu0 0.0
        %4635 = vmatprep.subr.mxu0 0.0
        %4636 = vmatpush1.msra.mxu0 0.0
        %4637 = vmatprep.subr.mxu0 0.0
        %4638 = vmatpush1.msra.mxu0 0.0
        %4639 = vmatprep.subr.mxu0 0.0
        %4640 = vmatpush1.msra.mxu0 0.0
        %4641 = vmatprep.subr.mxu0 0.0
        %4642 = vmatpush1.msra.mxu0 0.0
        %4643 = vmatprep.subr.mxu0 0.0
        %4644 = vmatpush1.msra.mxu0 0.0
        %4645 = vmatprep.subr.mxu0 0.0
        %4646 = vmatpush1.msra.mxu0 0.0
        %4647 = vmatprep.subr.mxu0 0.0
        %4648 = vmatpush1.msra.mxu0 0.0
        %4649 = vmatprep.subr.mxu0 0.0
        %4650 = vmatpush1.msra.mxu0 0.0
        %4651 = vmatprep.subr.mxu0 0.0
        %4652 = vmatpush1.msra.mxu0 0.0
        %4653 = vmatprep.subr.mxu0 0.0
        %4654 = vmatpush1.msra.mxu0 0.0
        %4655 = vmatprep.subr.mxu0 0.0
        %4656 = vmatpush1.msra.mxu0 0.0
        %4657 = vmatprep.subr.mxu0 0.0
        %4658 = vmatpush1.msra.mxu0 0.0
        %4659 = vmatprep.subr.mxu0 0.0
        %4660 = vmatpush1.msra.mxu0 0.0
        %4661 = vmatprep.subr.mxu0 0.0
        %4662 = vmatpush1.msra.mxu0 0.0
        %4663 = vmatprep.subr.mxu0 0.0
        %4664 = vmatpush1.msra.mxu0 0.0
        %4665 = vmatprep.subr.mxu0 0.0
        %4666 = vmatpush1.msra.mxu0 0.0
        %4667 = vmatprep.subr.mxu0 0.0
        %4668 = vmatpush1.msra.mxu0 0.0
        %4669 = vmatprep.subr.mxu0 0.0
        %4670 = vmatpush1.msra.mxu0 0.0
        %4671 = vmatprep.mubr.f32.mxu0 0.0
        %4672 = vmatmul.mubr.f32.gmra.mrb[0].mxu0 %v4509
        %v4673 = vpop.f32.mrb[0].mxu0
        %v4674 = vadd.f32 0.0, %v4673
        %v4675 = vpop.f32.mrb[0].mxu0
        %4676 = vmatprep.mubr.f32.mxu0 0.0
        %4677 = vmatmul.mubr.f32.gmra.mrb[0].mxu0 %v4512
        %v4678 = vpop.f32.mrb[0].mxu0
        %v4679 = vadd.f32 0.0, %v4678
        %v4680 = vpop.f32.mrb[0].mxu0
        %4681 = vmatprep.mubr.f32.mxu0 0.0
        %4682 = vmatmul.mubr.f32.gmra.mrb[0].mxu0 %v4515
        %v4683 = vpop.f32.mrb[0].mxu0
        %v4684 = vadd.f32 0.0, %v4683
        %v4685 = vpop.f32.mrb[0].mxu0
        %4686 = vmatprep.mubr.f32.mxu0 0.0
        %4687 = vmatmul.mubr.f32.gmra.mrb[0].mxu0 %v4518
        %v4688 = vpop.f32.mrb[0].mxu0
        %v4689 = vadd.f32 0.0, %v4688
        %v4690 = vpop.f32.mrb[0].mxu0
        %4691 = vmatprep.mubr.f32.mxu0 0.0
        %4692 = vmatmul.mubr.f32.gmra.mrb[0].mxu0 %v4521
        %v4693 = vpop.f32.mrb[0].mxu0
        %v4694 = vadd.f32 0.0, %v4693
        %v4695 = vpop.f32.mrb[0].mxu0
        %4696 = vmatprep.mubr.f32.mxu0 0.0
        %4697 = vmatmul.mubr.f32.gmra.mrb[0].mxu0 %v4524
        %v4698 = vpop.f32.mrb[0].mxu0
        %v4699 = vadd.f32 0.0, %v4698
        %v4700 = vpop.f32.mrb[0].mxu0
        %4701 = vmatprep.mubr.f32.mxu0 0.0
        %4702 = vmatmul.mubr.f32.gmra.mrb[0].mxu0 %v4527
        %v4703 = vpop.f32.mrb[0].mxu0
        %v4704 = vadd.f32 0.0, %v4703
        %v4705 = vpop.f32.mrb[0].mxu0
        %4706 = vmatprep.mubr.f32.mxu0 0.0
        %4707 = vmatmul.mubr.f32.gmra.mrb[0].mxu0 %v4530
        %v4708 = vpop.f32.mrb[0].mxu0
        %v4709 = vadd.f32 0.0, %v4708
        %v4710 = vpop.f32.mrb[0].mxu0
        %4711 = vmatprep.mubr.f32.mxu0 0.0
        %4712 = vmatmul.mubr.f32.gmra.mrb[0].mxu0 %v4533
        %v4713 = vpop.f32.mrb[0].mxu0
        %v4714 = vadd.f32 0.0, %v4713
        %v4715 = vpop.f32.mrb[0].mxu0
        %4716 = vmatprep.mubr.f32.mxu0 0.0
        %4717 = vmatmul.mubr.f32.gmra.mrb[0].mxu0 %v4536
        %v4718 = vpop.f32.mrb[0].mxu0
        %v4719 = vadd.f32 0.0, %v4718
        %v4720 = vpop.f32.mrb[0].mxu0
        %4721 = vmatprep.mubr.f32.mxu0 0.0
        %4722 = vmatmul.mubr.f32.gmra.mrb[0].mxu0 %v4539
        %v4723 = vpop.f32.mrb[0].mxu0
        %v4724 = vadd.f32 0.0, %v4723
        %v4725 = vpop.f32.mrb[0].mxu0
        %4726 = vmatprep.mubr.f32.mxu0 0.0
        %4727 = vmatmul.mubr.f32.gmra.mrb[0].mxu0 %v4542
        %v4728 = vpop.f32.mrb[0].mxu0
        %v4729 = vadd.f32 0.0, %v4728
        %v4730 = vpop.f32.mrb[0].mxu0
        %4731 = vmatprep.mubr.f32.mxu0 0.0
        %4732 = vmatmul.mubr.f32.gmra.mrb[0].mxu0 %v4545
        %v4733 = vpop.f32.mrb[0].mxu0
        %v4734 = vadd.f32 0.0, %v4733
        %v4735 = vpop.f32.mrb[0].mxu0
        %4736 = vmatprep.mubr.f32.mxu0 0.0
        %4737 = vmatmul.mubr.f32.gmra.mrb[0].mxu0 %v4548
        %v4738 = vpop.f32.mrb[0].mxu0
        %v4739 = vadd.f32 0.0, %v4738
        %v4740 = vpop.f32.mrb[0].mxu0
        %4741 = vmatprep.mubr.f32.mxu0 0.0
        %4742 = vmatmul.mubr.f32.gmra.mrb[0].mxu0 %v4551
        %v4743 = vpop.f32.mrb[0].mxu0
        %v4744 = vadd.f32 0.0, %v4743
        %v4745 = vpop.f32.mrb[0].mxu0
        %4746 = vmatprep.mubr.f32.mxu0 0.0
        %4747 = vmatmul.mubr.f32.gmra.mrb[0].mxu0 %v4554
        %v4748 = vpop.f32.mrb[0].mxu0
        %v4749 = vadd.f32 0.0, %v4748
        %v4750 = vpop.f32.mrb[0].mxu0
        %4751 = vmatprep.mubr.f32.mxu0 0.0
        %4752 = vmatmul.mubr.f32.gmra.mrb[0].mxu0 %v4557
        %v4753 = vpop.f32.mrb[0].mxu0
        %v4754 = vadd.f32 0.0, %v4753
        %v4755 = vpop.f32.mrb[0].mxu0
        %4756 = vmatprep.mubr.f32.mxu0 0.0
        %4757 = vmatmul.mubr.f32.gmra.mrb[0].mxu0 %v4560
        %v4758 = vpop.f32.mrb[0].mxu0
        %v4759 = vadd.f32 0.0, %v4758
        %v4760 = vpop.f32.mrb[0].mxu0
        %4761 = vmatprep.mubr.f32.mxu0 0.0
        %4762 = vmatmul.mubr.f32.gmra.mrb[0].mxu0 %v4563
        %v4763 = vpop.f32.mrb[0].mxu0
        %v4764 = vadd.f32 0.0, %v4763
        %v4765 = vpop.f32.mrb[0].mxu0
        %4766 = vmatprep.mubr.f32.mxu0 0.0
        %4767 = vmatmul.mubr.f32.gmra.mrb[0].mxu0 %v4566
        %v4768 = vpop.f32.mrb[0].mxu0
        %v4769 = vadd.f32 0.0, %v4768
        %v4770 = vpop.f32.mrb[0].mxu0
        %4771 = vmatprep.mubr.f32.mxu0 0.0
        %4772 = vmatmul.mubr.f32.gmra.mrb[0].mxu0 %v4569
        %v4773 = vpop.f32.mrb[0].mxu0
        %v4774 = vadd.f32 0.0, %v4773
        %v4775 = vpop.f32.mrb[0].mxu0
        %4776 = vmatprep.mubr.f32.mxu0 0.0
        %4777 = vmatmul.mubr.f32.gmra.mrb[0].mxu0 %v4572
        %v4778 = vpop.f32.mrb[0].mxu0
        %v4779 = vadd.f32 0.0, %v4778
        %v4780 = vpop.f32.mrb[0].mxu0
        %4781 = vmatprep.mubr.f32.mxu0 0.0
        %4782 = vmatmul.mubr.f32.gmra.mrb[0].mxu0 %v4575
        %v4783 = vpop.f32.mrb[0].mxu0
        %v4784 = vadd.f32 0.0, %v4783
        %v4785 = vpop.f32.mrb[0].mxu0
        %4786 = vmatprep.mubr.f32.mxu0 0.0
        %4787 = vmatmul.mubr.f32.gmra.mrb[0].mxu0 %v4578
        %v4788 = vpop.f32.mrb[0].mxu0
        %v4789 = vadd.f32 0.0, %v4788
        %v4790 = vpop.f32.mrb[0].mxu0
        %4791 = vmatprep.mubr.f32.mxu0 0.0
        %4792 = vmatmul.mubr.f32.gmra.mrb[0].mxu0 %v4581
        %v4793 = vpop.f32.mrb[0].mxu0
        %v4794 = vadd.f32 0.0, %v4793
        %v4795 = vpop.f32.mrb[0].mxu0
        %4796 = vmatprep.mubr.f32.mxu0 0.0
        %4797 = vmatmul.mubr.f32.gmra.mrb[0].mxu0 %v4584
        %v4798 = vpop.f32.mrb[0].mxu0
        %v4799 = vadd.f32 0.0, %v4798
        %v4800 = vpop.f32.mrb[0].mxu0
        %4801 = vmatprep.mubr.f32.mxu0 0.0
        %4802 = vmatmul.mubr.f32.gmra.mrb[0].mxu0 %v4587
        %v4803 = vpop.f32.mrb[0].mxu0
        %v4804 = vadd.f32 0.0, %v4803
        %v4805 = vpop.f32.mrb[0].mxu0
        %4806 = vmatprep.mubr.f32.mxu0 0.0
        %4807 = vmatmul.mubr.f32.gmra.mrb[0].mxu0 %v4590
        %v4808 = vpop.f32.mrb[0].mxu0
        %v4809 = vadd.f32 0.0, %v4808
        %v4810 = vpop.f32.mrb[0].mxu0
        %4811 = vmatprep.mubr.f32.mxu0 0.0
        %4812 = vmatmul.mubr.f32.gmra.mrb[0].mxu0 %v4593
        %v4813 = vpop.f32.mrb[0].mxu0
        %v4814 = vadd.f32 0.0, %v4813
        %v4815 = vpop.f32.mrb[0].mxu0
        %4816 = vmatprep.mubr.f32.mxu0 0.0
        %4817 = vmatmul.mubr.f32.gmra.mrb[0].mxu0 %v4596
        %v4818 = vpop.f32.mrb[0].mxu0
        %v4819 = vadd.f32 0.0, %v4818
        %v4820 = vpop.f32.mrb[0].mxu0
        %4821 = vmatprep.mubr.f32.mxu0 0.0
        %4822 = vmatmul.mubr.f32.gmra.mrb[0].mxu0 %v4599
        %v4823 = vpop.f32.mrb[0].mxu0
        %v4824 = vadd.f32 0.0, %v4823
        %v4825 = vpop.f32.mrb[0].mxu0
        %4826 = vmatprep.mubr.f32.mxu0 0.0
        %4827 = vmatmul.mubr.f32.gmra.mrb[0].mxu0 %v4602
        %v4828 = vpop.f32.mrb[0].mxu0
        %v4829 = vadd.f32 0.0, %v4828
        %v4830 = vpop.f32.mrb[0].mxu0
        %4831 = vdwg.mxu0
        %v4833 = vlaneseq
        %v4834 = vshrl.u32 %v4833, 7
        %v4835 = vsub.s32 0, %v4834
        %v4836 = vrot.slane %v417, %v4835
        %v4838 = vmul.f32 %v4674, %v4836
        %v4839 = vmul.f32 %v4679, %v4836
        %v4840 = vmul.f32 %v4684, %v4836
        %v4841 = vmul.f32 %v4689, %v4836
        %v4842 = vmul.f32 %v4694, %v4836
        %v4843 = vmul.f32 %v4699, %v4836
        %v4844 = vmul.f32 %v4704, %v4836
        %v4845 = vmul.f32 %v4709, %v4836
        %v4846 = vmul.f32 %v4714, %v4836
        %v4847 = vmul.f32 %v4719, %v4836
        %v4848 = vmul.f32 %v4724, %v4836
        %v4849 = vmul.f32 %v4729, %v4836
        %v4850 = vmul.f32 %v4734, %v4836
        %v4851 = vmul.f32 %v4739, %v4836
        %v4852 = vmul.f32 %v4744, %v4836
        %v4853 = vmul.f32 %v4749, %v4836
        %v4854 = vmul.f32 %v4754, %v4836
        %v4855 = vmul.f32 %v4759, %v4836
        %v4856 = vmul.f32 %v4764, %v4836
        %v4857 = vmul.f32 %v4769, %v4836
        %v4858 = vmul.f32 %v4774, %v4836
        %v4859 = vmul.f32 %v4779, %v4836
        %v4860 = vmul.f32 %v4784, %v4836
        %v4861 = vmul.f32 %v4789, %v4836
        %v4862 = vmul.f32 %v4794, %v4836
        %v4863 = vmul.f32 %v4799, %v4836
        %v4864 = vmul.f32 %v4804, %v4836
        %v4865 = vmul.f32 %v4809, %v4836
        %v4866 = vmul.f32 %v4814, %v4836
        %v4867 = vmul.f32 %v4819, %v4836
        %v4868 = vmul.f32 %v4824, %v4836
        %v4869 = vmul.f32 %v4829, %v4836
        %v4871 = vlaneseq
        %v4872 = vshrl.u32 %v4871, 7
        %v4873 = vsub.s32 0, %v4872
        %v4874 = vrot.slane %v418, %v4873
        %v4876 = vadd.f32 %v4838, %v4874
        %v4877 = vadd.f32 %v4839, %v4874
        %v4878 = vadd.f32 %v4840, %v4874
        %v4879 = vadd.f32 %v4841, %v4874
        %v4880 = vadd.f32 %v4842, %v4874
        %v4881 = vadd.f32 %v4843, %v4874
        %v4882 = vadd.f32 %v4844, %v4874
        %v4883 = vadd.f32 %v4845, %v4874
        %v4884 = vadd.f32 %v4846, %v4874
        %v4885 = vadd.f32 %v4847, %v4874
        %v4886 = vadd.f32 %v4848, %v4874
        %v4887 = vadd.f32 %v4849, %v4874
        %v4888 = vadd.f32 %v4850, %v4874
        %v4889 = vadd.f32 %v4851, %v4874
        %v4890 = vadd.f32 %v4852, %v4874
        %v4891 = vadd.f32 %v4853, %v4874
        %v4892 = vadd.f32 %v4854, %v4874
        %v4893 = vadd.f32 %v4855, %v4874
        %v4894 = vadd.f32 %v4856, %v4874
        %v4895 = vadd.f32 %v4857, %v4874
        %v4896 = vadd.f32 %v4858, %v4874
        %v4897 = vadd.f32 %v4859, %v4874
        %v4898 = vadd.f32 %v4860, %v4874
        %v4899 = vadd.f32 %v4861, %v4874
        %v4900 = vadd.f32 %v4862, %v4874
        %v4901 = vadd.f32 %v4863, %v4874
        %v4902 = vadd.f32 %v4864, %v4874
        %v4903 = vadd.f32 %v4865, %v4874
        %v4904 = vadd.f32 %v4866, %v4874
        %v4905 = vadd.f32 %v4867, %v4874
        %v4906 = vadd.f32 %v4868, %v4874
        %v4907 = vadd.f32 %v4869, %v4874
        %v4908 = vadd.f32 %v4876, %v475
        %v4909 = vadd.f32 %v4877, %v476
        %v4910 = vadd.f32 %v4878, %v477
        %v4911 = vadd.f32 %v4879, %v478
        %v4912 = vadd.f32 %v4880, %v479
        %v4913 = vadd.f32 %v4881, %v480
        %v4914 = vadd.f32 %v4882, %v481
        %v4915 = vadd.f32 %v4883, %v482
        %v4916 = vadd.f32 %v4884, %v483
        %v4917 = vadd.f32 %v4885, %v484
        %v4918 = vadd.f32 %v4886, %v485
        %v4919 = vadd.f32 %v4887, %v486
        %v4920 = vadd.f32 %v4888, %v487
        %v4921 = vadd.f32 %v4889, %v488
        %v4922 = vadd.f32 %v4890, %v489
        %v4923 = vadd.f32 %v4891, %v490
        %v4924 = vadd.f32 %v4892, %v491
        %v4925 = vadd.f32 %v4893, %v492
        %v4926 = vadd.f32 %v4894, %v493
        %v4927 = vadd.f32 %v4895, %v494
        %v4928 = vadd.f32 %v4896, %v495
        %v4929 = vadd.f32 %v4897, %v496
        %v4930 = vadd.f32 %v4898, %v497
        %v4931 = vadd.f32 %v4899, %v498
        %v4932 = vadd.f32 %v4900, %v499
        %v4933 = vadd.f32 %v4901, %v500
        %v4934 = vadd.f32 %v4902, %v501
        %v4935 = vadd.f32 %v4903, %v502
        %v4936 = vadd.f32 %v4904, %v503
        %v4937 = vadd.f32 %v4905, %v504
        %v4938 = vadd.f32 %v4906, %v505
        %v4939 = vadd.f32 %v4907, %v506
        %v4940 = vmax.f32 %v4908, 0.0
        %v4941 = vmax.f32 %v4909, 0.0
        %v4942 = vmax.f32 %v4910, 0.0
        %v4943 = vmax.f32 %v4911, 0.0
        %v4944 = vmax.f32 %v4912, 0.0
        %v4945 = vmax.f32 %v4913, 0.0
        %v4946 = vmax.f32 %v4914, 0.0
        %v4947 = vmax.f32 %v4915, 0.0
        %v4948 = vmax.f32 %v4916, 0.0
        %v4949 = vmax.f32 %v4917, 0.0
        %v4950 = vmax.f32 %v4918, 0.0
        %v4951 = vmax.f32 %v4919, 0.0
        %v4952 = vmax.f32 %v4920, 0.0
        %v4953 = vmax.f32 %v4921, 0.0
        %v4954 = vmax.f32 %v4922, 0.0
        %v4955 = vmax.f32 %v4923, 0.0
        %v4956 = vmax.f32 %v4924, 0.0
        %v4957 = vmax.f32 %v4925, 0.0
        %v4958 = vmax.f32 %v4926, 0.0
        %v4959 = vmax.f32 %v4927, 0.0
        %v4960 = vmax.f32 %v4928, 0.0
        %v4961 = vmax.f32 %v4929, 0.0
        %v4962 = vmax.f32 %v4930, 0.0
        %v4963 = vmax.f32 %v4931, 0.0
        %v4964 = vmax.f32 %v4932, 0.0
        %v4965 = vmax.f32 %v4933, 0.0
        %v4966 = vmax.f32 %v4934, 0.0
        %v4967 = vmax.f32 %v4935, 0.0
        %v4968 = vmax.f32 %v4936, 0.0
        %v4969 = vmax.f32 %v4937, 0.0
        %v4970 = vmax.f32 %v4938, 0.0
        %v4971 = vmax.f32 %v4939, 0.0
        %4972 = vst.msk [vmem:[%s392] sm:$0xff] %vm507, %v4940
        %4973 = vst.msk [vmem:[%s392 + $0x8] sm:$0xff] %vm507, %v4941
        %4974 = vst.msk [vmem:[%s392 + $0x10] sm:$0xff] %vm507, %v4942
        %4975 = vst.msk [vmem:[%s392 + $0x18] sm:$0xff] %vm507, %v4943
        %4976 = vst.msk [vmem:[%s392 + $0x20] sm:$0xff] %vm507, %v4944
        %4977 = vst.msk [vmem:[%s392 + $0x28] sm:$0xff] %vm507, %v4945
        %4978 = vst.msk [vmem:[%s392 + $0x30] sm:$0xff] %vm507, %v4946
        %4979 = vst.msk [vmem:[%s392 + $0x38] sm:$0xff] %vm507, %v4947
        %4980 = vst.msk [vmem:[%s392 + $0x40] sm:$0xff] %vm507, %v4948
        %4981 = vst.msk [vmem:[%s392 + $0x48] sm:$0xff] %vm507, %v4949
        %4982 = vst.msk [vmem:[%s392 + $0x50] sm:$0xff] %vm507, %v4950
        %4983 = vst.msk [vmem:[%s392 + $0x58] sm:$0xff] %vm507, %v4951
        %4984 = vst.msk [vmem:[%s392 + $0x60] sm:$0xff] %vm507, %v4952
        %4985 = vst.msk [vmem:[%s392 + $0x68] sm:$0xff] %vm507, %v4953
        %4986 = vst.msk [vmem:[%s392 + $0x70] sm:$0xff] %vm507, %v4954
        %4987 = vst.msk [vmem:[%s392 + $0x78] sm:$0xff] %vm507, %v4955
        %4988 = vst.msk [vmem:[%s392 + $0x80] sm:$0xff] %vm507, %v4956
        %4989 = vst.msk [vmem:[%s392 + $0x88] sm:$0xff] %vm507, %v4957
        %4990 = vst.msk [vmem:[%s392 + $0x90] sm:$0xff] %vm507, %v4958
        %4991 = vst.msk [vmem:[%s392 + $0x98] sm:$0xff] %vm507, %v4959
        %4992 = vst.msk [vmem:[%s392 + $0xa0] sm:$0xff] %vm507, %v4960
        %4993 = vst.msk [vmem:[%s392 + $0xa8] sm:$0xff] %vm507, %v4961
        %4994 = vst.msk [vmem:[%s392 + $0xb0] sm:$0xff] %vm507, %v4962
        %4995 = vst.msk [vmem:[%s392 + $0xb8] sm:$0xff] %vm507, %v4963
        %4996 = vst.msk [vmem:[%s392 + $0xc0] sm:$0xff] %vm507, %v4964
        %4997 = vst.msk [vmem:[%s392 + $0xc8] sm:$0xff] %vm507, %v4965
        %4998 = vst.msk [vmem:[%s392 + $0xd0] sm:$0xff] %vm507, %v4966
        %4999 = vst.msk [vmem:[%s392 + $0xd8] sm:$0xff] %vm507, %v4967
        %5000 = vst.msk [vmem:[%s392 + $0xe0] sm:$0xff] %vm507, %v4968
        %5001 = vst.msk [vmem:[%s392 + $0xe8] sm:$0xff] %vm507, %v4969
        %5002 = vst.msk [vmem:[%s392 + $0xf0] sm:$0xff] %vm507, %v4970
        %5003 = vst.msk [vmem:[%s392 + $0xf8] sm:$0xff] %vm507, %v4971
        %s5004 = sand.u32 %s251, 1
        %s5005 = scalar_lea.sflag [#allocation5], %s5004
        %s5006 = sand.u32 %s251, 1
        %s5007 = smul.addr %s5006, 256
        %s5008 = scalar_lea.vmem [#allocation8], %s5007
        // Predicated region
        $region69: #{tpu_custom_call.1} parent=59 // pred_check
          %p5009 = pneg %p261
        $region70: #{tpu_custom_call.1} parent=59 // pred_check_branch
          %5011 = sbr.rel (%p5009) target = $region72
        $region71: #{tpu_custom_call.1} parent=59 // pred_region
          %s5013 = ssub.s32 4096, 4096
          %5014 = vsyncadd %s5005, %s5013
          %s5015 = smul.addr %s28, 32
          %s5016 = smul.addr %s5015, 128
          %s5017 = scalar_lea.hbm %s10, %s5016
          %s5018 = sshll.u32 %s5008, 4
          %s5019 = int_to_ptr.vmem [resolvable:$true] %s5018
          %5024 = dma.vmem_to_hbm [thread:$0]  %s5019, 4096, %s5017, %s5005, 128, 128, 8
        $region72: #{tpu_custom_call.1} parent=59 // pred_fallthru
          _
      $region60: #{tpu_custom_call.1} parent=5 // pred_fallthru
        _
      %p5025 = scmp.le.s32.totalorder 2, %s23
      // Predicated region
      $region73: #{tpu_custom_call.1} parent=5 // pred_check
        %p5026 = pneg %p5025
      $region74: #{tpu_custom_call.1} parent=5 // pred_check_branch
        %5028 = sbr.rel (%p5026) target = $region76
      $region75: #{tpu_custom_call.1} parent=5 // pred_region
        %s5029 = ssub.s32 %s23, 2
        // Predicated region
        $region77: #{tpu_custom_call.1} parent=75 // pred_check
          %p5030 = pneg %p267
        $region78: #{tpu_custom_call.1} parent=75 // pred_check_branch
          %5032 = sbr.rel (%p5030) target = $region80
        $region79: #{tpu_custom_call.1} parent=75 // pred_region
          %s5033 = sand.u32 %s252, 1
          %s5034 = scalar_lea.sflag [#allocation5], %s5033
          %s5035 = sand.u32 %s252, 1
          %s5036 = smul.addr %s5035, 256
          %s5037 = scalar_lea.vmem [#allocation8], %s5036
          %5038 = dma.done %s5034, 4096
        $region80: #{tpu_custom_call.1} parent=75 // pred_fallthru
          _
      $region76: #{tpu_custom_call.1} parent=5 // pred_fallthru
        _
    $region6: #{tpu_custom_call.1} parent=1 // loop_footer
      %s27 = sadd.s32 1, %s23
    $region7: #{tpu_custom_call.1} parent=1 // loop_footer_branch
      %22 = sbr.rel target = $region3
    $region8: #{tpu_custom_call.1} parent=1 // loop_exit
      _
    %5039 = vsyncpa [#allocation4], 1
    %s5040 = scalar_lea.sflag [#allocation4], 1
    %5041 = vsyncpa %s5040, 1
    %5042 = vsyncpa [#allocation7], 1
    %5043 = vsyncpa [#allocation5], 1
    %s5044 = scalar_lea.sflag [#allocation5], 1
    %5045 = vsyncpa %s5044, 1

</llo_original>
